<compile_context>
chip_gen: v7x
topology: tpu7x:2x2x1
jax: 0.10.0
libtpu: 0.0.40
codegen_flags: <defaults>
</compile_context>

<pallas_src>
import functools

import jax
import jax.numpy as jnp
import numpy as np
from jax.experimental import pallas as pl
from jax.experimental.pallas import tpu as pltpu

EPS = 1e-5  # torch.nn.LayerNorm default eps


# ---------------------------------------------------------------------------
# In-kernel math helpers (traced inside Pallas kernels and the JAX reference)
# ---------------------------------------------------------------------------
def _ln(v, w, b):
    """LayerNorm over last dim (f32 statistics). w, b broadcast as (1, C)."""
    mu = jnp.mean(v, axis=-1, keepdims=True)
    var = jnp.mean((v - mu) ** 2, axis=-1, keepdims=True)
    return (v - mu) * jax.lax.rsqrt(var + EPS) * w + b


_GELU_C = np.float32(0.7978845608028654)  # sqrt(2/pi)


def _gelu_tanh(x):
    # tanh-approximate GELU (EUP tanh). Matches jax.nn.gelu(approximate=True).
    # TODO(synk): PyTorch F.gelu default is exact erf-GELU; tanh form deviates <=3e-3.
    return 0.5 * x * (1.0 + jnp.tanh(_GELU_C * (x + 0.044715 * (x * x * x))))


# ---------------------------------------------------------------------------
# Pallas kernels
# ---------------------------------------------------------------------------
def encoder_layer_kernel(x_ref, vecs_ref, b1_ref, wqkv_ref, wo3_ref, w1_ref, w2_ref,
                         o_ref, *, num_heads, apply_final_norm):
    """One TransformerEncoderLayer for a single batch element (grid axis = batch).

    vecs_ref rows: 0 pre_norm.w, 1 pre_norm.b, 2 norm1.w, 3 norm1.b, 4 linear2.bias,
                   5 final-norm.w, 6 final-norm.b, 7 pad.
    wqkv_ref: pre-fused (C, 3C) bf16 projection, 1/sqrt(hd) folded into the q columns.
    wo3_ref : (num_heads, head_dim, C) bf16 out-projection, accumulated per head.
    """
    x = x_ref[0]                                  # (N, C) f32 residual stream
    N, C = x.shape
    hd = C // num_heads

    vecs = vecs_ref[...]                          # (8, C) f32
    ln_pre_w, ln_pre_b = vecs[0:1], vecs[1:2]
    ln1_w, ln1_b = vecs[2:3], vecs[3:4]
    b2 = vecs[4:5]
    fn_w, fn_b = vecs[5:6], vecs[6:7]

    # ---- pre-norm + fused qkv projection (one MXU matmul, bf16 operands, f32 acc) ----
    xn = _ln(x, ln_pre_w, ln_pre_b)
    xn_b = xn.astype(jnp.bfloat16)
    qkv = jnp.dot(xn_b, wqkv_ref[...], preferred_element_type=jnp.float32)   # (N, 3C) f32

    # ---- per-head attention, out-projection accumulated (no concatenate) ----
    attn = jnp.zeros((N, C), jnp.float32)
    for h in range(num_heads):
        qh = qkv[:, h * hd:(h + 1) * hd].astype(jnp.bfloat16)          # scale pre-folded
        kh = qkv[:, C + h * hd:C + (h + 1) * hd].astype(jnp.bfloat16)
        vh = qkv[:, 2 * C + h * hd:2 * C + (h + 1) * hd].astype(jnp.bfloat16)

        s = jax.lax.dot_general(qh, kh, (((1,), (1,)), ((), ())),
                                preferred_element_type=jnp.float32)    # (N, N) f32
        s = s - jnp.max(s, axis=-1, keepdims=True)
        p = jnp.exp(s)
        denom = jnp.sum(p, axis=-1, keepdims=True)                     # (N, 1)

        oh = jnp.dot(p.astype(jnp.bfloat16), vh,
                     preferred_element_type=jnp.float32)               # (N, hd)
        # Deferred softmax normalization: scale the (N, hd) head output, not the (N, N)
        # probability matrix.  EUP reciprocal -> nearly free.
        oh = oh * pl.reciprocal(denom, approx=True)
        attn = attn + jnp.dot(oh.astype(jnp.bfloat16), wo3_ref[h],
                              preferred_element_type=jnp.float32)      # (N, C)

    # attention residual (dropout / drop_path = identity in eval)
    y = x + attn

    # ---- norm1 + MLP; residual adds onto the post-norm1 activation (CCT semantics) ----
    yn = _ln(y, ln1_w, ln1_b)
    yn_b = yn.astype(jnp.bfloat16)
    h1 = jnp.dot(yn_b, w1_ref[...], preferred_element_type=jnp.float32) + b1_ref[...]
    h1 = _gelu_tanh(h1)
    h2 = jnp.dot(h1.astype(jnp.bfloat16), w2_ref[...],
                 preferred_element_type=jnp.float32) + b2
    out = yn + h2

    # final model LayerNorm fused into the last layer (saves a mem-bound pass)
    if apply_final_norm:
        out = _ln(out, fn_w, fn_b)
    o_ref[0] = out


def dense_kernel(x_ref, w_ref, b_ref, o_ref):
    """Final Linear, tiled over the vol^3 output dim (lane-dense output blocks)."""
    xb = x_ref[0].astype(jnp.bfloat16)
    o_ref[0] = jnp.dot(xb, w_ref[...], preferred_element_type=jnp.float32) + b_ref[...]


# ---------------------------------------------------------------------------
# pallas_call wrappers
# ---------------------------------------------------------------------------
_VMEM_LIMIT = 64 * 1024 * 1024  # explicit scoped-VMEM budget (fits v7x physical 64 MiB)


def encoder_layer(x, p, num_heads, apply_final_norm):
    B, N, C = x.shape
    F = p["w1"].shape[1]
    hd = C // num_heads
    kernel = functools.partial(encoder_layer_kernel, num_heads=num_heads,
                               apply_final_norm=apply_final_norm)
    return pl.pallas_call(
        kernel,
        out_shape=jax.ShapeDtypeStruct((B, N, C), jnp.float32),
        grid=(B,),
        in_specs=[
            pl.BlockSpec((1, N, C), lambda b: (b, 0, 0)),            # activations
            pl.BlockSpec((8, C), lambda b: (0, 0)),                  # packed LN/bias vectors
            pl.BlockSpec((1, F), lambda b: (0, 0)),                  # linear1 bias
            pl.BlockSpec((C, 3 * C), lambda b: (0, 0)),              # fused qkv (bf16)
            pl.BlockSpec((num_heads, hd, C), lambda b: (0, 0, 0)),   # out-proj (bf16)
            pl.BlockSpec((C, F), lambda b: (0, 0)),                  # linear1 (bf16)
            pl.BlockSpec((F, C), lambda b: (0, 0)),                  # linear2 (bf16)
        ],
        out_specs=pl.BlockSpec((1, N, C), lambda b: (b, 0, 0)),
        compiler_params=pltpu.CompilerParams(
            dimension_semantics=("parallel",),
            vmem_limit_bytes=_VMEM_LIMIT),
    )(x, p["vecs"], p["b1"], p["wqkv_eff"], p["wo3"], p["w1"], p["w2"])


def _pick_tile(n):
    for t in (2048, 1024, 512, 256, 128):
        if n % t == 0:
            return t
    return n


def final_dense(x, w, b):
    """x: (B, C, S) f32, w: (S, V3) bf16, b: (1, V3) f32 -> (B, C, V3) f32."""
    B, M, K = x.shape
    V3 = w.shape[1]
    TN = _pick_tile(V3)
    return pl.pallas_call(
        dense_kernel,
        out_shape=jax.ShapeDtypeStruct((B, M, V3), jnp.float32),
        grid=(B, V3 // TN),
        in_specs=[pl.BlockSpec((1, M, K), lambda i, j: (i, 0, 0)),
                  pl.BlockSpec((K, TN), lambda i, j: (0, j)),
                  pl.BlockSpec((1, TN), lambda i, j: (0, j))],
        out_specs=pl.BlockSpec((1, M, TN), lambda i, j: (i, 0, j)),
        compiler_params=pltpu.CompilerParams(
            dimension_semantics=("parallel", "parallel"),
            vmem_limit_bytes=_VMEM_LIMIT),
    )(x, w, b)


def transformer_latent_forward(x, params, num_heads, vol_size):
    # seq_pool=True: positional_emb / class_emb / attention_pool unused by forward().
    n_layers = len(params["layers"])
    for i, lp in enumerate(params["layers"]):
        x = encoder_layer(x, lp, num_heads, apply_final_norm=(i == n_layers - 1))
    B, S, C = x.shape
    x = jnp.reshape(x, (B, C, S))            # mirrors torch `x.view(bc, chan, seq_len)`
    x = final_dense(x, params["final_w"], params["final_b"])
    return jnp.reshape(x, (B, C, vol_size, vol_size, vol_size))


# ---------------------------------------------------------------------------
# Pure-JAX reference (same bf16-operand / f32-accumulation math as the kernels)
# ---------------------------------------------------------------------------
def reference_layer(x, p, nh, apply_final_norm):
    B, N, C = x.shape
    hd = C // nh
    vecs = p["vecs"]
    ln_pre_w, ln_pre_b = vecs[0:1], vecs[1:2]
    ln1_w, ln1_b = vecs[2:3], vecs[3:4]
    b2 = vecs[4:5]
    fn_w, fn_b = vecs[5:6], vecs[6:7]

    xn = _ln(x, ln_pre_w, ln_pre_b)
    qkv = jnp.dot(xn.astype(jnp.bfloat16), p["wqkv_eff"],
                  preferred_element_type=jnp.float32)                     # (B, N, 3C)
    q, k, v = qkv[..., :C], qkv[..., C:2 * C], qkv[..., 2 * C:]
    q = q.reshape(B, N, nh, hd).transpose(0, 2, 1, 3)
    k = k.reshape(B, N, nh, hd).transpose(0, 2, 1, 3)
    v = v.reshape(B, N, nh, hd).transpose(0, 2, 1, 3)
    s = jnp.einsum("bhqd,bhkd->bhqk", q.astype(jnp.bfloat16), k.astype(jnp.bfloat16),
                   preferred_element_type=jnp.float32)
    a = jax.nn.softmax(s, axis=-1)
    o = jnp.einsum("bhqk,bhkd->bhqd", a.astype(jnp.bfloat16), v.astype(jnp.bfloat16),
                   preferred_element_type=jnp.float32)
    o = o.transpose(0, 2, 1, 3).reshape(B, N, C)
    wo = p["wo3"].reshape(C, C)
    y = x + jnp.dot(o.astype(jnp.bfloat16), wo, preferred_element_type=jnp.float32)

    yn = _ln(y, ln1_w, ln1_b)
    h1 = jnp.dot(yn.astype(jnp.bfloat16), p["w1"],
                 preferred_element_type=jnp.float32) + p["b1"]
    h1 = jax.nn.gelu(h1, approximate=True)
    h2 = jnp.dot(h1.astype(jnp.bfloat16), p["w2"],
                 preferred_element_type=jnp.float32) + b2
    out = yn + h2
    if apply_final_norm:
        out = _ln(out, fn_w, fn_b)
    return out


def reference_forward(x, params, nh, vol):
    n_layers = len(params["layers"])
    for i, lp in enumerate(params["layers"]):
        x = reference_layer(x, lp, nh, i == n_layers - 1)
    B, S, C = x.shape
    x = x.reshape(B, C, S)
    x = jnp.dot(x.astype(jnp.bfloat16), params["final_w"],
                preferred_element_type=jnp.float32) + params["final_b"]
    return x.reshape(B, C, vol, vol, vol)


# ---------------------------------------------------------------------------
# Deterministic synthetic parameters (shapes follow the PyTorch __init__),
# with the host-side exact weight fusion baked in.  LN weights/biases and
# linear biases are given small random perturbations so those code paths are
# exercised by the correctness check.
# ---------------------------------------------------------------------------
def init_params(key, num_layers, C, F, S, vol_size, num_heads):
    keys = jax.random.split(key, num_layers * 14 + 2)
    hd = C // num_heads
    scale = np.float32(hd) ** -0.5

    def tn(k, shape, std=0.02):
        return (std * jax.random.normal(k, shape)).astype(jnp.float32)

    layers = []
    ki = 0
    for _ in range(num_layers):
        wqkv = tn(keys[ki + 0], (C, 3 * C))          # Attention.qkv weight^T (bias=False)
        wq = tn(keys[ki + 1], (C, C), std=0.2)       # MHA in_proj q/k/v slices, transposed
        wk = tn(keys[ki + 2], (C, C), std=0.2)
        wv = tn(keys[ki + 3], (C, C), std=0.2)
        wo = tn(keys[ki + 4], (C, C))                # MHA out_proj^T (bias=False)
        w1 = tn(keys[ki + 5], (C, F))                # linear1^T
        w2 = tn(keys[ki + 6], (F, C))                # linear2^T

        # Exact host-side fusion of the two projection stages; fold 1/sqrt(hd) into q.
        wq_eff = (wqkv[:, :C] @ wq) * scale
        wk_eff = wqkv[:, C:2 * C] @ wk
        wv_eff = wqkv[:, 2 * C:] @ wv
        wqkv_eff = jnp.concatenate([wq_eff, wk_eff, wv_eff], axis=1).astype(jnp.bfloat16)
        wo3 = wo.reshape(num_heads, hd, C).astype(jnp.bfloat16)

        vecs = jnp.stack([
            1.0 + tn(keys[ki + 7], (C,)),    # pre_norm.weight
            tn(keys[ki + 8], (C,)),          # pre_norm.bias
            1.0 + tn(keys[ki + 9], (C,)),    # norm1.weight
            tn(keys[ki + 10], (C,)),         # norm1.bias
            tn(keys[ki + 11], (C,)),         # linear2.bias
            1.0 + tn(keys[ki + 12], (C,)),   # final norm.weight (used by last layer only)
            tn(keys[ki + 13], (C,)),         # final norm.bias
            jnp.zeros((C,), jnp.float32),    # pad to 8 sublanes
        ], axis=0)

        layers.append(dict(
            vecs=vecs,
            b1=tn(keys[ki + 13], (1, F)),
            wqkv_eff=wqkv_eff,
            wo3=wo3,
            w1=w1.astype(jnp.bfloat16),
            w2=w2.astype(jnp.bfloat16),
        ))
        ki += 14

    v3 = vol_size ** 3
    return dict(
        layers=layers,
        # PyTorch hard-codes Linear(640, vol^3); here in_features == sequence length S
        # (the module implicitly requires seq_len == 640 in its real config).
        final_w=tn(keys[ki], (S, v3)).astype(jnp.bfloat16),
        final_b=tn(keys[ki + 1], (1, v3)),
    )


# ---------------------------------------------------------------------------
if __name__ == "__main__":
    # Lane-dense small config: C multiple of 128, vol^3 multiple of 128.
    B, S, C, NUM_HEADS, NUM_LAYERS, VOL = 2, 128, 128, 4, 2, 8
    MLP = int(C * 4.0)

    key = jax.random.PRNGKey(0)
    kx, kp = jax.random.split(key)
    x = jax.random.normal(kx, (B, S, C), dtype=jnp.float32)
    params = init_params(kp, NUM_LAYERS, C, MLP, S, VOL, NUM_HEADS)

    out = jax.block_until_ready(transformer_latent_forward(x, params, NUM_HEADS, VOL))
    ref = jax.block_until_ready(reference_forward(x, params, NUM_HEADS, VOL))

    assert out.shape == (B, C, VOL, VOL, VOL), out.shape
    np.testing.assert_allclose(np.asarray(out), np.asarray(ref), rtol=5e-3, atol=5e-3)
    print("KERNEL_OK")
</pallas_src>

<mosaic_0001>
module attributes {stable_mosaic.version = 11 : i64} {
  func.func @encoder_layer_kernel(%arg0: i32, %arg1: memref<1x128x128xf32, #tpu.memory_space<vmem>>, %arg2: memref<8x128xf32, #tpu.memory_space<vmem>>, %arg3: memref<1x512xf32, #tpu.memory_space<vmem>>, %arg4: memref<128x384xbf16, #tpu.memory_space<vmem>>, %arg5: memref<4x32x128xbf16, #tpu.memory_space<vmem>>, %arg6: memref<128x512xbf16, #tpu.memory_space<vmem>>, %arg7: memref<512x128xbf16, #tpu.memory_space<vmem>>, %arg8: memref<1x128x128xf32, #tpu.memory_space<vmem>>) attributes {dimension_semantics = [#tpu.dimension_semantics<parallel>], iteration_bounds = array<i64: 2>, scalar_prefetch = 0 : i64, scratch_operands = 0 : i64, tpu.core_type = #tpu.core_type<tc>, window_params = [{transform_indices = @transform_0, window_bounds = array<i64: 1, 128, 128>}, {pipeline_mode = #tpu.pipeline_mode<synchronous>, transform_indices = @transform_1, window_bounds = array<i64: 8, 128>}, {pipeline_mode = #tpu.pipeline_mode<synchronous>, transform_indices = @transform_2, window_bounds = array<i64: 1, 512>}, {pipeline_mode = #tpu.pipeline_mode<synchronous>, transform_indices = @transform_3, window_bounds = array<i64: 128, 384>}, {pipeline_mode = #tpu.pipeline_mode<synchronous>, transform_indices = @transform_4, window_bounds = array<i64: 4, 32, 128>}, {pipeline_mode = #tpu.pipeline_mode<synchronous>, transform_indices = @transform_5, window_bounds = array<i64: 128, 512>}, {pipeline_mode = #tpu.pipeline_mode<synchronous>, transform_indices = @transform_6, window_bounds = array<i64: 512, 128>}, {transform_indices = @transform_7, window_bounds = array<i64: 1, 128, 128>}]} {
    %c0 = arith.constant 0 : index
    %c0_0 = arith.constant 0 : index
    %c0_1 = arith.constant 0 : index
    %0 = vector.load %arg1[%c0, %c0_0, %c0_1] : memref<1x128x128xf32, #tpu.memory_space<vmem>>, vector<1x128x128xf32>
    %1 = vector.shape_cast %0 : vector<1x128x128xf32> to vector<128x128xf32>
    %c0_2 = arith.constant 0 : index
    %c0_3 = arith.constant 0 : index
    %2 = vector.load %arg2[%c0_2, %c0_3] : memref<8x128xf32, #tpu.memory_space<vmem>>, vector<8x128xf32>
    %3 = vector.extract_strided_slice %2 {offsets = [0, 0], sizes = [1, 128], strides = [1, 1]} : vector<8x128xf32> to vector<1x128xf32>
    %4 = vector.extract_strided_slice %2 {offsets = [1, 0], sizes = [1, 128], strides = [1, 1]} : vector<8x128xf32> to vector<1x128xf32>
    %5 = vector.extract_strided_slice %2 {offsets = [2, 0], sizes = [1, 128], strides = [1, 1]} : vector<8x128xf32> to vector<1x128xf32>
    %6 = vector.extract_strided_slice %2 {offsets = [3, 0], sizes = [1, 128], strides = [1, 1]} : vector<8x128xf32> to vector<1x128xf32>
    %7 = vector.extract_strided_slice %2 {offsets = [4, 0], sizes = [1, 128], strides = [1, 1]} : vector<8x128xf32> to vector<1x128xf32>
    %cst = arith.constant dense<0.000000e+00> : vector<128xf32>
    %8 = vector.multi_reduction <add>, %1, %cst [1] : vector<128x128xf32> to vector<128xf32>
    %9 = vector.shape_cast %8 : vector<128xf32> to vector<128x1xf32>
    %cst_4 = arith.constant 1.280000e+02 : f32
    %10 = vector.broadcast %cst_4 : f32 to vector<128x1xf32>
    %11 = arith.divf %9, %10 : vector<128x1xf32>
    %12 = vector.broadcast %11 : vector<128x1xf32> to vector<128x128xf32>
    %13 = arith.subf %1, %12 : vector<128x128xf32>
    %14 = arith.mulf %13, %13 : vector<128x128xf32>
    %cst_5 = arith.constant dense<0.000000e+00> : vector<128xf32>
    %15 = vector.multi_reduction <add>, %14, %cst_5 [1] : vector<128x128xf32> to vector<128xf32>
    %16 = vector.shape_cast %15 : vector<128xf32> to vector<128x1xf32>
    %cst_6 = arith.constant 1.280000e+02 : f32
    %17 = vector.broadcast %cst_6 : f32 to vector<128x1xf32>
    %18 = arith.divf %16, %17 : vector<128x1xf32>
    %19 = vector.broadcast %11 : vector<128x1xf32> to vector<128x128xf32>
    %20 = arith.subf %1, %19 : vector<128x128xf32>
    %cst_7 = arith.constant 9.99999974E-6 : f32
    %21 = vector.broadcast %cst_7 : f32 to vector<128x1xf32>
    %22 = arith.addf %18, %21 : vector<128x1xf32>
    %23 = math.rsqrt %22 : vector<128x1xf32>
    %24 = vector.broadcast %23 : vector<128x1xf32> to vector<128x128xf32>
    %25 = arith.mulf %20, %24 : vector<128x128xf32>
    %26 = vector.broadcast %3 : vector<1x128xf32> to vector<128x128xf32>
    %27 = arith.mulf %25, %26 : vector<128x128xf32>
    %28 = vector.broadcast %4 : vector<1x128xf32> to vector<128x128xf32>
    %29 = arith.addf %27, %28 : vector<128x128xf32>
    %30 = arith.truncf %29 : vector<128x128xf32> to vector<128x128xbf16>
    %c0_8 = arith.constant 0 : index
    %c0_9 = arith.constant 0 : index
    %31 = vector.load %arg4[%c0_8, %c0_9] : memref<128x384xbf16, #tpu.memory_space<vmem>>, vector<128x384xbf16>
    %cst_10 = arith.constant dense<0.000000e+00> : vector<128x384xf32>
    %32 = tpu.matmul %30, %31, %cst_10 {dimension_numbers = #tpu.dot_dimension_numbers<[1], [0], [0], [1], [0, 0, 1, 1], [], []>} : vector<128x128xbf16>, vector<128x384xbf16>, vector<128x384xf32> -> vector<128x384xf32>
    %cst_11 = arith.constant 0.000000e+00 : f32
    %33 = vector.broadcast %cst_11 : f32 to vector<128x128xf32>
    %34 = vector.extract_strided_slice %32 {offsets = [0, 0], sizes = [128, 32], strides = [1, 1]} : vector<128x384xf32> to vector<128x32xf32>
    %35 = arith.truncf %34 : vector<128x32xf32> to vector<128x32xbf16>
    %36 = vector.extract_strided_slice %32 {offsets = [0, 128], sizes = [128, 32], strides = [1, 1]} : vector<128x384xf32> to vector<128x32xf32>
    %37 = arith.truncf %36 : vector<128x32xf32> to vector<128x32xbf16>
    %38 = vector.extract_strided_slice %32 {offsets = [0, 256], sizes = [128, 32], strides = [1, 1]} : vector<128x384xf32> to vector<128x32xf32>
    %39 = arith.truncf %38 : vector<128x32xf32> to vector<128x32xbf16>
    %cst_12 = arith.constant dense<0.000000e+00> : vector<128x128xf32>
    %40 = tpu.matmul %35, %37, %cst_12 {dimension_numbers = #tpu.dot_dimension_numbers<[1], [1], [0], [0], [0, 0, 1, 0], [], []>} : vector<128x32xbf16>, vector<128x32xbf16>, vector<128x128xf32> -> vector<128x128xf32>
    %cst_13 = arith.constant dense<0xFF800000> : vector<128xf32>
    %41 = vector.multi_reduction <maximumf>, %40, %cst_13 [1] : vector<128x128xf32> to vector<128xf32>
    %42 = vector.shape_cast %41 : vector<128xf32> to vector<128x1xf32>
    %43 = vector.broadcast %42 : vector<128x1xf32> to vector<128x128xf32>
    %44 = arith.subf %40, %43 : vector<128x128xf32>
    %45 = math.exp %44 : vector<128x128xf32>
    %cst_14 = arith.constant dense<0.000000e+00> : vector<128xf32>
    %46 = vector.multi_reduction <add>, %45, %cst_14 [1] : vector<128x128xf32> to vector<128xf32>
    %47 = vector.shape_cast %46 : vector<128xf32> to vector<128x1xf32>
    %48 = arith.truncf %45 : vector<128x128xf32> to vector<128x128xbf16>
    %cst_15 = arith.constant dense<0.000000e+00> : vector<128x32xf32>
    %49 = tpu.matmul %48, %39, %cst_15 {dimension_numbers = #tpu.dot_dimension_numbers<[1], [0], [0], [1], [0, 0, 1, 1], [], []>} : vector<128x128xbf16>, vector<128x32xbf16>, vector<128x32xf32> -> vector<128x32xf32>
    %50 = tpu.reciprocal %47 {approx = true} : vector<128x1xf32> -> vector<128x1xf32>
    %51 = vector.broadcast %50 : vector<128x1xf32> to vector<128x32xf32>
    %52 = arith.mulf %49, %51 : vector<128x32xf32>
    %53 = arith.truncf %52 : vector<128x32xf32> to vector<128x32xbf16>
    %c0_16 = arith.constant 0 : index
    %c0_17 = arith.constant 0 : index
    %c0_18 = arith.constant 0 : index
    %54 = vector.load %arg5[%c0_16, %c0_17, %c0_18] : memref<4x32x128xbf16, #tpu.memory_space<vmem>>, vector<1x32x128xbf16>
    %55 = vector.shape_cast %54 : vector<1x32x128xbf16> to vector<32x128xbf16>
    %cst_19 = arith.constant dense<0.000000e+00> : vector<128x128xf32>
    %56 = tpu.matmul %53, %55, %cst_19 {dimension_numbers = #tpu.dot_dimension_numbers<[1], [0], [0], [1], [0, 0, 1, 1], [], []>} : vector<128x32xbf16>, vector<32x128xbf16>, vector<128x128xf32> -> vector<128x128xf32>
    %57 = arith.addf %33, %56 : vector<128x128xf32>
    %58 = vector.extract_strided_slice %32 {offsets = [0, 32], sizes = [128, 32], strides = [1, 1]} : vector<128x384xf32> to vector<128x32xf32>
    %59 = arith.truncf %58 : vector<128x32xf32> to vector<128x32xbf16>
    %60 = vector.extract_strided_slice %32 {offsets = [0, 160], sizes = [128, 32], strides = [1, 1]} : vector<128x384xf32> to vector<128x32xf32>
    %61 = arith.truncf %60 : vector<128x32xf32> to vector<128x32xbf16>
    %62 = vector.extract_strided_slice %32 {offsets = [0, 288], sizes = [128, 32], strides = [1, 1]} : vector<128x384xf32> to vector<128x32xf32>
    %63 = arith.truncf %62 : vector<128x32xf32> to vector<128x32xbf16>
    %cst_20 = arith.constant dense<0.000000e+00> : vector<128x128xf32>
    %64 = tpu.matmul %59, %61, %cst_20 {dimension_numbers = #tpu.dot_dimension_numbers<[1], [1], [0], [0], [0, 0, 1, 0], [], []>} : vector<128x32xbf16>, vector<128x32xbf16>, vector<128x128xf32> -> vector<128x128xf32>
    %cst_21 = arith.constant dense<0xFF800000> : vector<128xf32>
    %65 = vector.multi_reduction <maximumf>, %64, %cst_21 [1] : vector<128x128xf32> to vector<128xf32>
    %66 = vector.shape_cast %65 : vector<128xf32> to vector<128x1xf32>
    %67 = vector.broadcast %66 : vector<128x1xf32> to vector<128x128xf32>
    %68 = arith.subf %64, %67 : vector<128x128xf32>
    %69 = math.exp %68 : vector<128x128xf32>
    %cst_22 = arith.constant dense<0.000000e+00> : vector<128xf32>
    %70 = vector.multi_reduction <add>, %69, %cst_22 [1] : vector<128x128xf32> to vector<128xf32>
    %71 = vector.shape_cast %70 : vector<128xf32> to vector<128x1xf32>
    %72 = arith.truncf %69 : vector<128x128xf32> to vector<128x128xbf16>
    %cst_23 = arith.constant dense<0.000000e+00> : vector<128x32xf32>
    %73 = tpu.matmul %72, %63, %cst_23 {dimension_numbers = #tpu.dot_dimension_numbers<[1], [0], [0], [1], [0, 0, 1, 1], [], []>} : vector<128x128xbf16>, vector<128x32xbf16>, vector<128x32xf32> -> vector<128x32xf32>
    %74 = tpu.reciprocal %71 {approx = true} : vector<128x1xf32> -> vector<128x1xf32>
    %75 = vector.broadcast %74 : vector<128x1xf32> to vector<128x32xf32>
    %76 = arith.mulf %73, %75 : vector<128x32xf32>
    %77 = arith.truncf %76 : vector<128x32xf32> to vector<128x32xbf16>
    %c1 = arith.constant 1 : index
    %c0_24 = arith.constant 0 : index
    %c0_25 = arith.constant 0 : index
    %78 = vector.load %arg5[%c1, %c0_24, %c0_25] : memref<4x32x128xbf16, #tpu.memory_space<vmem>>, vector<1x32x128xbf16>
    %79 = vector.shape_cast %78 : vector<1x32x128xbf16> to vector<32x128xbf16>
    %cst_26 = arith.constant dense<0.000000e+00> : vector<128x128xf32>
    %80 = tpu.matmul %77, %79, %cst_26 {dimension_numbers = #tpu.dot_dimension_numbers<[1], [0], [0], [1], [0, 0, 1, 1], [], []>} : vector<128x32xbf16>, vector<32x128xbf16>, vector<128x128xf32> -> vector<128x128xf32>
    %81 = arith.addf %57, %80 : vector<128x128xf32>
    %82 = vector.extract_strided_slice %32 {offsets = [0, 64], sizes = [128, 32], strides = [1, 1]} : vector<128x384xf32> to vector<128x32xf32>
    %83 = arith.truncf %82 : vector<128x32xf32> to vector<128x32xbf16>
    %84 = vector.extract_strided_slice %32 {offsets = [0, 192], sizes = [128, 32], strides = [1, 1]} : vector<128x384xf32> to vector<128x32xf32>
    %85 = arith.truncf %84 : vector<128x32xf32> to vector<128x32xbf16>
    %86 = vector.extract_strided_slice %32 {offsets = [0, 320], sizes = [128, 32], strides = [1, 1]} : vector<128x384xf32> to vector<128x32xf32>
    %87 = arith.truncf %86 : vector<128x32xf32> to vector<128x32xbf16>
    %cst_27 = arith.constant dense<0.000000e+00> : vector<128x128xf32>
    %88 = tpu.matmul %83, %85, %cst_27 {dimension_numbers = #tpu.dot_dimension_numbers<[1], [1], [0], [0], [0, 0, 1, 0], [], []>} : vector<128x32xbf16>, vector<128x32xbf16>, vector<128x128xf32> -> vector<128x128xf32>
    %cst_28 = arith.constant dense<0xFF800000> : vector<128xf32>
    %89 = vector.multi_reduction <maximumf>, %88, %cst_28 [1] : vector<128x128xf32> to vector<128xf32>
    %90 = vector.shape_cast %89 : vector<128xf32> to vector<128x1xf32>
    %91 = vector.broadcast %90 : vector<128x1xf32> to vector<128x128xf32>
    %92 = arith.subf %88, %91 : vector<128x128xf32>
    %93 = math.exp %92 : vector<128x128xf32>
    %cst_29 = arith.constant dense<0.000000e+00> : vector<128xf32>
    %94 = vector.multi_reduction <add>, %93, %cst_29 [1] : vector<128x128xf32> to vector<128xf32>
    %95 = vector.shape_cast %94 : vector<128xf32> to vector<128x1xf32>
    %96 = arith.truncf %93 : vector<128x128xf32> to vector<128x128xbf16>
    %cst_30 = arith.constant dense<0.000000e+00> : vector<128x32xf32>
    %97 = tpu.matmul %96, %87, %cst_30 {dimension_numbers = #tpu.dot_dimension_numbers<[1], [0], [0], [1], [0, 0, 1, 1], [], []>} : vector<128x128xbf16>, vector<128x32xbf16>, vector<128x32xf32> -> vector<128x32xf32>
    %98 = tpu.reciprocal %95 {approx = true} : vector<128x1xf32> -> vector<128x1xf32>
    %99 = vector.broadcast %98 : vector<128x1xf32> to vector<128x32xf32>
    %100 = arith.mulf %97, %99 : vector<128x32xf32>
    %101 = arith.truncf %100 : vector<128x32xf32> to vector<128x32xbf16>
    %c2 = arith.constant 2 : index
    %c0_31 = arith.constant 0 : index
    %c0_32 = arith.constant 0 : index
    %102 = vector.load %arg5[%c2, %c0_31, %c0_32] : memref<4x32x128xbf16, #tpu.memory_space<vmem>>, vector<1x32x128xbf16>
    %103 = vector.shape_cast %102 : vector<1x32x128xbf16> to vector<32x128xbf16>
    %cst_33 = arith.constant dense<0.000000e+00> : vector<128x128xf32>
    %104 = tpu.matmul %101, %103, %cst_33 {dimension_numbers = #tpu.dot_dimension_numbers<[1], [0], [0], [1], [0, 0, 1, 1], [], []>} : vector<128x32xbf16>, vector<32x128xbf16>, vector<128x128xf32> -> vector<128x128xf32>
    %105 = arith.addf %81, %104 : vector<128x128xf32>
    %106 = vector.extract_strided_slice %32 {offsets = [0, 96], sizes = [128, 32], strides = [1, 1]} : vector<128x384xf32> to vector<128x32xf32>
    %107 = arith.truncf %106 : vector<128x32xf32> to vector<128x32xbf16>
    %108 = vector.extract_strided_slice %32 {offsets = [0, 224], sizes = [128, 32], strides = [1, 1]} : vector<128x384xf32> to vector<128x32xf32>
    %109 = arith.truncf %108 : vector<128x32xf32> to vector<128x32xbf16>
    %110 = vector.extract_strided_slice %32 {offsets = [0, 352], sizes = [128, 32], strides = [1, 1]} : vector<128x384xf32> to vector<128x32xf32>
    %111 = arith.truncf %110 : vector<128x32xf32> to vector<128x32xbf16>
    %cst_34 = arith.constant dense<0.000000e+00> : vector<128x128xf32>
    %112 = tpu.matmul %107, %109, %cst_34 {dimension_numbers = #tpu.dot_dimension_numbers<[1], [1], [0], [0], [0, 0, 1, 0], [], []>} : vector<128x32xbf16>, vector<128x32xbf16>, vector<128x128xf32> -> vector<128x128xf32>
    %cst_35 = arith.constant dense<0xFF800000> : vector<128xf32>
    %113 = vector.multi_reduction <maximumf>, %112, %cst_35 [1] : vector<128x128xf32> to vector<128xf32>
    %114 = vector.shape_cast %113 : vector<128xf32> to vector<128x1xf32>
    %115 = vector.broadcast %114 : vector<128x1xf32> to vector<128x128xf32>
    %116 = arith.subf %112, %115 : vector<128x128xf32>
    %117 = math.exp %116 : vector<128x128xf32>
    %cst_36 = arith.constant dense<0.000000e+00> : vector<128xf32>
    %118 = vector.multi_reduction <add>, %117, %cst_36 [1] : vector<128x128xf32> to vector<128xf32>
    %119 = vector.shape_cast %118 : vector<128xf32> to vector<128x1xf32>
    %120 = arith.truncf %117 : vector<128x128xf32> to vector<128x128xbf16>
    %cst_37 = arith.constant dense<0.000000e+00> : vector<128x32xf32>
    %121 = tpu.matmul %120, %111, %cst_37 {dimension_numbers = #tpu.dot_dimension_numbers<[1], [0], [0], [1], [0, 0, 1, 1], [], []>} : vector<128x128xbf16>, vector<128x32xbf16>, vector<128x32xf32> -> vector<128x32xf32>
    %122 = tpu.reciprocal %119 {approx = true} : vector<128x1xf32> -> vector<128x1xf32>
    %123 = vector.broadcast %122 : vector<128x1xf32> to vector<128x32xf32>
    %124 = arith.mulf %121, %123 : vector<128x32xf32>
    %125 = arith.truncf %124 : vector<128x32xf32> to vector<128x32xbf16>
    %c3 = arith.constant 3 : index
    %c0_38 = arith.constant 0 : index
    %c0_39 = arith.constant 0 : index
    %126 = vector.load %arg5[%c3, %c0_38, %c0_39] : memref<4x32x128xbf16, #tpu.memory_space<vmem>>, vector<1x32x128xbf16>
    %127 = vector.shape_cast %126 : vector<1x32x128xbf16> to vector<32x128xbf16>
    %cst_40 = arith.constant dense<0.000000e+00> : vector<128x128xf32>
    %128 = tpu.matmul %125, %127, %cst_40 {dimension_numbers = #tpu.dot_dimension_numbers<[1], [0], [0], [1], [0, 0, 1, 1], [], []>} : vector<128x32xbf16>, vector<32x128xbf16>, vector<128x128xf32> -> vector<128x128xf32>
    %129 = arith.addf %105, %128 : vector<128x128xf32>
    %130 = arith.addf %1, %129 : vector<128x128xf32>
    %cst_41 = arith.constant dense<0.000000e+00> : vector<128xf32>
    %131 = vector.multi_reduction <add>, %130, %cst_41 [1] : vector<128x128xf32> to vector<128xf32>
    %132 = vector.shape_cast %131 : vector<128xf32> to vector<128x1xf32>
    %cst_42 = arith.constant 1.280000e+02 : f32
    %133 = vector.broadcast %cst_42 : f32 to vector<128x1xf32>
    %134 = arith.divf %132, %133 : vector<128x1xf32>
    %135 = vector.broadcast %134 : vector<128x1xf32> to vector<128x128xf32>
    %136 = arith.subf %130, %135 : vector<128x128xf32>
    %137 = arith.mulf %136, %136 : vector<128x128xf32>
    %cst_43 = arith.constant dense<0.000000e+00> : vector<128xf32>
    %138 = vector.multi_reduction <add>, %137, %cst_43 [1] : vector<128x128xf32> to vector<128xf32>
    %139 = vector.shape_cast %138 : vector<128xf32> to vector<128x1xf32>
    %cst_44 = arith.constant 1.280000e+02 : f32
    %140 = vector.broadcast %cst_44 : f32 to vector<128x1xf32>
    %141 = arith.divf %139, %140 : vector<128x1xf32>
    %142 = vector.broadcast %134 : vector<128x1xf32> to vector<128x128xf32>
    %143 = arith.subf %130, %142 : vector<128x128xf32>
    %cst_45 = arith.constant 9.99999974E-6 : f32
    %144 = vector.broadcast %cst_45 : f32 to vector<128x1xf32>
    %145 = arith.addf %141, %144 : vector<128x1xf32>
    %146 = math.rsqrt %145 : vector<128x1xf32>
    %147 = vector.broadcast %146 : vector<128x1xf32> to vector<128x128xf32>
    %148 = arith.mulf %143, %147 : vector<128x128xf32>
    %149 = vector.broadcast %5 : vector<1x128xf32> to vector<128x128xf32>
    %150 = arith.mulf %148, %149 : vector<128x128xf32>
    %151 = vector.broadcast %6 : vector<1x128xf32> to vector<128x128xf32>
    %152 = arith.addf %150, %151 : vector<128x128xf32>
    %153 = arith.truncf %152 : vector<128x128xf32> to vector<128x128xbf16>
    %c0_46 = arith.constant 0 : index
    %c0_47 = arith.constant 0 : index
    %154 = vector.load %arg6[%c0_46, %c0_47] : memref<128x512xbf16, #tpu.memory_space<vmem>>, vector<128x512xbf16>
    %cst_48 = arith.constant dense<0.000000e+00> : vector<128x512xf32>
    %155 = tpu.matmul %153, %154, %cst_48 {dimension_numbers = #tpu.dot_dimension_numbers<[1], [0], [0], [1], [0, 0, 1, 1], [], []>} : vector<128x128xbf16>, vector<128x512xbf16>, vector<128x512xf32> -> vector<128x512xf32>
    %c0_49 = arith.constant 0 : index
    %c0_50 = arith.constant 0 : index
    %156 = vector.load %arg3[%c0_49, %c0_50] : memref<1x512xf32, #tpu.memory_space<vmem>>, vector<1x512xf32>
    %157 = vector.broadcast %156 : vector<1x512xf32> to vector<128x512xf32>
    %158 = arith.addf %155, %157 : vector<128x512xf32>
    %cst_51 = arith.constant 5.000000e-01 : f32
    %159 = vector.broadcast %cst_51 : f32 to vector<128x512xf32>
    %160 = arith.mulf %159, %158 : vector<128x512xf32>
    %161 = arith.mulf %158, %158 : vector<128x512xf32>
    %162 = arith.mulf %161, %158 : vector<128x512xf32>
    %cst_52 = arith.constant 4.471500e-02 : f32
    %163 = vector.broadcast %cst_52 : f32 to vector<128x512xf32>
    %164 = arith.mulf %163, %162 : vector<128x512xf32>
    %165 = arith.addf %158, %164 : vector<128x512xf32>
    %cst_53 = arith.constant 0.797884583 : f32
    %166 = vector.broadcast %cst_53 : f32 to vector<128x512xf32>
    %167 = arith.mulf %166, %165 : vector<128x512xf32>
    %168 = math.tanh %167 : vector<128x512xf32>
    %cst_54 = arith.constant 1.000000e+00 : f32
    %169 = vector.broadcast %cst_54 : f32 to vector<128x512xf32>
    %170 = arith.addf %169, %168 : vector<128x512xf32>
    %171 = arith.mulf %160, %170 : vector<128x512xf32>
    %172 = arith.truncf %171 : vector<128x512xf32> to vector<128x512xbf16>
    %c0_55 = arith.constant 0 : index
    %c0_56 = arith.constant 0 : index
    %173 = vector.load %arg7[%c0_55, %c0_56] : memref<512x128xbf16, #tpu.memory_space<vmem>>, vector<512x128xbf16>
    %cst_57 = arith.constant dense<0.000000e+00> : vector<128x128xf32>
    %174 = tpu.matmul %172, %173, %cst_57 {dimension_numbers = #tpu.dot_dimension_numbers<[1], [0], [0], [1], [0, 0, 1, 1], [], []>} : vector<128x512xbf16>, vector<512x128xbf16>, vector<128x128xf32> -> vector<128x128xf32>
    %175 = vector.broadcast %7 : vector<1x128xf32> to vector<128x128xf32>
    %176 = arith.addf %174, %175 : vector<128x128xf32>
    %177 = arith.addf %152, %176 : vector<128x128xf32>
    %c0_58 = arith.constant 0 : index
    %c0_59 = arith.constant 0 : index
    %c0_60 = arith.constant 0 : index
    %178 = vector.load %arg8[%c0_58, %c0_59, %c0_60] : memref<1x128x128xf32, #tpu.memory_space<vmem>>, vector<1x128x128xf32>
    %179 = vector.shape_cast %178 : vector<1x128x128xf32> to vector<128x128xf32>
    %180 = vector.shape_cast %177 : vector<128x128xf32> to vector<1x128x128xf32>
    tpu.vector_store %arg8[%c0_58, %c0_59, %c0_60], %180 {strides = array<i32>} : memref<1x128x128xf32, #tpu.memory_space<vmem>>, vector<1x128x128xf32>,
    return
  }
  func.func @transform_0(%arg0: i32) -> (i32, i32, i32) {
    %c0_i32 = arith.constant 0 : i32
    %c0_i32_0 = arith.constant 0 : i32
    %c0_i32_1 = arith.constant 0 : i32
    return %arg0, %c0_i32, %c0_i32_0 : i32, i32, i32
  }
  func.func @transform_1(%arg0: i32) -> (i32, i32) {
    %c0_i32 = arith.constant 0 : i32
    %c0_i32_0 = arith.constant 0 : i32
    %c0_i32_1 = arith.constant 0 : i32
    return %c0_i32, %c0_i32_0 : i32, i32
  }
  func.func @transform_2(%arg0: i32) -> (i32, i32) {
    %c0_i32 = arith.constant 0 : i32
    %c0_i32_0 = arith.constant 0 : i32
    %c0_i32_1 = arith.constant 0 : i32
    return %c0_i32, %c0_i32_0 : i32, i32
  }
  func.func @transform_3(%arg0: i32) -> (i32, i32) {
    %c0_i32 = arith.constant 0 : i32
    %c0_i32_0 = arith.constant 0 : i32
    %c0_i32_1 = arith.constant 0 : i32
    return %c0_i32, %c0_i32_0 : i32, i32
  }
  func.func @transform_4(%arg0: i32) -> (i32, i32, i32) {
    %c0_i32 = arith.constant 0 : i32
    %c0_i32_0 = arith.constant 0 : i32
    %c0_i32_1 = arith.constant 0 : i32
    %c0_i32_2 = arith.constant 0 : i32
    return %c0_i32, %c0_i32_0, %c0_i32_1 : i32, i32, i32
  }
  func.func @transform_5(%arg0: i32) -> (i32, i32) {
    %c0_i32 = arith.constant 0 : i32
    %c0_i32_0 = arith.constant 0 : i32
    %c0_i32_1 = arith.constant 0 : i32
    return %c0_i32, %c0_i32_0 : i32, i32
  }
  func.func @transform_6(%arg0: i32) -> (i32, i32) {
    %c0_i32 = arith.constant 0 : i32
    %c0_i32_0 = arith.constant 0 : i32
    %c0_i32_1 = arith.constant 0 : i32
    return %c0_i32, %c0_i32_0 : i32, i32
  }
  func.func @transform_7(%arg0: i32) -> (i32, i32, i32) {
    %c0_i32 = arith.constant 0 : i32
    %c0_i32_0 = arith.constant 0 : i32
    %c0_i32_1 = arith.constant 0 : i32
    return %arg0, %c0_i32, %c0_i32_0 : i32, i32, i32
  }
}

</mosaic_0001>

<llo_original>
// kernel: tpu_custom_call.1
$region0: #{tpu_custom_call.1}
  #allocation0 [shape = 'u32[]', space=smem, size = 0x4, offset = 0x4, fixed_abs, tag = 'smem constant byte address 0x4 - core index']
  #allocation1 [shape = 'u32[144,128]{1,0:T(1,128)}', space=vmem, size = 0x12000, scoped, tag = 'internal scratch']
  %s0 = inlined_call_operand.hbm [shape: f32[2,128,128], index: 0, kind: input, shape index: {}]
  %s1 = inlined_call_operand.hbm [shape: f32[8,128], index: 1, kind: input, shape index: {}]
  %s2 = inlined_call_operand.hbm [shape: f32[1,512], index: 2, kind: input, shape index: {}]
  %s3 = inlined_call_operand.hbm [shape: bf16[128,384], index: 3, kind: input, shape index: {}]
  %s4 = inlined_call_operand.hbm [shape: bf16[4,32,128], index: 4, kind: input, shape index: {}]
  %s5 = inlined_call_operand.hbm [shape: bf16[128,512], index: 5, kind: input, shape index: {}]
  %s6 = inlined_call_operand.hbm [shape: bf16[512,128], index: 6, kind: input, shape index: {}]
  %s7 = inlined_call_operand.hbm [shape: f32[2,128,128], index: 7, kind: output, shape index: {}]
  %s8 = sld [smem:[#allocation0]]
  $region89: #{tpu_custom_call.1} parent=0
    _
  %s10 = ssub.s32 1, %s8
  %s11 = scalar_select 0, %s10, %s8
  $region1: #{tpu_custom_call.1} parent=0
    #allocation2 [shape = 'u8[131072]{0}', space=vmem, size = 0x20000, scoped, tag = 'input window, operand 0']
    #allocation3 [shape = 's32[2]{0}', space=sflag, size = 0x8, scoped, tag = 'scoped memory for tpu_custom_call.1']
    #allocation4 [shape = 's32[2]{0}', space=sflag, size = 0x8, scoped, tag = 'scoped memory for tpu_custom_call.1']
    #allocation5 [shape = 'u8[4096]{0}', space=vmem, size = 0x1000, scoped, tag = 'input window, operand 1, single buffered']
    #allocation6 [shape = 's32[1]{0}', space=sflag, size = 0x4, scoped, tag = 'scoped memory for tpu_custom_call.1']
    #allocation7 [shape = 'u8[2048]{0}', space=vmem, size = 0x800, scoped, tag = 'input window, operand 2, single buffered']
    #allocation8 [shape = 'u8[98304]{0}', space=vmem, size = 0x18000, scoped, tag = 'input window, operand 3, single buffered']
    #allocation9 [shape = 's32[1]{0}', space=sflag, size = 0x4, scoped, tag = 'scoped memory for tpu_custom_call.1']
    #allocation10 [shape = 'u8[32768]{0}', space=vmem, size = 0x8000, scoped, tag = 'input window, operand 4, single buffered']
    #allocation11 [shape = 'u8[131072]{0}', space=vmem, size = 0x20000, scoped, tag = 'input window, operand 5, single buffered']
    #allocation12 [shape = 's32[1]{0}', space=sflag, size = 0x4, scoped, tag = 'scoped memory for tpu_custom_call.1']
    #allocation13 [shape = 'u8[131072]{0}', space=vmem, size = 0x20000, scoped, tag = 'input window, operand 6, single buffered']
    #allocation14 [shape = 'u8[131072]{0}', space=vmem, size = 0x20000, scoped, tag = 'output window, operand 0']
    %12 = vsyncpa [#allocation3], 0
    %s13 = scalar_lea.sflag [#allocation3], 1
    %14 = vsyncpa %s13, 0
    %15 = vsyncpa [#allocation6], 0
    %16 = vsyncpa [#allocation9], 0
    %17 = vsyncpa [#allocation12], 0
    %18 = vsyncpa [#allocation4], 0
    %s19 = scalar_lea.sflag [#allocation4], 1
    %20 = vsyncpa %s19, 0
    loop: start=0, step=1, limit=4
    $region2: #{tpu_custom_call.1} parent=1 // loop_pre_header
      _
    $region3: #{tpu_custom_call.1} parent=1 // loop_header
      %s22 = sphi 0, %s26
      %p23 = scmp.ge.s32.totalorder %s22, 4
      %s32 = sphi 0, %s34
      %s35 = sphi 0, %s32
      %s36 = sphi 0, %s35
      %s52 = sphi 0, %s36
      %s56 = sphi 0, %s56
      %s58 = sphi 0, %s56
      %s59 = sphi 0, %s58
      %s73 = sphi 0, %s59
      %s77 = sphi 0, %s77
      %s79 = sphi 0, %s77
      %s80 = sphi 0, %s79
      %s94 = sphi 0, %s80
      %s98 = sphi 0, %s98
      %s100 = sphi 0, %s98
      %s101 = sphi 0, %s100
      %s115 = sphi 0, %s101
      %s119 = sphi 0, %s119
      %s121 = sphi 0, %s119
      %s122 = sphi 0, %s121
      %s136 = sphi 0, %s122
      %s140 = sphi 0, %s140
      %s142 = sphi 0, %s140
      %s143 = sphi 0, %s142
      %s157 = sphi 0, %s143
      %s161 = sphi 0, %s161
      %s163 = sphi 0, %s161
      %s164 = sphi 0, %s163
      %s178 = sphi 0, %s164
      %s184 = sphi 0, %s186
      %s187 = sphi 0, %s184
      %s188 = sphi 0, %s187
      %s204 = sphi 0, %s188
    $region4: #{tpu_custom_call.1} parent=1 // loop_header_branch
      %25 = sbr.rel (%p23) target = $region8
    $region5: #{tpu_custom_call.1} parent=1 // loop_body
      %s27 = ssub.s32 %s22, 1
      %s28 = ssub.s32 %s22, 2
      %s29 = sadd.s32 %s22, 1
      %s30 = ssub.s32 %s22, %s29
      %p31 = scmp.eq.s32.totalorder %s30, 0
      %s33 = sadd.s32 %s32, 1
      %s34 = scalar_select %p31, %s32, %s33
      %p37 = pneg %p31
      %p38 = scmp.eq.s32.totalorder %s22, 1
      %p39 = por %p37, %p38
      %p40 = scmp.ne.s32.totalorder %s32, %s35
      %p41 = scmp.eq.s32.totalorder %s22, 0
      %p42 = por %p40, %p41
      %p43 = scmp.ne.s32.totalorder %s32, %s35
      %p44 = scmp.eq.s32.totalorder %s27, 1
      %p45 = por %p43, %p44
      %p46 = scmp.ne.s32.totalorder %s35, %s36
      %p47 = scmp.eq.s32.totalorder %s27, 0
      %p48 = por %p46, %p47
      %p49 = scmp.ne.s32.totalorder %s35, %s36
      %p50 = scmp.eq.s32.totalorder %s28, 1
      %p51 = por %p49, %p50
      %p53 = scmp.ne.s32.totalorder %s36, %s52
      %p54 = scmp.eq.s32.totalorder %s28, 0
      %p55 = por %p53, %p54
      %s57 = sadd.s32 %s56, 1
      %p60 = scmp.eq.s32.totalorder %s22, 1
      %p61 = scmp.ne.s32.totalorder %s56, %s58
      %p62 = scmp.eq.s32.totalorder %s22, 0
      %p63 = por %p61, %p62
      %p64 = scmp.ne.s32.totalorder %s56, %s58
      %p65 = scmp.eq.s32.totalorder %s27, 1
      %p66 = por %p64, %p65
      %p67 = scmp.ne.s32.totalorder %s58, %s59
      %p68 = scmp.eq.s32.totalorder %s27, 0
      %p69 = por %p67, %p68
      %p70 = scmp.ne.s32.totalorder %s58, %s59
      %p71 = scmp.eq.s32.totalorder %s28, 1
      %p72 = por %p70, %p71
      %p74 = scmp.ne.s32.totalorder %s59, %s73
      %p75 = scmp.eq.s32.totalorder %s28, 0
      %p76 = por %p74, %p75
      %s78 = sadd.s32 %s77, 1
      %p81 = scmp.eq.s32.totalorder %s22, 1
      %p82 = scmp.ne.s32.totalorder %s77, %s79
      %p83 = scmp.eq.s32.totalorder %s22, 0
      %p84 = por %p82, %p83
      %p85 = scmp.ne.s32.totalorder %s77, %s79
      %p86 = scmp.eq.s32.totalorder %s27, 1
      %p87 = por %p85, %p86
      %p88 = scmp.ne.s32.totalorder %s79, %s80
      %p89 = scmp.eq.s32.totalorder %s27, 0
      %p90 = por %p88, %p89
      %p91 = scmp.ne.s32.totalorder %s79, %s80
      %p92 = scmp.eq.s32.totalorder %s28, 1
      %p93 = por %p91, %p92
      %p95 = scmp.ne.s32.totalorder %s80, %s94
      %p96 = scmp.eq.s32.totalorder %s28, 0
      %p97 = por %p95, %p96
      %s99 = sadd.s32 %s98, 1
      %p102 = scmp.eq.s32.totalorder %s22, 1
      %p103 = scmp.ne.s32.totalorder %s98, %s100
      %p104 = scmp.eq.s32.totalorder %s22, 0
      %p105 = por %p103, %p104
      %p106 = scmp.ne.s32.totalorder %s98, %s100
      %p107 = scmp.eq.s32.totalorder %s27, 1
      %p108 = por %p106, %p107
      %p109 = scmp.ne.s32.totalorder %s100, %s101
      %p110 = scmp.eq.s32.totalorder %s27, 0
      %p111 = por %p109, %p110
      %p112 = scmp.ne.s32.totalorder %s100, %s101
      %p113 = scmp.eq.s32.totalorder %s28, 1
      %p114 = por %p112, %p113
      %p116 = scmp.ne.s32.totalorder %s101, %s115
      %p117 = scmp.eq.s32.totalorder %s28, 0
      %p118 = por %p116, %p117
      %s120 = sadd.s32 %s119, 1
      %p123 = scmp.eq.s32.totalorder %s22, 1
      %p124 = scmp.ne.s32.totalorder %s119, %s121
      %p125 = scmp.eq.s32.totalorder %s22, 0
      %p126 = por %p124, %p125
      %p127 = scmp.ne.s32.totalorder %s119, %s121
      %p128 = scmp.eq.s32.totalorder %s27, 1
      %p129 = por %p127, %p128
      %p130 = scmp.ne.s32.totalorder %s121, %s122
      %p131 = scmp.eq.s32.totalorder %s27, 0
      %p132 = por %p130, %p131
      %p133 = scmp.ne.s32.totalorder %s121, %s122
      %p134 = scmp.eq.s32.totalorder %s28, 1
      %p135 = por %p133, %p134
      %p137 = scmp.ne.s32.totalorder %s122, %s136
      %p138 = scmp.eq.s32.totalorder %s28, 0
      %p139 = por %p137, %p138
      %s141 = sadd.s32 %s140, 1
      %p144 = scmp.eq.s32.totalorder %s22, 1
      %p145 = scmp.ne.s32.totalorder %s140, %s142
      %p146 = scmp.eq.s32.totalorder %s22, 0
      %p147 = por %p145, %p146
      %p148 = scmp.ne.s32.totalorder %s140, %s142
      %p149 = scmp.eq.s32.totalorder %s27, 1
      %p150 = por %p148, %p149
      %p151 = scmp.ne.s32.totalorder %s142, %s143
      %p152 = scmp.eq.s32.totalorder %s27, 0
      %p153 = por %p151, %p152
      %p154 = scmp.ne.s32.totalorder %s142, %s143
      %p155 = scmp.eq.s32.totalorder %s28, 1
      %p156 = por %p154, %p155
      %p158 = scmp.ne.s32.totalorder %s143, %s157
      %p159 = scmp.eq.s32.totalorder %s28, 0
      %p160 = por %p158, %p159
      %s162 = sadd.s32 %s161, 1
      %p165 = scmp.eq.s32.totalorder %s22, 1
      %p166 = scmp.ne.s32.totalorder %s161, %s163
      %p167 = scmp.eq.s32.totalorder %s22, 0
      %p168 = por %p166, %p167
      %p169 = scmp.ne.s32.totalorder %s161, %s163
      %p170 = scmp.eq.s32.totalorder %s27, 1
      %p171 = por %p169, %p170
      %p172 = scmp.ne.s32.totalorder %s163, %s164
      %p173 = scmp.eq.s32.totalorder %s27, 0
      %p174 = por %p172, %p173
      %p175 = scmp.ne.s32.totalorder %s163, %s164
      %p176 = scmp.eq.s32.totalorder %s28, 1
      %p177 = por %p175, %p176
      %p179 = scmp.ne.s32.totalorder %s164, %s178
      %p180 = scmp.eq.s32.totalorder %s28, 0
      %p181 = por %p179, %p180
      %s182 = ssub.s32 %s22, %s29
      %p183 = scmp.eq.s32.totalorder %s182, 0
      %s185 = sadd.s32 %s184, 1
      %s186 = scalar_select %p183, %s184, %s185
      %p189 = pneg %p183
      %p190 = scmp.eq.s32.totalorder %s22, 1
      %p191 = por %p189, %p190
      %p192 = scmp.ne.s32.totalorder %s184, %s187
      %p193 = scmp.eq.s32.totalorder %s22, 0
      %p194 = por %p192, %p193
      %p195 = scmp.ne.s32.totalorder %s184, %s187
      %p196 = scmp.eq.s32.totalorder %s27, 1
      %p197 = por %p195, %p196
      %p198 = scmp.ne.s32.totalorder %s187, %s188
      %p199 = scmp.eq.s32.totalorder %s27, 0
      %p200 = por %p198, %p199
      %p201 = scmp.ne.s32.totalorder %s187, %s188
      %p202 = scmp.eq.s32.totalorder %s28, 1
      %p203 = por %p201, %p202
      %p205 = scmp.ne.s32.totalorder %s188, %s204
      %p206 = scmp.eq.s32.totalorder %s28, 0
      %p207 = por %p205, %p206
      %p208 = scmp.le.s32.totalorder 1, %s22
      %p209 = scmp.lt.s32.totalorder %s22, 3
      %p210 = pnand %p208, %p209
      %p211 = pneg %p210
      // Predicated region
      $region9: #{tpu_custom_call.1} parent=5 // pred_check
        _
      $region10: #{tpu_custom_call.1} parent=5 // pred_check_branch
        %213 = sbr.rel (%p210) target = $region12
      $region11: #{tpu_custom_call.1} parent=5 // pred_region
        %s214 = ssub.s32 %s22, 1
        // Predicated region
        $region13: #{tpu_custom_call.1} parent=11 // pred_check
          %p215 = pneg %p69
        $region14: #{tpu_custom_call.1} parent=11 // pred_check_branch
          %217 = sbr.rel (%p215) target = $region16
        $region15: #{tpu_custom_call.1} parent=11 // pred_region
          %s219 = ssub.s32 128, 128
          %220 = vsyncadd [#allocation6], %s219
          %s222 = sshll.u32 [#allocation5], 4
          %s223 = int_to_ptr.vmem [resolvable:$true] %s222
          %225 = dma.hbm_to_vmem [thread:$0]  %s1, 128, %s223, [#allocation6]
        $region16: #{tpu_custom_call.1} parent=11 // pred_fallthru
          _
        // Predicated region
        $region17: #{tpu_custom_call.1} parent=11 // pred_check
          %p226 = pneg %p90
        $region18: #{tpu_custom_call.1} parent=11 // pred_check_branch
          %228 = sbr.rel (%p226) target = $region20
        $region19: #{tpu_custom_call.1} parent=11 // pred_region
          %s230 = ssub.s32 64, 64
          %231 = vsyncadd [#allocation6], %s230
          %s233 = sshll.u32 [#allocation7], 4
          %s234 = int_to_ptr.vmem [resolvable:$true] %s233
          %236 = dma.hbm_to_vmem [thread:$0]  %s2, 64, %s234, [#allocation6]
        $region20: #{tpu_custom_call.1} parent=11 // pred_fallthru
          _
        // Predicated region
        $region21: #{tpu_custom_call.1} parent=11 // pred_check
          %p237 = pneg %p111
        $region22: #{tpu_custom_call.1} parent=11 // pred_check_branch
          %239 = sbr.rel (%p237) target = $region24
        $region23: #{tpu_custom_call.1} parent=11 // pred_region
          %s241 = ssub.s32 3072, 3072
          %242 = vsyncadd [#allocation9], %s241
          %s243 = sshll.u32 [#allocation8], 4
          %s244 = int_to_ptr.vmem [resolvable:$true] %s243
          %249 = dma.hbm_to_vmem [thread:$0]  %s3, 3072, %s244, [#allocation9], 192, 192, 12
        $region24: #{tpu_custom_call.1} parent=11 // pred_fallthru
          _
        // Predicated region
        $region25: #{tpu_custom_call.1} parent=11 // pred_check
          %p250 = pneg %p132
        $region26: #{tpu_custom_call.1} parent=11 // pred_check_branch
          %252 = sbr.rel (%p250) target = $region28
        $region27: #{tpu_custom_call.1} parent=11 // pred_region
          %s254 = ssub.s32 1024, 1024
          %255 = vsyncadd [#allocation9], %s254
          %s256 = sshll.u32 [#allocation10], 4
          %s257 = int_to_ptr.vmem [resolvable:$true] %s256
          %262 = dma.hbm_to_vmem [thread:$0]  %s4, 1024, %s257, [#allocation9], 64, 64, 4
        $region28: #{tpu_custom_call.1} parent=11 // pred_fallthru
          _
        // Predicated region
        $region29: #{tpu_custom_call.1} parent=11 // pred_check
          %p263 = pneg %p153
        $region30: #{tpu_custom_call.1} parent=11 // pred_check_branch
          %265 = sbr.rel (%p263) target = $region32
        $region31: #{tpu_custom_call.1} parent=11 // pred_region
          %s267 = ssub.s32 4096, 4096
          %268 = vsyncadd [#allocation12], %s267
          %s269 = sshll.u32 [#allocation11], 4
          %s270 = int_to_ptr.vmem [resolvable:$true] %s269
          %275 = dma.hbm_to_vmem [thread:$0]  %s5, 4096, %s270, [#allocation12], 256, 256, 16
        $region32: #{tpu_custom_call.1} parent=11 // pred_fallthru
          _
        // Predicated region
        $region33: #{tpu_custom_call.1} parent=11 // pred_check
          %p276 = pneg %p174
        $region34: #{tpu_custom_call.1} parent=11 // pred_check_branch
          %278 = sbr.rel (%p276) target = $region36
        $region35: #{tpu_custom_call.1} parent=11 // pred_region
          %s280 = ssub.s32 4096, 4096
          %281 = vsyncadd [#allocation12], %s280
          %s282 = sshll.u32 [#allocation13], 4
          %s283 = int_to_ptr.vmem [resolvable:$true] %s282
          %288 = dma.hbm_to_vmem [thread:$0]  %s6, 4096, %s283, [#allocation12], 64, 64, 4
        $region36: #{tpu_custom_call.1} parent=11 // pred_fallthru
          _
      $region12: #{tpu_custom_call.1} parent=5 // pred_fallthru
        _
      %p289 = scmp.lt.s32.totalorder %s22, 2
      // Predicated region
      $region37: #{tpu_custom_call.1} parent=5 // pred_check
        %p290 = pneg %p289
      $region38: #{tpu_custom_call.1} parent=5 // pred_check_branch
        %292 = sbr.rel (%p290) target = $region40
      $region39: #{tpu_custom_call.1} parent=5 // pred_region
        // Predicated region
        $region41: #{tpu_custom_call.1} parent=39 // pred_check
          %p293 = pneg %p42
        $region42: #{tpu_custom_call.1} parent=39 // pred_check_branch
          %295 = sbr.rel (%p293) target = $region44
        $region43: #{tpu_custom_call.1} parent=39 // pred_region
          %s296 = sand.u32 %s32, 1
          %s297 = scalar_lea.sflag [#allocation3], %s296
          %s298 = sand.u32 %s32, 1
          %s299 = smul.addr %s298, 128
          %s300 = scalar_lea.vmem [#allocation2], %s299
          %s302 = ssub.s32 2048, 2048
          %303 = vsyncadd %s297, %s302
          %s304 = smul.addr %s22, 16
          %s305 = smul.addr %s304, 128
          %s306 = scalar_lea.hbm %s0, %s305
          %s307 = sshll.u32 %s300, 4
          %s308 = int_to_ptr.vmem [resolvable:$true] %s307
          %313 = dma.hbm_to_vmem [thread:$0]  %s306, 2048, %s308, %s297, 128, 128, 8
        $region44: #{tpu_custom_call.1} parent=39 // pred_fallthru
          _
      $region40: #{tpu_custom_call.1} parent=5 // pred_fallthru
        _
      %p314 = scmp.le.s32.totalorder 1, %s22
      %p315 = scmp.lt.s32.totalorder %s22, 3
      %p316 = pnand %p314, %p315
      %p317 = pneg %p316
      // Predicated region
      $region45: #{tpu_custom_call.1} parent=5 // pred_check
        _
      $region46: #{tpu_custom_call.1} parent=5 // pred_check_branch
        %319 = sbr.rel (%p316) target = $region48
      $region47: #{tpu_custom_call.1} parent=5 // pred_region
        %s320 = ssub.s32 %s22, 1
        %s321 = sand.u32 %s35, 1
        %s322 = scalar_lea.sflag [#allocation3], %s321
        %s323 = sand.u32 %s35, 1
        %s324 = smul.addr %s323, 128
        %s325 = scalar_lea.vmem [#allocation2], %s324
        // Predicated region
        $region49: #{tpu_custom_call.1} parent=47 // pred_check
          %p326 = pneg %p48
        $region50: #{tpu_custom_call.1} parent=47 // pred_check_branch
          %328 = sbr.rel (%p326) target = $region52
        $region51: #{tpu_custom_call.1} parent=47 // pred_region
          %329 = dma.done %s322, 2048
        $region52: #{tpu_custom_call.1} parent=47 // pred_fallthru
          _
        // Predicated region
        $region53: #{tpu_custom_call.1} parent=47 // pred_check
          %p330 = pneg %p69
        $region54: #{tpu_custom_call.1} parent=47 // pred_check_branch
          %332 = sbr.rel (%p330) target = $region56
        $region55: #{tpu_custom_call.1} parent=47 // pred_region
          %333 = dma.done [#allocation6], 128
        $region56: #{tpu_custom_call.1} parent=47 // pred_fallthru
          _
        // Predicated region
        $region57: #{tpu_custom_call.1} parent=47 // pred_check
          %p334 = pneg %p90
        $region58: #{tpu_custom_call.1} parent=47 // pred_check_branch
          %336 = sbr.rel (%p334) target = $region60
        $region59: #{tpu_custom_call.1} parent=47 // pred_region
          %337 = dma.done [#allocation6], 64
        $region60: #{tpu_custom_call.1} parent=47 // pred_fallthru
          _
        // Predicated region
        $region61: #{tpu_custom_call.1} parent=47 // pred_check
          %p338 = pneg %p111
        $region62: #{tpu_custom_call.1} parent=47 // pred_check_branch
          %340 = sbr.rel (%p338) target = $region64
        $region63: #{tpu_custom_call.1} parent=47 // pred_region
          %341 = dma.done [#allocation9], 3072
        $region64: #{tpu_custom_call.1} parent=47 // pred_fallthru
          _
        // Predicated region
        $region65: #{tpu_custom_call.1} parent=47 // pred_check
          %p342 = pneg %p132
        $region66: #{tpu_custom_call.1} parent=47 // pred_check_branch
          %344 = sbr.rel (%p342) target = $region68
        $region67: #{tpu_custom_call.1} parent=47 // pred_region
          %345 = dma.done [#allocation9], 1024
        $region68: #{tpu_custom_call.1} parent=47 // pred_fallthru
          _
        // Predicated region
        $region69: #{tpu_custom_call.1} parent=47 // pred_check
          %p346 = pneg %p153
        $region70: #{tpu_custom_call.1} parent=47 // pred_check_branch
          %348 = sbr.rel (%p346) target = $region72
        $region71: #{tpu_custom_call.1} parent=47 // pred_region
          %349 = dma.done [#allocation12], 4096
        $region72: #{tpu_custom_call.1} parent=47 // pred_fallthru
          _
        // Predicated region
        $region73: #{tpu_custom_call.1} parent=47 // pred_check
          %p350 = pneg %p174
        $region74: #{tpu_custom_call.1} parent=47 // pred_check_branch
          %352 = sbr.rel (%p350) target = $region76
        $region75: #{tpu_custom_call.1} parent=47 // pred_region
          %353 = dma.done [#allocation12], 4096
        $region76: #{tpu_custom_call.1} parent=47 // pred_fallthru
          _
        %s354 = sand.u32 %s35, 1
        %s355 = scalar_lea.sflag [#allocation3], %s354
        %s356 = sand.u32 %s35, 1
        %s357 = smul.addr %s356, 128
        %s358 = scalar_lea.vmem [#allocation2], %s357
        %p359 = pneg %p48
        %p360 = pneg %p45
        %p361 = pneg %p69
        %p362 = pneg %p66
        %p363 = pneg %p90
        %p364 = pneg %p87
        %p365 = pneg %p111
        %p366 = pneg %p108
        %p367 = pneg %p132
        %p368 = pneg %p129
        %p369 = pneg %p153
        %p370 = pneg %p150
        %p371 = pneg %p174
        %p372 = pneg %p171
        %p373 = pneg %p200
        %p374 = pneg %p197
        %s375 = sand.u32 %s187, 1
        %s376 = scalar_lea.sflag [#allocation4], %s375
        %s377 = sand.u32 %s187, 1
        %s378 = smul.addr %s377, 128
        %s379 = scalar_lea.vmem [#allocation14], %s378
        %v381 = vld [vmem:[%s325] sm:$0xff]
        %v382 = vld [vmem:[%s325 + $0x8] sm:$0xff]
        %v383 = vld [vmem:[%s325 + $0x10] sm:$0xff]
        %v384 = vld [vmem:[%s325 + $0x18] sm:$0xff]
        %v385 = vld [vmem:[%s325 + $0x20] sm:$0xff]
        %v386 = vld [vmem:[%s325 + $0x28] sm:$0xff]
        %v387 = vld [vmem:[%s325 + $0x30] sm:$0xff]
        %v388 = vld [vmem:[%s325 + $0x38] sm:$0xff]
        %v389 = vld [vmem:[%s325 + $0x40] sm:$0xff]
        %v390 = vld [vmem:[%s325 + $0x48] sm:$0xff]
        %v391 = vld [vmem:[%s325 + $0x50] sm:$0xff]
        %v392 = vld [vmem:[%s325 + $0x58] sm:$0xff]
        %v393 = vld [vmem:[%s325 + $0x60] sm:$0xff]
        %v394 = vld [vmem:[%s325 + $0x68] sm:$0xff]
        %v395 = vld [vmem:[%s325 + $0x70] sm:$0xff]
        %v396 = vld [vmem:[%s325 + $0x78] sm:$0xff]
        %v397 = vld [vmem:[#allocation5] sm:$0xff]
        %398 = vadd.xlane.f32.xlu0 %v381
        %v399 = vpop.xlane.xlu0 %398
        %400 = vadd.xlane.f32.xlu0 %v382
        %v401 = vpop.xlane.xlu0 %400
        %402 = vadd.xlane.f32.xlu0 %v383
        %v403 = vpop.xlane.xlu0 %402
        %404 = vadd.xlane.f32.xlu0 %v384
        %v405 = vpop.xlane.xlu0 %404
        %406 = vadd.xlane.f32.xlu0 %v385
        %v407 = vpop.xlane.xlu0 %406
        %408 = vadd.xlane.f32.xlu0 %v386
        %v409 = vpop.xlane.xlu0 %408
        %410 = vadd.xlane.f32.xlu0 %v387
        %v411 = vpop.xlane.xlu0 %410
        %412 = vadd.xlane.f32.xlu0 %v388
        %v413 = vpop.xlane.xlu0 %412
        %414 = vadd.xlane.f32.xlu0 %v389
        %v415 = vpop.xlane.xlu0 %414
        %416 = vadd.xlane.f32.xlu0 %v390
        %v417 = vpop.xlane.xlu0 %416
        %418 = vadd.xlane.f32.xlu0 %v391
        %v419 = vpop.xlane.xlu0 %418
        %420 = vadd.xlane.f32.xlu0 %v392
        %v421 = vpop.xlane.xlu0 %420
        %422 = vadd.xlane.f32.xlu0 %v393
        %v423 = vpop.xlane.xlu0 %422
        %424 = vadd.xlane.f32.xlu0 %v394
        %v425 = vpop.xlane.xlu0 %424
        %426 = vadd.xlane.f32.xlu0 %v395
        %v427 = vpop.xlane.xlu0 %426
        %428 = vadd.xlane.f32.xlu0 %v396
        %v429 = vpop.xlane.xlu0 %428
        %v430 = vrcp.pop 128.0
        %v431 = vmul.f32 %v399, %v430
        %v432 = vmul.f32 %v401, %v430
        %v433 = vmul.f32 %v403, %v430
        %v434 = vmul.f32 %v405, %v430
        %v435 = vmul.f32 %v407, %v430
        %v436 = vmul.f32 %v409, %v430
        %v437 = vmul.f32 %v411, %v430
        %v438 = vmul.f32 %v413, %v430
        %v439 = vmul.f32 %v415, %v430
        %v440 = vmul.f32 %v417, %v430
        %v441 = vmul.f32 %v419, %v430
        %v442 = vmul.f32 %v421, %v430
        %v443 = vmul.f32 %v423, %v430
        %v444 = vmul.f32 %v425, %v430
        %v445 = vmul.f32 %v427, %v430
        %v446 = vmul.f32 %v429, %v430
        %v447 = vsub.f32 %v381, %v431
        %v448 = vsub.f32 %v382, %v432
        %v449 = vsub.f32 %v383, %v433
        %v450 = vsub.f32 %v384, %v434
        %v451 = vsub.f32 %v385, %v435
        %v452 = vsub.f32 %v386, %v436
        %v453 = vsub.f32 %v387, %v437
        %v454 = vsub.f32 %v388, %v438
        %v455 = vsub.f32 %v389, %v439
        %v456 = vsub.f32 %v390, %v440
        %v457 = vsub.f32 %v391, %v441
        %v458 = vsub.f32 %v392, %v442
        %v459 = vsub.f32 %v393, %v443
        %v460 = vsub.f32 %v394, %v444
        %v461 = vsub.f32 %v395, %v445
        %v462 = vsub.f32 %v396, %v446
        %v463 = vmul.f32 %v447, %v447
        %v464 = vmul.f32 %v448, %v448
        %v465 = vmul.f32 %v449, %v449
        %v466 = vmul.f32 %v450, %v450
        %v467 = vmul.f32 %v451, %v451
        %v468 = vmul.f32 %v452, %v452
        %v469 = vmul.f32 %v453, %v453
        %v470 = vmul.f32 %v454, %v454
        %v471 = vmul.f32 %v455, %v455
        %v472 = vmul.f32 %v456, %v456
        %v473 = vmul.f32 %v457, %v457
        %v474 = vmul.f32 %v458, %v458
        %v475 = vmul.f32 %v459, %v459
        %v476 = vmul.f32 %v460, %v460
        %v477 = vmul.f32 %v461, %v461
        %v478 = vmul.f32 %v462, %v462
        %479 = vadd.xlane.f32.xlu0 %v463
        %v480 = vpop.xlane.xlu0 %479
        %481 = vadd.xlane.f32.xlu0 %v464
        %v482 = vpop.xlane.xlu0 %481
        %483 = vadd.xlane.f32.xlu0 %v465
        %v484 = vpop.xlane.xlu0 %483
        %485 = vadd.xlane.f32.xlu0 %v466
        %v486 = vpop.xlane.xlu0 %485
        %487 = vadd.xlane.f32.xlu0 %v467
        %v488 = vpop.xlane.xlu0 %487
        %489 = vadd.xlane.f32.xlu0 %v468
        %v490 = vpop.xlane.xlu0 %489
        %491 = vadd.xlane.f32.xlu0 %v469
        %v492 = vpop.xlane.xlu0 %491
        %493 = vadd.xlane.f32.xlu0 %v470
        %v494 = vpop.xlane.xlu0 %493
        %495 = vadd.xlane.f32.xlu0 %v471
        %v496 = vpop.xlane.xlu0 %495
        %497 = vadd.xlane.f32.xlu0 %v472
        %v498 = vpop.xlane.xlu0 %497
        %499 = vadd.xlane.f32.xlu0 %v473
        %v500 = vpop.xlane.xlu0 %499
        %501 = vadd.xlane.f32.xlu0 %v474
        %v502 = vpop.xlane.xlu0 %501
        %503 = vadd.xlane.f32.xlu0 %v475
        %v504 = vpop.xlane.xlu0 %503
        %505 = vadd.xlane.f32.xlu0 %v476
        %v506 = vpop.xlane.xlu0 %505
        %507 = vadd.xlane.f32.xlu0 %v477
        %v508 = vpop.xlane.xlu0 %507
        %509 = vadd.xlane.f32.xlu0 %v478
        %v510 = vpop.xlane.xlu0 %509
        %v511 = vmul.f32 %v480, %v430
        %v512 = vmul.f32 %v482, %v430
        %v513 = vmul.f32 %v484, %v430
        %v514 = vmul.f32 %v486, %v430
        %v515 = vmul.f32 %v488, %v430
        %v516 = vmul.f32 %v490, %v430
        %v517 = vmul.f32 %v492, %v430
        %v518 = vmul.f32 %v494, %v430
        %v519 = vmul.f32 %v496, %v430
        %v520 = vmul.f32 %v498, %v430
        %v521 = vmul.f32 %v500, %v430
        %v522 = vmul.f32 %v502, %v430
        %v523 = vmul.f32 %v504, %v430
        %v524 = vmul.f32 %v506, %v430
        %v525 = vmul.f32 %v508, %v430
        %v526 = vmul.f32 %v510, %v430
        %v527 = vadd.f32 %v511, 1e-05
        %v528 = vadd.f32 %v512, 1e-05
        %v529 = vadd.f32 %v513, 1e-05
        %v530 = vadd.f32 %v514, 1e-05
        %v531 = vadd.f32 %v515, 1e-05
        %v532 = vadd.f32 %v516, 1e-05
        %v533 = vadd.f32 %v517, 1e-05
        %v534 = vadd.f32 %v518, 1e-05
        %v535 = vadd.f32 %v519, 1e-05
        %v536 = vadd.f32 %v520, 1e-05
        %v537 = vadd.f32 %v521, 1e-05
        %v538 = vadd.f32 %v522, 1e-05
        %v539 = vadd.f32 %v523, 1e-05
        %v540 = vadd.f32 %v524, 1e-05
        %v541 = vadd.f32 %v525, 1e-05
        %v542 = vadd.f32 %v526, 1e-05
        %v543 = vrsqrt.pop %v527
        %v544 = vrsqrt.pop %v528
        %v545 = vrsqrt.pop %v529
        %v546 = vrsqrt.pop %v530
        %v547 = vrsqrt.pop %v531
        %v548 = vrsqrt.pop %v532
        %v549 = vrsqrt.pop %v533
        %v550 = vrsqrt.pop %v534
        %v551 = vrsqrt.pop %v535
        %v552 = vrsqrt.pop %v536
        %v553 = vrsqrt.pop %v537
        %v554 = vrsqrt.pop %v538
        %v555 = vrsqrt.pop %v539
        %v556 = vrsqrt.pop %v540
        %v557 = vrsqrt.pop %v541
        %v558 = vrsqrt.pop %v542
        %v559 = vmul.f32 %v447, %v543
        %v560 = vmul.f32 %v448, %v544
        %v561 = vmul.f32 %v449, %v545
        %v562 = vmul.f32 %v450, %v546
        %v563 = vmul.f32 %v451, %v547
        %v564 = vmul.f32 %v452, %v548
        %v565 = vmul.f32 %v453, %v549
        %v566 = vmul.f32 %v454, %v550
        %v567 = vmul.f32 %v455, %v551
        %v568 = vmul.f32 %v456, %v552
        %v569 = vmul.f32 %v457, %v553
        %v570 = vmul.f32 %v458, %v554
        %v571 = vmul.f32 %v459, %v555
        %v572 = vmul.f32 %v460, %v556
        %v573 = vmul.f32 %v461, %v557
        %v574 = vmul.f32 %v462, %v558
        %v575 = vlaneseq
        %v576 = vshrl.u32 %v575, 7
        %v577 = vsub.s32 0, %v576
        %v578 = vrot.slane %v397, %v577
        %v579 = vmul.f32 %v559, %v578
        %v580 = vmul.f32 %v560, %v578
        %v581 = vmul.f32 %v561, %v578
        %v582 = vmul.f32 %v562, %v578
        %v583 = vmul.f32 %v563, %v578
        %v584 = vmul.f32 %v564, %v578
        %v585 = vmul.f32 %v565, %v578
        %v586 = vmul.f32 %v566, %v578
        %v587 = vmul.f32 %v567, %v578
        %v588 = vmul.f32 %v568, %v578
        %v589 = vmul.f32 %v569, %v578
        %v590 = vmul.f32 %v570, %v578
        %v591 = vmul.f32 %v571, %v578
        %v592 = vmul.f32 %v572, %v578
        %v593 = vmul.f32 %v573, %v578
        %v594 = vmul.f32 %v574, %v578
        %v595 = vlaneseq
        %v596 = vshrl.u32 %v595, 7
        %v597 = vsub.s32 1, %v596
        %v598 = vrot.slane %v397, %v597
        %v599 = vadd.f32 %v579, %v598
        %v600 = vadd.f32 %v580, %v598
        %v601 = vadd.f32 %v581, %v598
        %v602 = vadd.f32 %v582, %v598
        %v603 = vadd.f32 %v583, %v598
        %v604 = vadd.f32 %v584, %v598
        %v605 = vadd.f32 %v585, %v598
        %v606 = vadd.f32 %v586, %v598
        %v607 = vadd.f32 %v587, %v598
        %v608 = vadd.f32 %v588, %v598
        %v609 = vadd.f32 %v589, %v598
        %v610 = vadd.f32 %v590, %v598
        %v611 = vadd.f32 %v591, %v598
        %v612 = vadd.f32 %v592, %v598
        %v613 = vadd.f32 %v593, %v598
        %v614 = vadd.f32 %v594, %v598
        %v615 = vpack.c.bf16 %v600, %v599
        %v616 = vpack.c.bf16 %v602, %v601
        %v617 = vpack.c.bf16 %v604, %v603
        %v618 = vpack.c.bf16 %v606, %v605
        %v619 = vpack.c.bf16 %v608, %v607
        %v620 = vpack.c.bf16 %v610, %v609
        %v621 = vpack.c.bf16 %v612, %v611
        %v622 = vpack.c.bf16 %v614, %v613
        %v623 = vld [vmem:[#allocation8] sm:$0xff]
        %v624 = vld [vmem:[#allocation8 + $0x8] sm:$0xf]
        %v625 = vld [vmem:[#allocation8 + $0xc] sm:$0xff]
        %v626 = vld [vmem:[#allocation8 + $0x14] sm:$0xf]
        %v627 = vld [vmem:[#allocation8 + $0x18] sm:$0xff]
        %v628 = vld [vmem:[#allocation8 + $0x20] sm:$0xf]
        %v629 = vld [vmem:[#allocation8 + $0x24] sm:$0xff]
        %v630 = vld [vmem:[#allocation8 + $0x2c] sm:$0xf]
        %v631 = vld [vmem:[#allocation8 + $0x30] sm:$0xff]
        %v632 = vld [vmem:[#allocation8 + $0x38] sm:$0xf]
        %v633 = vld [vmem:[#allocation8 + $0x3c] sm:$0xff]
        %v634 = vld [vmem:[#allocation8 + $0x44] sm:$0xf]
        %v635 = vld [vmem:[#allocation8 + $0x48] sm:$0xff]
        %v636 = vld [vmem:[#allocation8 + $0x50] sm:$0xf]
        %v637 = vld [vmem:[#allocation8 + $0x54] sm:$0xff]
        %v638 = vld [vmem:[#allocation8 + $0x5c] sm:$0xf]
        %v639 = vld [vmem:[#allocation8 + $0x60] sm:$0xff]
        %v640 = vld [vmem:[#allocation8 + $0x68] sm:$0xf]
        %v641 = vld [vmem:[#allocation8 + $0x6c] sm:$0xff]
        %v642 = vld [vmem:[#allocation8 + $0x74] sm:$0xf]
        %v643 = vld [vmem:[#allocation8 + $0x78] sm:$0xff]
        %v644 = vld [vmem:[#allocation8 + $0x80] sm:$0xf]
        %v645 = vld [vmem:[#allocation8 + $0x84] sm:$0xff]
        %v646 = vld [vmem:[#allocation8 + $0x8c] sm:$0xf]
        %v647 = vld [vmem:[#allocation8 + $0x90] sm:$0xff]
        %v648 = vld [vmem:[#allocation8 + $0x98] sm:$0xf]
        %v649 = vld [vmem:[#allocation8 + $0x9c] sm:$0xff]
        %v650 = vld [vmem:[#allocation8 + $0xa4] sm:$0xf]
        %v651 = vld [vmem:[#allocation8 + $0xa8] sm:$0xff]
        %v652 = vld [vmem:[#allocation8 + $0xb0] sm:$0xf]
        %v653 = vld [vmem:[#allocation8 + $0xb4] sm:$0xff]
        %v654 = vld [vmem:[#allocation8 + $0xbc] sm:$0xf]
        %v687 = vunpack.c.l.b16 %v623
        %v688 = vunpack.c.h.b16 %v623
        %v689 = vunpack.c.l.b16 %v624
        %v690 = vunpack.c.l.b16 %v625
        %v691 = vunpack.c.h.b16 %v625
        %v692 = vunpack.c.l.b16 %v626
        %v693 = vunpack.c.l.b16 %v627
        %v694 = vunpack.c.h.b16 %v627
        %v695 = vunpack.c.l.b16 %v628
        %v696 = vunpack.c.l.b16 %v629
        %v697 = vunpack.c.h.b16 %v629
        %v698 = vunpack.c.l.b16 %v630
        %v699 = vunpack.c.l.b16 %v631
        %v700 = vunpack.c.h.b16 %v631
        %v701 = vunpack.c.l.b16 %v632
        %v702 = vunpack.c.l.b16 %v633
        %v703 = vunpack.c.h.b16 %v633
        %v704 = vunpack.c.l.b16 %v634
        %v705 = vunpack.c.l.b16 %v635
        %v706 = vunpack.c.h.b16 %v635
        %v707 = vunpack.c.l.b16 %v636
        %v708 = vunpack.c.l.b16 %v637
        %v709 = vunpack.c.h.b16 %v637
        %v710 = vunpack.c.l.b16 %v638
        %v711 = vunpack.c.l.b16 %v639
        %v712 = vunpack.c.h.b16 %v639
        %v713 = vunpack.c.l.b16 %v640
        %v714 = vunpack.c.l.b16 %v641
        %v715 = vunpack.c.h.b16 %v641
        %v716 = vunpack.c.l.b16 %v642
        %v717 = vunpack.c.l.b16 %v643
        %v718 = vunpack.c.h.b16 %v643
        %v719 = vunpack.c.l.b16 %v644
        %v720 = vunpack.c.l.b16 %v645
        %v721 = vunpack.c.h.b16 %v645
        %v722 = vunpack.c.l.b16 %v646
        %v723 = vunpack.c.l.b16 %v647
        %v724 = vunpack.c.h.b16 %v647
        %v725 = vunpack.c.l.b16 %v648
        %v726 = vunpack.c.l.b16 %v649
        %v727 = vunpack.c.h.b16 %v649
        %v728 = vunpack.c.l.b16 %v650
        %v729 = vunpack.c.l.b16 %v651
        %v730 = vunpack.c.h.b16 %v651
        %v731 = vunpack.c.l.b16 %v652
        %v732 = vunpack.c.l.b16 %v653
        %v733 = vunpack.c.h.b16 %v653
        %v734 = vunpack.c.l.b16 %v654
        %v735 = vpack.c.b16 %v690, %v687
        %v736 = vpack.c.b16 %v691, %v688
        %v737 = vpack.c.b16 %v692, %v689
        %v738 = vpack.c.b16 %v696, %v693
        %v739 = vpack.c.b16 %v697, %v694
        %v740 = vpack.c.b16 %v698, %v695
        %v741 = vpack.c.b16 %v702, %v699
        %v742 = vpack.c.b16 %v703, %v700
        %v743 = vpack.c.b16 %v704, %v701
        %v744 = vpack.c.b16 %v708, %v705
        %v745 = vpack.c.b16 %v709, %v706
        %v746 = vpack.c.b16 %v710, %v707
        %v747 = vpack.c.b16 %v714, %v711
        %v748 = vpack.c.b16 %v715, %v712
        %v749 = vpack.c.b16 %v716, %v713
        %v750 = vpack.c.b16 %v720, %v717
        %v751 = vpack.c.b16 %v721, %v718
        %v752 = vpack.c.b16 %v722, %v719
        %v753 = vpack.c.b16 %v726, %v723
        %v754 = vpack.c.b16 %v727, %v724
        %v755 = vpack.c.b16 %v728, %v725
        %v756 = vpack.c.b16 %v732, %v729
        %v757 = vpack.c.b16 %v733, %v730
        %v758 = vpack.c.b16 %v734, %v731
        %783 = vmatprep.subr.bf16.mxu0 %v736
        %784 = vmatpush1.bf16.msra.mxu0 %v735
        %785 = vmatprep.subr.bf16.mxu0 %v739
        %786 = vmatpush1.bf16.msra.mxu0 %v738
        %787 = vmatprep.subr.bf16.mxu0 %v742
        %788 = vmatpush1.bf16.msra.mxu0 %v741
        %789 = vmatprep.subr.bf16.mxu0 %v745
        %790 = vmatpush1.bf16.msra.mxu0 %v744
        %791 = vmatprep.subr.bf16.mxu0 %v748
        %792 = vmatpush1.bf16.msra.mxu0 %v747
        %793 = vmatprep.subr.bf16.mxu0 %v751
        %794 = vmatpush1.bf16.msra.mxu0 %v750
        %795 = vmatprep.subr.bf16.mxu0 %v754
        %796 = vmatpush1.bf16.msra.mxu0 %v753
        %797 = vmatprep.subr.bf16.mxu0 %v757
        %798 = vmatpush1.bf16.msra.mxu0 %v756
        %799 = vmatprep.subr.bf16.mxu0 0
        %800 = vmatpush1.bf16.msra.mxu0 0
        %801 = vmatprep.subr.bf16.mxu0 0
        %802 = vmatpush1.bf16.msra.mxu0 0
        %803 = vmatprep.subr.bf16.mxu0 0
        %804 = vmatpush1.bf16.msra.mxu0 0
        %805 = vmatprep.subr.bf16.mxu0 0
        %806 = vmatpush1.bf16.msra.mxu0 0
        %807 = vmatprep.subr.bf16.mxu0 0
        %808 = vmatpush1.bf16.msra.mxu0 0
        %809 = vmatprep.subr.bf16.mxu0 0
        %810 = vmatpush1.bf16.msra.mxu0 0
        %811 = vmatprep.subr.bf16.mxu0 0
        %812 = vmatpush1.bf16.msra.mxu0 0
        %813 = vmatprep.subr.bf16.mxu0 0
        %814 = vmatpush1.bf16.msra.mxu0 0
        %815 = vmatprep.mubr.bf16.mxu0 0
        %816 = vmatmul.mubr.bf16.gmra.mrb[0].mxu0 %v615
        %v817 = vpop.f32.mrb[0].mxu0
        %v818 = vadd.f32 0.0, %v817
        %v819 = vpop.f32.mrb[0].mxu0
        %v820 = vadd.f32 0.0, %v819
        %v821 = vpop.f32.mrb[0].mxu0
        %v822 = vadd.f32 0.0, %v821
        %v823 = vpop.f32.mrb[0].mxu0
        %v824 = vadd.f32 0.0, %v823
        %825 = vmatprep.mubr.bf16.mxu0 0
        %826 = vmatmul.mubr.bf16.gmra.mrb[0].mxu0 %v616
        %v827 = vpop.f32.mrb[0].mxu0
        %v828 = vadd.f32 0.0, %v827
        %v829 = vpop.f32.mrb[0].mxu0
        %v830 = vadd.f32 0.0, %v829
        %v831 = vpop.f32.mrb[0].mxu0
        %v832 = vadd.f32 0.0, %v831
        %v833 = vpop.f32.mrb[0].mxu0
        %v834 = vadd.f32 0.0, %v833
        %835 = vmatprep.mubr.bf16.mxu0 0
        %836 = vmatmul.mubr.bf16.gmra.mrb[0].mxu0 %v617
        %v837 = vpop.f32.mrb[0].mxu0
        %v838 = vadd.f32 0.0, %v837
        %v839 = vpop.f32.mrb[0].mxu0
        %v840 = vadd.f32 0.0, %v839
        %v841 = vpop.f32.mrb[0].mxu0
        %v842 = vadd.f32 0.0, %v841
        %v843 = vpop.f32.mrb[0].mxu0
        %v844 = vadd.f32 0.0, %v843
        %845 = vmatprep.mubr.bf16.mxu0 0
        %846 = vmatmul.mubr.bf16.gmra.mrb[0].mxu0 %v618
        %v847 = vpop.f32.mrb[0].mxu0
        %v848 = vadd.f32 0.0, %v847
        %v849 = vpop.f32.mrb[0].mxu0
        %v850 = vadd.f32 0.0, %v849
        %v851 = vpop.f32.mrb[0].mxu0
        %v852 = vadd.f32 0.0, %v851
        %v853 = vpop.f32.mrb[0].mxu0
        %v854 = vadd.f32 0.0, %v853
        %855 = vmatprep.mubr.bf16.mxu0 0
        %856 = vmatmul.mubr.bf16.gmra.mrb[0].mxu0 %v619
        %v857 = vpop.f32.mrb[0].mxu0
        %v858 = vadd.f32 0.0, %v857
        %v859 = vpop.f32.mrb[0].mxu0
        %v860 = vadd.f32 0.0, %v859
        %v861 = vpop.f32.mrb[0].mxu0
        %v862 = vadd.f32 0.0, %v861
        %v863 = vpop.f32.mrb[0].mxu0
        %v864 = vadd.f32 0.0, %v863
        %865 = vmatprep.mubr.bf16.mxu0 0
        %866 = vmatmul.mubr.bf16.gmra.mrb[0].mxu0 %v620
        %v867 = vpop.f32.mrb[0].mxu0
        %v868 = vadd.f32 0.0, %v867
        %v869 = vpop.f32.mrb[0].mxu0
        %v870 = vadd.f32 0.0, %v869
        %v871 = vpop.f32.mrb[0].mxu0
        %v872 = vadd.f32 0.0, %v871
        %v873 = vpop.f32.mrb[0].mxu0
        %v874 = vadd.f32 0.0, %v873
        %875 = vmatprep.mubr.bf16.mxu0 0
        %876 = vmatmul.mubr.bf16.gmra.mrb[0].mxu0 %v621
        %v877 = vpop.f32.mrb[0].mxu0
        %v878 = vadd.f32 0.0, %v877
        %v879 = vpop.f32.mrb[0].mxu0
        %v880 = vadd.f32 0.0, %v879
        %v881 = vpop.f32.mrb[0].mxu0
        %v882 = vadd.f32 0.0, %v881
        %v883 = vpop.f32.mrb[0].mxu0
        %v884 = vadd.f32 0.0, %v883
        %885 = vmatprep.mubr.bf16.mxu0 0
        %886 = vmatmul.mubr.bf16.gmra.mrb[0].mxu0 %v622
        %v887 = vpop.f32.mrb[0].mxu0
        %v888 = vadd.f32 0.0, %v887
        %v889 = vpop.f32.mrb[0].mxu0
        %v890 = vadd.f32 0.0, %v889
        %v891 = vpop.f32.mrb[0].mxu0
        %v892 = vadd.f32 0.0, %v891
        %v893 = vpop.f32.mrb[0].mxu0
        %v894 = vadd.f32 0.0, %v893
        %895 = vdwg.mxu0
        %896 = vmatprep.subr.bf16.mxu0 0
        %897 = vmatpush1.bf16.msra.mxu0 %v737
        %898 = vmatprep.subr.bf16.mxu0 0
        %899 = vmatpush1.bf16.msra.mxu0 %v740
        %900 = vmatprep.subr.bf16.mxu0 0
        %901 = vmatpush1.bf16.msra.mxu0 %v743
        %902 = vmatprep.subr.bf16.mxu0 0
        %903 = vmatpush1.bf16.msra.mxu0 %v746
        %904 = vmatprep.subr.bf16.mxu0 0
        %905 = vmatpush1.bf16.msra.mxu0 %v749
        %906 = vmatprep.subr.bf16.mxu0 0
        %907 = vmatpush1.bf16.msra.mxu0 %v752
        %908 = vmatprep.subr.bf16.mxu0 0
        %909 = vmatpush1.bf16.msra.mxu0 %v755
        %910 = vmatprep.subr.bf16.mxu0 0
        %911 = vmatpush1.bf16.msra.mxu0 %v758
        %912 = vmatprep.subr.bf16.mxu0 0
        %913 = vmatpush1.bf16.msra.mxu0 0
        %914 = vmatprep.subr.bf16.mxu0 0
        %915 = vmatpush1.bf16.msra.mxu0 0
        %916 = vmatprep.subr.bf16.mxu0 0
        %917 = vmatpush1.bf16.msra.mxu0 0
        %918 = vmatprep.subr.bf16.mxu0 0
        %919 = vmatpush1.bf16.msra.mxu0 0
        %920 = vmatprep.subr.bf16.mxu0 0
        %921 = vmatpush1.bf16.msra.mxu0 0
        %922 = vmatprep.subr.bf16.mxu0 0
        %923 = vmatpush1.bf16.msra.mxu0 0
        %924 = vmatprep.subr.bf16.mxu0 0
        %925 = vmatpush1.bf16.msra.mxu0 0
        %926 = vmatprep.subr.bf16.mxu0 0
        %927 = vmatpush1.bf16.msra.mxu0 0
        %928 = vmatprep.mubr.bf16.mxu0 0
        %929 = vmatmul.mubr.bf16.gmra.mrb[0].mxu0 %v615
        %v930 = vpop.f32.mrb[0].mxu0
        %v931 = vadd.f32 0.0, %v930
        %v932 = vpop.f32.mrb[0].mxu0
        %v933 = vpop.f32.mrb[0].mxu0
        %v934 = vadd.f32 0.0, %v933
        %v935 = vpop.f32.mrb[0].mxu0
        %936 = vmatprep.mubr.bf16.mxu0 0
        %937 = vmatmul.mubr.bf16.gmra.mrb[0].mxu0 %v616
        %v938 = vpop.f32.mrb[0].mxu0
        %v939 = vadd.f32 0.0, %v938
        %v940 = vpop.f32.mrb[0].mxu0
        %v941 = vpop.f32.mrb[0].mxu0
        %v942 = vadd.f32 0.0, %v941
        %v943 = vpop.f32.mrb[0].mxu0
        %944 = vmatprep.mubr.bf16.mxu0 0
        %945 = vmatmul.mubr.bf16.gmra.mrb[0].mxu0 %v617
        %v946 = vpop.f32.mrb[0].mxu0
        %v947 = vadd.f32 0.0, %v946
        %v948 = vpop.f32.mrb[0].mxu0
        %v949 = vpop.f32.mrb[0].mxu0
        %v950 = vadd.f32 0.0, %v949
        %v951 = vpop.f32.mrb[0].mxu0
        %952 = vmatprep.mubr.bf16.mxu0 0
        %953 = vmatmul.mubr.bf16.gmra.mrb[0].mxu0 %v618
        %v954 = vpop.f32.mrb[0].mxu0
        %v955 = vadd.f32 0.0, %v954
        %v956 = vpop.f32.mrb[0].mxu0
        %v957 = vpop.f32.mrb[0].mxu0
        %v958 = vadd.f32 0.0, %v957
        %v959 = vpop.f32.mrb[0].mxu0
        %960 = vmatprep.mubr.bf16.mxu0 0
        %961 = vmatmul.mubr.bf16.gmra.mrb[0].mxu0 %v619
        %v962 = vpop.f32.mrb[0].mxu0
        %v963 = vadd.f32 0.0, %v962
        %v964 = vpop.f32.mrb[0].mxu0
        %v965 = vpop.f32.mrb[0].mxu0
        %v966 = vadd.f32 0.0, %v965
        %v967 = vpop.f32.mrb[0].mxu0
        %968 = vmatprep.mubr.bf16.mxu0 0
        %969 = vmatmul.mubr.bf16.gmra.mrb[0].mxu0 %v620
        %v970 = vpop.f32.mrb[0].mxu0
        %v971 = vadd.f32 0.0, %v970
        %v972 = vpop.f32.mrb[0].mxu0
        %v973 = vpop.f32.mrb[0].mxu0
        %v974 = vadd.f32 0.0, %v973
        %v975 = vpop.f32.mrb[0].mxu0
        %976 = vmatprep.mubr.bf16.mxu0 0
        %977 = vmatmul.mubr.bf16.gmra.mrb[0].mxu0 %v621
        %v978 = vpop.f32.mrb[0].mxu0
        %v979 = vadd.f32 0.0, %v978
        %v980 = vpop.f32.mrb[0].mxu0
        %v981 = vpop.f32.mrb[0].mxu0
        %v982 = vadd.f32 0.0, %v981
        %v983 = vpop.f32.mrb[0].mxu0
        %984 = vmatprep.mubr.bf16.mxu0 0
        %985 = vmatmul.mubr.bf16.gmra.mrb[0].mxu0 %v622
        %v986 = vpop.f32.mrb[0].mxu0
        %v987 = vadd.f32 0.0, %v986
        %v988 = vpop.f32.mrb[0].mxu0
        %v989 = vpop.f32.mrb[0].mxu0
        %v990 = vadd.f32 0.0, %v989
        %v991 = vpop.f32.mrb[0].mxu0
        %992 = vdwg.mxu0
        %v993 = vpack.c.bf16 %v822, %v818
        %v994 = vpack.c.bf16 %v832, %v828
        %v995 = vpack.c.bf16 %v842, %v838
        %v996 = vpack.c.bf16 %v852, %v848
        %v997 = vpack.c.bf16 %v862, %v858
        %v998 = vpack.c.bf16 %v872, %v868
        %v999 = vpack.c.bf16 %v882, %v878
        %v1000 = vpack.c.bf16 %v892, %v888
        %v1001 = vpack.c.bf16 %v824, %v820
        %v1002 = vpack.c.bf16 %v834, %v830
        %v1003 = vpack.c.bf16 %v844, %v840
        %v1004 = vpack.c.bf16 %v854, %v850
        %v1005 = vpack.c.bf16 %v864, %v860
        %v1006 = vpack.c.bf16 %v874, %v870
        %v1007 = vpack.c.bf16 %v884, %v880
        %v1008 = vpack.c.bf16 %v894, %v890
        %v1009 = vpack.c.bf16 %v934, %v931
        %v1010 = vpack.c.bf16 %v942, %v939
        %v1011 = vpack.c.bf16 %v950, %v947
        %v1012 = vpack.c.bf16 %v958, %v955
        %v1013 = vpack.c.bf16 %v966, %v963
        %v1014 = vpack.c.bf16 %v974, %v971
        %v1015 = vpack.c.bf16 %v982, %v979
        %v1016 = vpack.c.bf16 %v990, %v987
        %vm1017 = vcmask 261120
        %v1019 = vsel %vm1017, %v993, 0
        %v1022 = vsel %vm1017, %v994, 0
        %v1025 = vsel %vm1017, %v995, 0
        %v1028 = vsel %vm1017, %v996, 0
        %v1031 = vsel %vm1017, %v997, 0
        %v1034 = vsel %vm1017, %v998, 0
        %v1037 = vsel %vm1017, %v999, 0
        %v1040 = vsel %vm1017, %v1000, 0
        %v1043 = vsel %vm1017, %v1001, 0
        %v1046 = vsel %vm1017, %v1002, 0
        %v1049 = vsel %vm1017, %v1003, 0
        %v1052 = vsel %vm1017, %v1004, 0
        %v1055 = vsel %vm1017, %v1005, 0
        %v1058 = vsel %vm1017, %v1006, 0
        %v1061 = vsel %vm1017, %v1007, 0
        %v1064 = vsel %vm1017, %v1008, 0
        %1066 = vmatprep.subr.bf16.mxu0 0
        %1067 = vmatpush1.bf16.xpose.msra.mxu0 %v1043
        %1068 = vmatprep.subr.bf16.mxu0 0
        %1069 = vmatpush1.bf16.xpose.msra.mxu0 %v1046
        %1070 = vmatprep.subr.bf16.mxu0 0
        %1071 = vmatpush1.bf16.xpose.msra.mxu0 %v1049
        %1072 = vmatprep.subr.bf16.mxu0 0
        %1073 = vmatpush1.bf16.xpose.msra.mxu0 %v1052
        %1074 = vmatprep.subr.bf16.mxu0 0
        %1075 = vmatpush1.bf16.xpose.msra.mxu0 %v1055
        %1076 = vmatprep.subr.bf16.mxu0 0
        %1077 = vmatpush1.bf16.xpose.msra.mxu0 %v1058
        %1078 = vmatprep.subr.bf16.mxu0 0
        %1079 = vmatpush1.bf16.xpose.msra.mxu0 %v1061
        %1080 = vmatprep.subr.bf16.mxu0 0
        %1081 = vmatpush1.bf16.xpose.msra.mxu0 %v1064
        %1082 = vmatprep.subr.bf16.mxu0 0
        %1083 = vmatpush1.bf16.xpose.msra.mxu0 0
        %1084 = vmatprep.subr.bf16.mxu0 0
        %1085 = vmatpush1.bf16.xpose.msra.mxu0 0
        %1086 = vmatprep.subr.bf16.mxu0 0
        %1087 = vmatpush1.bf16.xpose.msra.mxu0 0
        %1088 = vmatprep.subr.bf16.mxu0 0
        %1089 = vmatpush1.bf16.xpose.msra.mxu0 0
        %1090 = vmatprep.subr.bf16.mxu0 0
        %1091 = vmatpush1.bf16.xpose.msra.mxu0 0
        %1092 = vmatprep.subr.bf16.mxu0 0
        %1093 = vmatpush1.bf16.xpose.msra.mxu0 0
        %1094 = vmatprep.subr.bf16.mxu0 0
        %1095 = vmatpush1.bf16.xpose.msra.mxu0 0
        %1096 = vmatprep.subr.bf16.mxu0 0
        %1097 = vmatpush1.bf16.xpose.msra.mxu0 0
        %1098 = vmatprep.mubr.bf16.mxu0 0
        %1099 = vmatmul.mubr.bf16.gmra.mrb[0].mxu0 %v1019
        %v1100 = vpop.f32.mrb[0].mxu0
        %v1101 = vadd.f32 0.0, %v1100
        %v1102 = vpop.f32.mrb[0].mxu0
        %v1103 = vpop.f32.mrb[0].mxu0
        %v1104 = vadd.f32 0.0, %v1103
        %v1105 = vpop.f32.mrb[0].mxu0
        %1106 = vmatprep.mubr.bf16.mxu0 0
        %1107 = vmatmul.mubr.bf16.gmra.mrb[0].mxu0 %v1022
        %v1108 = vpop.f32.mrb[0].mxu0
        %v1109 = vadd.f32 0.0, %v1108
        %v1110 = vpop.f32.mrb[0].mxu0
        %v1111 = vpop.f32.mrb[0].mxu0
        %v1112 = vadd.f32 0.0, %v1111
        %v1113 = vpop.f32.mrb[0].mxu0
        %1114 = vmatprep.mubr.bf16.mxu0 0
        %1115 = vmatmul.mubr.bf16.gmra.mrb[0].mxu0 %v1025
        %v1116 = vpop.f32.mrb[0].mxu0
        %v1117 = vadd.f32 0.0, %v1116
        %v1118 = vpop.f32.mrb[0].mxu0
        %v1119 = vpop.f32.mrb[0].mxu0
        %v1120 = vadd.f32 0.0, %v1119
        %v1121 = vpop.f32.mrb[0].mxu0
        %1122 = vmatprep.mubr.bf16.mxu0 0
        %1123 = vmatmul.mubr.bf16.gmra.mrb[0].mxu0 %v1028
        %v1124 = vpop.f32.mrb[0].mxu0
        %v1125 = vadd.f32 0.0, %v1124
        %v1126 = vpop.f32.mrb[0].mxu0
        %v1127 = vpop.f32.mrb[0].mxu0
        %v1128 = vadd.f32 0.0, %v1127
        %v1129 = vpop.f32.mrb[0].mxu0
        %1130 = vmatprep.mubr.bf16.mxu0 0
        %1131 = vmatmul.mubr.bf16.gmra.mrb[0].mxu0 %v1031
        %v1132 = vpop.f32.mrb[0].mxu0
        %v1133 = vadd.f32 0.0, %v1132
        %v1134 = vpop.f32.mrb[0].mxu0
        %v1135 = vpop.f32.mrb[0].mxu0
        %v1136 = vadd.f32 0.0, %v1135
        %v1137 = vpop.f32.mrb[0].mxu0
        %1138 = vmatprep.mubr.bf16.mxu0 0
        %1139 = vmatmul.mubr.bf16.gmra.mrb[0].mxu0 %v1034
        %v1140 = vpop.f32.mrb[0].mxu0
        %v1141 = vadd.f32 0.0, %v1140
        %v1142 = vpop.f32.mrb[0].mxu0
        %v1143 = vpop.f32.mrb[0].mxu0
        %v1144 = vadd.f32 0.0, %v1143
        %v1145 = vpop.f32.mrb[0].mxu0
        %1146 = vmatprep.mubr.bf16.mxu0 0
        %1147 = vmatmul.mubr.bf16.gmra.mrb[0].mxu0 %v1037
        %v1148 = vpop.f32.mrb[0].mxu0
        %v1149 = vadd.f32 0.0, %v1148
        %v1150 = vpop.f32.mrb[0].mxu0
        %v1151 = vpop.f32.mrb[0].mxu0
        %v1152 = vadd.f32 0.0, %v1151
        %v1153 = vpop.f32.mrb[0].mxu0
        %1154 = vmatprep.mubr.bf16.mxu0 0
        %1155 = vmatmul.mubr.bf16.gmra.mrb[0].mxu0 %v1040
        %v1156 = vpop.f32.mrb[0].mxu0
        %v1157 = vadd.f32 0.0, %v1156
        %v1158 = vpop.f32.mrb[0].mxu0
        %v1159 = vpop.f32.mrb[0].mxu0
        %v1160 = vadd.f32 0.0, %v1159
        %v1161 = vpop.f32.mrb[0].mxu0
        %1162 = vdwg.mxu0
        %1163 = vmax.xlane.f32.xlu0 %v1101
        %v1164 = vpop.xlane.xlu0 %1163
        %1165 = vmax.xlane.f32.xlu0 %v1104
        %v1166 = vpop.xlane.xlu0 %1165
        %1167 = vmax.xlane.f32.xlu0 %v1109
        %v1168 = vpop.xlane.xlu0 %1167
        %1169 = vmax.xlane.f32.xlu0 %v1112
        %v1170 = vpop.xlane.xlu0 %1169
        %1171 = vmax.xlane.f32.xlu0 %v1117
        %v1172 = vpop.xlane.xlu0 %1171
        %1173 = vmax.xlane.f32.xlu0 %v1120
        %v1174 = vpop.xlane.xlu0 %1173
        %1175 = vmax.xlane.f32.xlu0 %v1125
        %v1176 = vpop.xlane.xlu0 %1175
        %1177 = vmax.xlane.f32.xlu0 %v1128
        %v1178 = vpop.xlane.xlu0 %1177
        %1179 = vmax.xlane.f32.xlu0 %v1133
        %v1180 = vpop.xlane.xlu0 %1179
        %1181 = vmax.xlane.f32.xlu0 %v1136
        %v1182 = vpop.xlane.xlu0 %1181
        %1183 = vmax.xlane.f32.xlu0 %v1141
        %v1184 = vpop.xlane.xlu0 %1183
        %1185 = vmax.xlane.f32.xlu0 %v1144
        %v1186 = vpop.xlane.xlu0 %1185
        %1187 = vmax.xlane.f32.xlu0 %v1149
        %v1188 = vpop.xlane.xlu0 %1187
        %1189 = vmax.xlane.f32.xlu0 %v1152
        %v1190 = vpop.xlane.xlu0 %1189
        %1191 = vmax.xlane.f32.xlu0 %v1157
        %v1192 = vpop.xlane.xlu0 %1191
        %1193 = vmax.xlane.f32.xlu0 %v1160
        %v1194 = vpop.xlane.xlu0 %1193
        %v1195 = vsub.f32 %v1101, %v1164
        %v1196 = vsub.f32 %v1104, %v1166
        %v1197 = vsub.f32 %v1109, %v1168
        %v1198 = vsub.f32 %v1112, %v1170
        %v1199 = vsub.f32 %v1117, %v1172
        %v1200 = vsub.f32 %v1120, %v1174
        %v1201 = vsub.f32 %v1125, %v1176
        %v1202 = vsub.f32 %v1128, %v1178
        %v1203 = vsub.f32 %v1133, %v1180
        %v1204 = vsub.f32 %v1136, %v1182
        %v1205 = vsub.f32 %v1141, %v1184
        %v1206 = vsub.f32 %v1144, %v1186
        %v1207 = vsub.f32 %v1149, %v1188
        %v1208 = vsub.f32 %v1152, %v1190
        %v1209 = vsub.f32 %v1157, %v1192
        %v1210 = vsub.f32 %v1160, %v1194
        %v1211 = vmul.f32 %v1195, 1.442695
        %v1212 = vpow.pop %v1211
        %v1213 = vmul.f32 %v1196, 1.442695
        %v1214 = vpow.pop %v1213
        %v1215 = vmul.f32 %v1197, 1.442695
        %v1216 = vpow.pop %v1215
        %v1217 = vmul.f32 %v1198, 1.442695
        %v1218 = vpow.pop %v1217
        %v1219 = vmul.f32 %v1199, 1.442695
        %v1220 = vpow.pop %v1219
        %v1221 = vmul.f32 %v1200, 1.442695
        %v1222 = vpow.pop %v1221
        %v1223 = vmul.f32 %v1201, 1.442695
        %v1224 = vpow.pop %v1223
        %v1225 = vmul.f32 %v1202, 1.442695
        %v1226 = vpow.pop %v1225
        %v1227 = vmul.f32 %v1203, 1.442695
        %v1228 = vpow.pop %v1227
        %v1229 = vmul.f32 %v1204, 1.442695
        %v1230 = vpow.pop %v1229
        %v1231 = vmul.f32 %v1205, 1.442695
        %v1232 = vpow.pop %v1231
        %v1233 = vmul.f32 %v1206, 1.442695
        %v1234 = vpow.pop %v1233
        %v1235 = vmul.f32 %v1207, 1.442695
        %v1236 = vpow.pop %v1235
        %v1237 = vmul.f32 %v1208, 1.442695
        %v1238 = vpow.pop %v1237
        %v1239 = vmul.f32 %v1209, 1.442695
        %v1240 = vpow.pop %v1239
        %v1241 = vmul.f32 %v1210, 1.442695
        %v1242 = vpow.pop %v1241
        %1243 = vadd.xlane.f32.xlu0 %v1212
        %v1244 = vpop.xlane.xlu0 %1243
        %1245 = vadd.xlane.f32.xlu0 %v1214
        %v1246 = vpop.xlane.xlu0 %1245
        %1247 = vadd.xlane.f32.xlu0 %v1216
        %v1248 = vpop.xlane.xlu0 %1247
        %1249 = vadd.xlane.f32.xlu0 %v1218
        %v1250 = vpop.xlane.xlu0 %1249
        %1251 = vadd.xlane.f32.xlu0 %v1220
        %v1252 = vpop.xlane.xlu0 %1251
        %1253 = vadd.xlane.f32.xlu0 %v1222
        %v1254 = vpop.xlane.xlu0 %1253
        %1255 = vadd.xlane.f32.xlu0 %v1224
        %v1256 = vpop.xlane.xlu0 %1255
        %1257 = vadd.xlane.f32.xlu0 %v1226
        %v1258 = vpop.xlane.xlu0 %1257
        %1259 = vadd.xlane.f32.xlu0 %v1228
        %v1260 = vpop.xlane.xlu0 %1259
        %1261 = vadd.xlane.f32.xlu0 %v1230
        %v1262 = vpop.xlane.xlu0 %1261
        %1263 = vadd.xlane.f32.xlu0 %v1232
        %v1264 = vpop.xlane.xlu0 %1263
        %1265 = vadd.xlane.f32.xlu0 %v1234
        %v1266 = vpop.xlane.xlu0 %1265
        %1267 = vadd.xlane.f32.xlu0 %v1236
        %v1268 = vpop.xlane.xlu0 %1267
        %1269 = vadd.xlane.f32.xlu0 %v1238
        %v1270 = vpop.xlane.xlu0 %1269
        %1271 = vadd.xlane.f32.xlu0 %v1240
        %v1272 = vpop.xlane.xlu0 %1271
        %1273 = vadd.xlane.f32.xlu0 %v1242
        %v1274 = vpop.xlane.xlu0 %1273
        %v1275 = vpack.c.bf16 %v1214, %v1212
        %v1276 = vpack.c.bf16 %v1218, %v1216
        %v1277 = vpack.c.bf16 %v1222, %v1220
        %v1278 = vpack.c.bf16 %v1226, %v1224
        %v1279 = vpack.c.bf16 %v1230, %v1228
        %v1280 = vpack.c.bf16 %v1234, %v1232
        %v1281 = vpack.c.bf16 %v1238, %v1236
        %v1282 = vpack.c.bf16 %v1242, %v1240
        %1283 = vmatprep.subr.bf16.mxu0 0
        %1284 = vmatpush1.bf16.msra.mxu0 %v1009
        %1285 = vmatprep.subr.bf16.mxu0 0
        %1286 = vmatpush1.bf16.msra.mxu0 %v1010
        %1287 = vmatprep.subr.bf16.mxu0 0
        %1288 = vmatpush1.bf16.msra.mxu0 %v1011
        %1289 = vmatprep.subr.bf16.mxu0 0
        %1290 = vmatpush1.bf16.msra.mxu0 %v1012
        %1291 = vmatprep.subr.bf16.mxu0 0
        %1292 = vmatpush1.bf16.msra.mxu0 %v1013
        %1293 = vmatprep.subr.bf16.mxu0 0
        %1294 = vmatpush1.bf16.msra.mxu0 %v1014
        %1295 = vmatprep.subr.bf16.mxu0 0
        %1296 = vmatpush1.bf16.msra.mxu0 %v1015
        %1297 = vmatprep.subr.bf16.mxu0 0
        %1298 = vmatpush1.bf16.msra.mxu0 %v1016
        %1299 = vmatprep.subr.bf16.mxu0 0
        %1300 = vmatpush1.bf16.msra.mxu0 0
        %1301 = vmatprep.subr.bf16.mxu0 0
        %1302 = vmatpush1.bf16.msra.mxu0 0
        %1303 = vmatprep.subr.bf16.mxu0 0
        %1304 = vmatpush1.bf16.msra.mxu0 0
        %1305 = vmatprep.subr.bf16.mxu0 0
        %1306 = vmatpush1.bf16.msra.mxu0 0
        %1307 = vmatprep.subr.bf16.mxu0 0
        %1308 = vmatpush1.bf16.msra.mxu0 0
        %1309 = vmatprep.subr.bf16.mxu0 0
        %1310 = vmatpush1.bf16.msra.mxu0 0
        %1311 = vmatprep.subr.bf16.mxu0 0
        %1312 = vmatpush1.bf16.msra.mxu0 0
        %1313 = vmatprep.subr.bf16.mxu0 0
        %1314 = vmatpush1.bf16.msra.mxu0 0
        %1315 = vmatprep.mubr.bf16.mxu0 0
        %1316 = vmatmul.mubr.bf16.gmra.mrb[0].mxu0 %v1275
        %v1317 = vpop.f32.mrb[0].mxu0
        %v1318 = vadd.f32 0.0, %v1317
        %v1319 = vpop.f32.mrb[0].mxu0
        %v1320 = vpop.f32.mrb[0].mxu0
        %v1321 = vadd.f32 0.0, %v1320
        %v1322 = vpop.f32.mrb[0].mxu0
        %1323 = vmatprep.mubr.bf16.mxu0 0
        %1324 = vmatmul.mubr.bf16.gmra.mrb[0].mxu0 %v1276
        %v1325 = vpop.f32.mrb[0].mxu0
        %v1326 = vadd.f32 0.0, %v1325
        %v1327 = vpop.f32.mrb[0].mxu0
        %v1328 = vpop.f32.mrb[0].mxu0
        %v1329 = vadd.f32 0.0, %v1328
        %v1330 = vpop.f32.mrb[0].mxu0
        %1331 = vmatprep.mubr.bf16.mxu0 0
        %1332 = vmatmul.mubr.bf16.gmra.mrb[0].mxu0 %v1277
        %v1333 = vpop.f32.mrb[0].mxu0
        %v1334 = vadd.f32 0.0, %v1333
        %v1335 = vpop.f32.mrb[0].mxu0
        %v1336 = vpop.f32.mrb[0].mxu0
        %v1337 = vadd.f32 0.0, %v1336
        %v1338 = vpop.f32.mrb[0].mxu0
        %1339 = vmatprep.mubr.bf16.mxu0 0
        %1340 = vmatmul.mubr.bf16.gmra.mrb[0].mxu0 %v1278
        %v1341 = vpop.f32.mrb[0].mxu0
        %v1342 = vadd.f32 0.0, %v1341
        %v1343 = vpop.f32.mrb[0].mxu0
        %v1344 = vpop.f32.mrb[0].mxu0
        %v1345 = vadd.f32 0.0, %v1344
        %v1346 = vpop.f32.mrb[0].mxu0
        %1347 = vmatprep.mubr.bf16.mxu0 0
        %1348 = vmatmul.mubr.bf16.gmra.mrb[0].mxu0 %v1279
        %v1349 = vpop.f32.mrb[0].mxu0
        %v1350 = vadd.f32 0.0, %v1349
        %v1351 = vpop.f32.mrb[0].mxu0
        %v1352 = vpop.f32.mrb[0].mxu0
        %v1353 = vadd.f32 0.0, %v1352
        %v1354 = vpop.f32.mrb[0].mxu0
        %1355 = vmatprep.mubr.bf16.mxu0 0
        %1356 = vmatmul.mubr.bf16.gmra.mrb[0].mxu0 %v1280
        %v1357 = vpop.f32.mrb[0].mxu0
        %v1358 = vadd.f32 0.0, %v1357
        %v1359 = vpop.f32.mrb[0].mxu0
        %v1360 = vpop.f32.mrb[0].mxu0
        %v1361 = vadd.f32 0.0, %v1360
        %v1362 = vpop.f32.mrb[0].mxu0
        %1363 = vmatprep.mubr.bf16.mxu0 0
        %1364 = vmatmul.mubr.bf16.gmra.mrb[0].mxu0 %v1281
        %v1365 = vpop.f32.mrb[0].mxu0
        %v1366 = vadd.f32 0.0, %v1365
        %v1367 = vpop.f32.mrb[0].mxu0
        %v1368 = vpop.f32.mrb[0].mxu0
        %v1369 = vadd.f32 0.0, %v1368
        %v1370 = vpop.f32.mrb[0].mxu0
        %1371 = vmatprep.mubr.bf16.mxu0 0
        %1372 = vmatmul.mubr.bf16.gmra.mrb[0].mxu0 %v1282
        %v1373 = vpop.f32.mrb[0].mxu0
        %v1374 = vadd.f32 0.0, %v1373
        %v1375 = vpop.f32.mrb[0].mxu0
        %v1376 = vpop.f32.mrb[0].mxu0
        %v1377 = vadd.f32 0.0, %v1376
        %v1378 = vpop.f32.mrb[0].mxu0
        %1379 = vdwg.mxu0
        %v1380 = vrcp.pop %v1244
        %v1381 = vrcp.pop %v1246
        %v1382 = vrcp.pop %v1248
        %v1383 = vrcp.pop %v1250
        %v1384 = vrcp.pop %v1252
        %v1385 = vrcp.pop %v1254
        %v1386 = vrcp.pop %v1256
        %v1387 = vrcp.pop %v1258
        %v1388 = vrcp.pop %v1260
        %v1389 = vrcp.pop %v1262
        %v1390 = vrcp.pop %v1264
        %v1391 = vrcp.pop %v1266
        %v1392 = vrcp.pop %v1268
        %v1393 = vrcp.pop %v1270
        %v1394 = vrcp.pop %v1272
        %v1395 = vrcp.pop %v1274
        %v1396 = vmul.f32 %v1318, %v1380
        %v1397 = vmul.f32 %v1321, %v1381
        %v1398 = vmul.f32 %v1326, %v1382
        %v1399 = vmul.f32 %v1329, %v1383
        %v1400 = vmul.f32 %v1334, %v1384
        %v1401 = vmul.f32 %v1337, %v1385
        %v1402 = vmul.f32 %v1342, %v1386
        %v1403 = vmul.f32 %v1345, %v1387
        %v1404 = vmul.f32 %v1350, %v1388
        %v1405 = vmul.f32 %v1353, %v1389
        %v1406 = vmul.f32 %v1358, %v1390
        %v1407 = vmul.f32 %v1361, %v1391
        %v1408 = vmul.f32 %v1366, %v1392
        %v1409 = vmul.f32 %v1369, %v1393
        %v1410 = vmul.f32 %v1374, %v1394
        %v1411 = vmul.f32 %v1377, %v1395
        %v1412 = vpack.c.bf16 %v1397, %v1396
        %v1413 = vpack.c.bf16 %v1399, %v1398
        %v1414 = vpack.c.bf16 %v1401, %v1400
        %v1415 = vpack.c.bf16 %v1403, %v1402
        %v1416 = vpack.c.bf16 %v1405, %v1404
        %v1417 = vpack.c.bf16 %v1407, %v1406
        %v1418 = vpack.c.bf16 %v1409, %v1408
        %v1419 = vpack.c.bf16 %v1411, %v1410
        %v1420 = vld [vmem:[#allocation10] sm:$0xf]
        %v1421 = vld [vmem:[#allocation10 + $0x4] sm:$0xf]
        %v1422 = vld [vmem:[#allocation10 + $0x8] sm:$0xf]
        %v1423 = vld [vmem:[#allocation10 + $0xc] sm:$0xf]
        %1432 = vrot.lane.b32.xlu0 %v993, 96
        %v1433 = vpop.permute.xlu0 %1432
        %1434 = vrot.lane.b32.xlu0 %v994, 96
        %v1435 = vpop.permute.xlu0 %1434
        %1436 = vrot.lane.b32.xlu0 %v995, 96
        %v1437 = vpop.permute.xlu0 %1436
        %1438 = vrot.lane.b32.xlu0 %v996, 96
        %v1439 = vpop.permute.xlu0 %1438
        %1440 = vrot.lane.b32.xlu0 %v997, 96
        %v1441 = vpop.permute.xlu0 %1440
        %1442 = vrot.lane.b32.xlu0 %v998, 96
        %v1443 = vpop.permute.xlu0 %1442
        %1444 = vrot.lane.b32.xlu0 %v999, 96
        %v1445 = vpop.permute.xlu0 %1444
        %1446 = vrot.lane.b32.xlu0 %v1000, 96
        %v1447 = vpop.permute.xlu0 %1446
        %1456 = vrot.lane.b32.xlu0 %v1001, 96
        %v1457 = vpop.permute.xlu0 %1456
        %1458 = vrot.lane.b32.xlu0 %v1002, 96
        %v1459 = vpop.permute.xlu0 %1458
        %1460 = vrot.lane.b32.xlu0 %v1003, 96
        %v1461 = vpop.permute.xlu0 %1460
        %1462 = vrot.lane.b32.xlu0 %v1004, 96
        %v1463 = vpop.permute.xlu0 %1462
        %1464 = vrot.lane.b32.xlu0 %v1005, 96
        %v1465 = vpop.permute.xlu0 %1464
        %1466 = vrot.lane.b32.xlu0 %v1006, 96
        %v1467 = vpop.permute.xlu0 %1466
        %1468 = vrot.lane.b32.xlu0 %v1007, 96
        %v1469 = vpop.permute.xlu0 %1468
        %1470 = vrot.lane.b32.xlu0 %v1008, 96
        %v1471 = vpop.permute.xlu0 %1470
        %v1473 = vsel %vm1017, %v1433, 0
        %v1476 = vsel %vm1017, %v1435, 0
        %v1479 = vsel %vm1017, %v1437, 0
        %v1482 = vsel %vm1017, %v1439, 0
        %v1485 = vsel %vm1017, %v1441, 0
        %v1488 = vsel %vm1017, %v1443, 0
        %v1491 = vsel %vm1017, %v1445, 0
        %v1494 = vsel %vm1017, %v1447, 0
        %v1497 = vsel %vm1017, %v1457, 0
        %v1500 = vsel %vm1017, %v1459, 0
        %v1503 = vsel %vm1017, %v1461, 0
        %v1506 = vsel %vm1017, %v1463, 0
        %v1509 = vsel %vm1017, %v1465, 0
        %v1512 = vsel %vm1017, %v1467, 0
        %v1515 = vsel %vm1017, %v1469, 0
        %v1518 = vsel %vm1017, %v1471, 0
        %1520 = vmatprep.subr.bf16.mxu0 0
        %1521 = vmatpush1.bf16.xpose.msra.mxu0 %v1497
        %1522 = vmatprep.subr.bf16.mxu0 0
        %1523 = vmatpush1.bf16.xpose.msra.mxu0 %v1500
        %1524 = vmatprep.subr.bf16.mxu0 0
        %1525 = vmatpush1.bf16.xpose.msra.mxu0 %v1503
        %1526 = vmatprep.subr.bf16.mxu0 0
        %1527 = vmatpush1.bf16.xpose.msra.mxu0 %v1506
        %1528 = vmatprep.subr.bf16.mxu0 0
        %1529 = vmatpush1.bf16.xpose.msra.mxu0 %v1509
        %1530 = vmatprep.subr.bf16.mxu0 0
        %1531 = vmatpush1.bf16.xpose.msra.mxu0 %v1512
        %1532 = vmatprep.subr.bf16.mxu0 0
        %1533 = vmatpush1.bf16.xpose.msra.mxu0 %v1515
        %1534 = vmatprep.subr.bf16.mxu0 0
        %1535 = vmatpush1.bf16.xpose.msra.mxu0 %v1518
        %1536 = vmatprep.subr.bf16.mxu0 0
        %1537 = vmatpush1.bf16.xpose.msra.mxu0 0
        %1538 = vmatprep.subr.bf16.mxu0 0
        %1539 = vmatpush1.bf16.xpose.msra.mxu0 0
        %1540 = vmatprep.subr.bf16.mxu0 0
        %1541 = vmatpush1.bf16.xpose.msra.mxu0 0
        %1542 = vmatprep.subr.bf16.mxu0 0
        %1543 = vmatpush1.bf16.xpose.msra.mxu0 0
        %1544 = vmatprep.subr.bf16.mxu0 0
        %1545 = vmatpush1.bf16.xpose.msra.mxu0 0
        %1546 = vmatprep.subr.bf16.mxu0 0
        %1547 = vmatpush1.bf16.xpose.msra.mxu0 0
        %1548 = vmatprep.subr.bf16.mxu0 0
        %1549 = vmatpush1.bf16.xpose.msra.mxu0 0
        %1550 = vmatprep.subr.bf16.mxu0 0
        %1551 = vmatpush1.bf16.xpose.msra.mxu0 0
        %1552 = vmatprep.mubr.bf16.mxu0 0
        %1553 = vmatmul.mubr.bf16.gmra.mrb[0].mxu0 %v1473
        %v1554 = vpop.f32.mrb[0].mxu0
        %v1555 = vadd.f32 0.0, %v1554
        %v1556 = vpop.f32.mrb[0].mxu0
        %v1557 = vpop.f32.mrb[0].mxu0
        %v1558 = vadd.f32 0.0, %v1557
        %v1559 = vpop.f32.mrb[0].mxu0
        %1560 = vmatprep.mubr.bf16.mxu0 0
        %1561 = vmatmul.mubr.bf16.gmra.mrb[0].mxu0 %v1476
        %v1562 = vpop.f32.mrb[0].mxu0
        %v1563 = vadd.f32 0.0, %v1562
        %v1564 = vpop.f32.mrb[0].mxu0
        %v1565 = vpop.f32.mrb[0].mxu0
        %v1566 = vadd.f32 0.0, %v1565
        %v1567 = vpop.f32.mrb[0].mxu0
        %1568 = vmatprep.mubr.bf16.mxu0 0
        %1569 = vmatmul.mubr.bf16.gmra.mrb[0].mxu0 %v1479
        %v1570 = vpop.f32.mrb[0].mxu0
        %v1571 = vadd.f32 0.0, %v1570
        %v1572 = vpop.f32.mrb[0].mxu0
        %v1573 = vpop.f32.mrb[0].mxu0
        %v1574 = vadd.f32 0.0, %v1573
        %v1575 = vpop.f32.mrb[0].mxu0
        %1576 = vmatprep.mubr.bf16.mxu0 0
        %1577 = vmatmul.mubr.bf16.gmra.mrb[0].mxu0 %v1482
        %v1578 = vpop.f32.mrb[0].mxu0
        %v1579 = vadd.f32 0.0, %v1578
        %v1580 = vpop.f32.mrb[0].mxu0
        %v1581 = vpop.f32.mrb[0].mxu0
        %v1582 = vadd.f32 0.0, %v1581
        %v1583 = vpop.f32.mrb[0].mxu0
        %1584 = vmatprep.mubr.bf16.mxu0 0
        %1585 = vmatmul.mubr.bf16.gmra.mrb[0].mxu0 %v1485
        %v1586 = vpop.f32.mrb[0].mxu0
        %v1587 = vadd.f32 0.0, %v1586
        %v1588 = vpop.f32.mrb[0].mxu0
        %v1589 = vpop.f32.mrb[0].mxu0
        %v1590 = vadd.f32 0.0, %v1589
        %v1591 = vpop.f32.mrb[0].mxu0
        %1592 = vmatprep.mubr.bf16.mxu0 0
        %1593 = vmatmul.mubr.bf16.gmra.mrb[0].mxu0 %v1488
        %v1594 = vpop.f32.mrb[0].mxu0
        %v1595 = vadd.f32 0.0, %v1594
        %v1596 = vpop.f32.mrb[0].mxu0
        %v1597 = vpop.f32.mrb[0].mxu0
        %v1598 = vadd.f32 0.0, %v1597
        %v1599 = vpop.f32.mrb[0].mxu0
        %1600 = vmatprep.mubr.bf16.mxu0 0
        %1601 = vmatmul.mubr.bf16.gmra.mrb[0].mxu0 %v1491
        %v1602 = vpop.f32.mrb[0].mxu0
        %v1603 = vadd.f32 0.0, %v1602
        %v1604 = vpop.f32.mrb[0].mxu0
        %v1605 = vpop.f32.mrb[0].mxu0
        %v1606 = vadd.f32 0.0, %v1605
        %v1607 = vpop.f32.mrb[0].mxu0
        %1608 = vmatprep.mubr.bf16.mxu0 0
        %1609 = vmatmul.mubr.bf16.gmra.mrb[0].mxu0 %v1494
        %v1610 = vpop.f32.mrb[0].mxu0
        %v1611 = vadd.f32 0.0, %v1610
        %v1612 = vpop.f32.mrb[0].mxu0
        %v1613 = vpop.f32.mrb[0].mxu0
        %v1614 = vadd.f32 0.0, %v1613
        %v1615 = vpop.f32.mrb[0].mxu0
        %1616 = vdwg.mxu0
        %1617 = vmax.xlane.f32.xlu0 %v1555
        %v1618 = vpop.xlane.xlu0 %1617
        %1619 = vmax.xlane.f32.xlu0 %v1558
        %v1620 = vpop.xlane.xlu0 %1619
        %1621 = vmax.xlane.f32.xlu0 %v1563
        %v1622 = vpop.xlane.xlu0 %1621
        %1623 = vmax.xlane.f32.xlu0 %v1566
        %v1624 = vpop.xlane.xlu0 %1623
        %1625 = vmax.xlane.f32.xlu0 %v1571
        %v1626 = vpop.xlane.xlu0 %1625
        %1627 = vmax.xlane.f32.xlu0 %v1574
        %v1628 = vpop.xlane.xlu0 %1627
        %1629 = vmax.xlane.f32.xlu0 %v1579
        %v1630 = vpop.xlane.xlu0 %1629
        %1631 = vmax.xlane.f32.xlu0 %v1582
        %v1632 = vpop.xlane.xlu0 %1631
        %1633 = vmax.xlane.f32.xlu0 %v1587
        %v1634 = vpop.xlane.xlu0 %1633
        %1635 = vmax.xlane.f32.xlu0 %v1590
        %v1636 = vpop.xlane.xlu0 %1635
        %1637 = vmax.xlane.f32.xlu0 %v1595
        %v1638 = vpop.xlane.xlu0 %1637
        %1639 = vmax.xlane.f32.xlu0 %v1598
        %v1640 = vpop.xlane.xlu0 %1639
        %1641 = vmax.xlane.f32.xlu0 %v1603
        %v1642 = vpop.xlane.xlu0 %1641
        %1643 = vmax.xlane.f32.xlu0 %v1606
        %v1644 = vpop.xlane.xlu0 %1643
        %1645 = vmax.xlane.f32.xlu0 %v1611
        %v1646 = vpop.xlane.xlu0 %1645
        %1647 = vmax.xlane.f32.xlu0 %v1614
        %v1648 = vpop.xlane.xlu0 %1647
        %v1649 = vsub.f32 %v1555, %v1618
        %v1650 = vsub.f32 %v1558, %v1620
        %v1651 = vsub.f32 %v1563, %v1622
        %v1652 = vsub.f32 %v1566, %v1624
        %v1653 = vsub.f32 %v1571, %v1626
        %v1654 = vsub.f32 %v1574, %v1628
        %v1655 = vsub.f32 %v1579, %v1630
        %v1656 = vsub.f32 %v1582, %v1632
        %v1657 = vsub.f32 %v1587, %v1634
        %v1658 = vsub.f32 %v1590, %v1636
        %v1659 = vsub.f32 %v1595, %v1638
        %v1660 = vsub.f32 %v1598, %v1640
        %v1661 = vsub.f32 %v1603, %v1642
        %v1662 = vsub.f32 %v1606, %v1644
        %v1663 = vsub.f32 %v1611, %v1646
        %v1664 = vsub.f32 %v1614, %v1648
        %v1665 = vmul.f32 %v1649, 1.442695
        %v1666 = vpow.pop %v1665
        %v1667 = vmul.f32 %v1650, 1.442695
        %v1668 = vpow.pop %v1667
        %v1669 = vmul.f32 %v1651, 1.442695
        %v1670 = vpow.pop %v1669
        %v1671 = vmul.f32 %v1652, 1.442695
        %v1672 = vpow.pop %v1671
        %v1673 = vmul.f32 %v1653, 1.442695
        %v1674 = vpow.pop %v1673
        %v1675 = vmul.f32 %v1654, 1.442695
        %v1676 = vpow.pop %v1675
        %v1677 = vmul.f32 %v1655, 1.442695
        %v1678 = vpow.pop %v1677
        %v1679 = vmul.f32 %v1656, 1.442695
        %v1680 = vpow.pop %v1679
        %v1681 = vmul.f32 %v1657, 1.442695
        %v1682 = vpow.pop %v1681
        %v1683 = vmul.f32 %v1658, 1.442695
        %v1684 = vpow.pop %v1683
        %v1685 = vmul.f32 %v1659, 1.442695
        %v1686 = vpow.pop %v1685
        %v1687 = vmul.f32 %v1660, 1.442695
        %v1688 = vpow.pop %v1687
        %v1689 = vmul.f32 %v1661, 1.442695
        %v1690 = vpow.pop %v1689
        %v1691 = vmul.f32 %v1662, 1.442695
        %v1692 = vpow.pop %v1691
        %v1693 = vmul.f32 %v1663, 1.442695
        %v1694 = vpow.pop %v1693
        %v1695 = vmul.f32 %v1664, 1.442695
        %v1696 = vpow.pop %v1695
        %1697 = vadd.xlane.f32.xlu0 %v1666
        %v1698 = vpop.xlane.xlu0 %1697
        %1699 = vadd.xlane.f32.xlu0 %v1668
        %v1700 = vpop.xlane.xlu0 %1699
        %1701 = vadd.xlane.f32.xlu0 %v1670
        %v1702 = vpop.xlane.xlu0 %1701
        %1703 = vadd.xlane.f32.xlu0 %v1672
        %v1704 = vpop.xlane.xlu0 %1703
        %1705 = vadd.xlane.f32.xlu0 %v1674
        %v1706 = vpop.xlane.xlu0 %1705
        %1707 = vadd.xlane.f32.xlu0 %v1676
        %v1708 = vpop.xlane.xlu0 %1707
        %1709 = vadd.xlane.f32.xlu0 %v1678
        %v1710 = vpop.xlane.xlu0 %1709
        %1711 = vadd.xlane.f32.xlu0 %v1680
        %v1712 = vpop.xlane.xlu0 %1711
        %1713 = vadd.xlane.f32.xlu0 %v1682
        %v1714 = vpop.xlane.xlu0 %1713
        %1715 = vadd.xlane.f32.xlu0 %v1684
        %v1716 = vpop.xlane.xlu0 %1715
        %1717 = vadd.xlane.f32.xlu0 %v1686
        %v1718 = vpop.xlane.xlu0 %1717
        %1719 = vadd.xlane.f32.xlu0 %v1688
        %v1720 = vpop.xlane.xlu0 %1719
        %1721 = vadd.xlane.f32.xlu0 %v1690
        %v1722 = vpop.xlane.xlu0 %1721
        %1723 = vadd.xlane.f32.xlu0 %v1692
        %v1724 = vpop.xlane.xlu0 %1723
        %1725 = vadd.xlane.f32.xlu0 %v1694
        %v1726 = vpop.xlane.xlu0 %1725
        %1727 = vadd.xlane.f32.xlu0 %v1696
        %v1728 = vpop.xlane.xlu0 %1727
        %v1729 = vpack.c.bf16 %v1668, %v1666
        %v1730 = vpack.c.bf16 %v1672, %v1670
        %v1731 = vpack.c.bf16 %v1676, %v1674
        %v1732 = vpack.c.bf16 %v1680, %v1678
        %v1733 = vpack.c.bf16 %v1684, %v1682
        %v1734 = vpack.c.bf16 %v1688, %v1686
        %v1735 = vpack.c.bf16 %v1692, %v1690
        %v1736 = vpack.c.bf16 %v1696, %v1694
        %1745 = vrot.lane.b32.xlu0 %v1009, 96
        %v1746 = vpop.permute.xlu0 %1745
        %1747 = vrot.lane.b32.xlu0 %v1010, 96
        %v1748 = vpop.permute.xlu0 %1747
        %1749 = vrot.lane.b32.xlu0 %v1011, 96
        %v1750 = vpop.permute.xlu0 %1749
        %1751 = vrot.lane.b32.xlu0 %v1012, 96
        %v1752 = vpop.permute.xlu0 %1751
        %1753 = vrot.lane.b32.xlu0 %v1013, 96
        %v1754 = vpop.permute.xlu0 %1753
        %1755 = vrot.lane.b32.xlu0 %v1014, 96
        %v1756 = vpop.permute.xlu0 %1755
        %1757 = vrot.lane.b32.xlu0 %v1015, 96
        %v1758 = vpop.permute.xlu0 %1757
        %1759 = vrot.lane.b32.xlu0 %v1016, 96
        %v1760 = vpop.permute.xlu0 %1759
        %1769 = vmatprep.subr.bf16.mxu0 0
        %1770 = vmatpush1.bf16.msra.mxu0 %v1746
        %1771 = vmatprep.subr.bf16.mxu0 0
        %1772 = vmatpush1.bf16.msra.mxu0 %v1748
        %1773 = vmatprep.subr.bf16.mxu0 0
        %1774 = vmatpush1.bf16.msra.mxu0 %v1750
        %1775 = vmatprep.subr.bf16.mxu0 0
        %1776 = vmatpush1.bf16.msra.mxu0 %v1752
        %1777 = vmatprep.subr.bf16.mxu0 0
        %1778 = vmatpush1.bf16.msra.mxu0 %v1754
        %1779 = vmatprep.subr.bf16.mxu0 0
        %1780 = vmatpush1.bf16.msra.mxu0 %v1756
        %1781 = vmatprep.subr.bf16.mxu0 0
        %1782 = vmatpush1.bf16.msra.mxu0 %v1758
        %1783 = vmatprep.subr.bf16.mxu0 0
        %1784 = vmatpush1.bf16.msra.mxu0 %v1760
        %1785 = vmatprep.subr.bf16.mxu0 0
        %1786 = vmatpush1.bf16.msra.mxu0 0
        %1787 = vmatprep.subr.bf16.mxu0 0
        %1788 = vmatpush1.bf16.msra.mxu0 0
        %1789 = vmatprep.subr.bf16.mxu0 0
        %1790 = vmatpush1.bf16.msra.mxu0 0
        %1791 = vmatprep.subr.bf16.mxu0 0
        %1792 = vmatpush1.bf16.msra.mxu0 0
        %1793 = vmatprep.subr.bf16.mxu0 0
        %1794 = vmatpush1.bf16.msra.mxu0 0
        %1795 = vmatprep.subr.bf16.mxu0 0
        %1796 = vmatpush1.bf16.msra.mxu0 0
        %1797 = vmatprep.subr.bf16.mxu0 0
        %1798 = vmatpush1.bf16.msra.mxu0 0
        %1799 = vmatprep.subr.bf16.mxu0 0
        %1800 = vmatpush1.bf16.msra.mxu0 0
        %1801 = vmatprep.mubr.bf16.mxu0 0
        %1802 = vmatmul.mubr.bf16.gmra.mrb[0].mxu0 %v1729
        %v1803 = vpop.f32.mrb[0].mxu0
        %v1804 = vadd.f32 0.0, %v1803
        %v1805 = vpop.f32.mrb[0].mxu0
        %v1806 = vpop.f32.mrb[0].mxu0
        %v1807 = vadd.f32 0.0, %v1806
        %v1808 = vpop.f32.mrb[0].mxu0
        %1809 = vmatprep.mubr.bf16.mxu0 0
        %1810 = vmatmul.mubr.bf16.gmra.mrb[0].mxu0 %v1730
        %v1811 = vpop.f32.mrb[0].mxu0
        %v1812 = vadd.f32 0.0, %v1811
        %v1813 = vpop.f32.mrb[0].mxu0
        %v1814 = vpop.f32.mrb[0].mxu0
        %v1815 = vadd.f32 0.0, %v1814
        %v1816 = vpop.f32.mrb[0].mxu0
        %1817 = vmatprep.mubr.bf16.mxu0 0
        %1818 = vmatmul.mubr.bf16.gmra.mrb[0].mxu0 %v1731
        %v1819 = vpop.f32.mrb[0].mxu0
        %v1820 = vadd.f32 0.0, %v1819
        %v1821 = vpop.f32.mrb[0].mxu0
        %v1822 = vpop.f32.mrb[0].mxu0
        %v1823 = vadd.f32 0.0, %v1822
        %v1824 = vpop.f32.mrb[0].mxu0
        %1825 = vmatprep.mubr.bf16.mxu0 0
        %1826 = vmatmul.mubr.bf16.gmra.mrb[0].mxu0 %v1732
        %v1827 = vpop.f32.mrb[0].mxu0
        %v1828 = vadd.f32 0.0, %v1827
        %v1829 = vpop.f32.mrb[0].mxu0
        %v1830 = vpop.f32.mrb[0].mxu0
        %v1831 = vadd.f32 0.0, %v1830
        %v1832 = vpop.f32.mrb[0].mxu0
        %1833 = vmatprep.mubr.bf16.mxu0 0
        %1834 = vmatmul.mubr.bf16.gmra.mrb[0].mxu0 %v1733
        %v1835 = vpop.f32.mrb[0].mxu0
        %v1836 = vadd.f32 0.0, %v1835
        %v1837 = vpop.f32.mrb[0].mxu0
        %v1838 = vpop.f32.mrb[0].mxu0
        %v1839 = vadd.f32 0.0, %v1838
        %v1840 = vpop.f32.mrb[0].mxu0
        %1841 = vmatprep.mubr.bf16.mxu0 0
        %1842 = vmatmul.mubr.bf16.gmra.mrb[0].mxu0 %v1734
        %v1843 = vpop.f32.mrb[0].mxu0
        %v1844 = vadd.f32 0.0, %v1843
        %v1845 = vpop.f32.mrb[0].mxu0
        %v1846 = vpop.f32.mrb[0].mxu0
        %v1847 = vadd.f32 0.0, %v1846
        %v1848 = vpop.f32.mrb[0].mxu0
        %1849 = vmatprep.mubr.bf16.mxu0 0
        %1850 = vmatmul.mubr.bf16.gmra.mrb[0].mxu0 %v1735
        %v1851 = vpop.f32.mrb[0].mxu0
        %v1852 = vadd.f32 0.0, %v1851
        %v1853 = vpop.f32.mrb[0].mxu0
        %v1854 = vpop.f32.mrb[0].mxu0
        %v1855 = vadd.f32 0.0, %v1854
        %v1856 = vpop.f32.mrb[0].mxu0
        %1857 = vmatprep.mubr.bf16.mxu0 0
        %1858 = vmatmul.mubr.bf16.gmra.mrb[0].mxu0 %v1736
        %v1859 = vpop.f32.mrb[0].mxu0
        %v1860 = vadd.f32 0.0, %v1859
        %v1861 = vpop.f32.mrb[0].mxu0
        %v1862 = vpop.f32.mrb[0].mxu0
        %v1863 = vadd.f32 0.0, %v1862
        %v1864 = vpop.f32.mrb[0].mxu0
        %1865 = vdwg.mxu0
        %v1866 = vrcp.pop %v1698
        %v1867 = vrcp.pop %v1700
        %v1868 = vrcp.pop %v1702
        %v1869 = vrcp.pop %v1704
        %v1870 = vrcp.pop %v1706
        %v1871 = vrcp.pop %v1708
        %v1872 = vrcp.pop %v1710
        %v1873 = vrcp.pop %v1712
        %v1874 = vrcp.pop %v1714
        %v1875 = vrcp.pop %v1716
        %v1876 = vrcp.pop %v1718
        %v1877 = vrcp.pop %v1720
        %v1878 = vrcp.pop %v1722
        %v1879 = vrcp.pop %v1724
        %v1880 = vrcp.pop %v1726
        %v1881 = vrcp.pop %v1728
        %v1882 = vmul.f32 %v1804, %v1866
        %v1883 = vmul.f32 %v1807, %v1867
        %v1884 = vmul.f32 %v1812, %v1868
        %v1885 = vmul.f32 %v1815, %v1869
        %v1886 = vmul.f32 %v1820, %v1870
        %v1887 = vmul.f32 %v1823, %v1871
        %v1888 = vmul.f32 %v1828, %v1872
        %v1889 = vmul.f32 %v1831, %v1873
        %v1890 = vmul.f32 %v1836, %v1874
        %v1891 = vmul.f32 %v1839, %v1875
        %v1892 = vmul.f32 %v1844, %v1876
        %v1893 = vmul.f32 %v1847, %v1877
        %v1894 = vmul.f32 %v1852, %v1878
        %v1895 = vmul.f32 %v1855, %v1879
        %v1896 = vmul.f32 %v1860, %v1880
        %v1897 = vmul.f32 %v1863, %v1881
        %v1898 = vpack.c.bf16 %v1883, %v1882
        %v1899 = vpack.c.bf16 %v1885, %v1884
        %v1900 = vpack.c.bf16 %v1887, %v1886
        %v1901 = vpack.c.bf16 %v1889, %v1888
        %v1902 = vpack.c.bf16 %v1891, %v1890
        %v1903 = vpack.c.bf16 %v1893, %v1892
        %v1904 = vpack.c.bf16 %v1895, %v1894
        %v1905 = vpack.c.bf16 %v1897, %v1896
        %s1906 = scalar_lea.vmem [#allocation10], 16
        %v1907 = vld [vmem:[%s1906] sm:$0xf]
        %v1908 = vld [vmem:[%s1906 + $0x4] sm:$0xf]
        %v1909 = vld [vmem:[%s1906 + $0x8] sm:$0xf]
        %v1910 = vld [vmem:[%s1906 + $0xc] sm:$0xf]
        %v1915 = vunpack.c.l.b16 %v1907
        %v1916 = vunpack.c.l.b16 %v1908
        %v1917 = vunpack.c.l.b16 %v1909
        %v1918 = vunpack.c.l.b16 %v1910
        %v1919 = vpack.c.b16 %v1916, %v1915
        %v1920 = vpack.c.b16 %v1918, %v1917
        %v1924 = vsel %vm1017, %v1898, 0
        %v1927 = vsel %vm1017, %v1899, 0
        %v1930 = vsel %vm1017, %v1900, 0
        %v1933 = vsel %vm1017, %v1901, 0
        %v1936 = vsel %vm1017, %v1902, 0
        %v1939 = vsel %vm1017, %v1903, 0
        %v1942 = vsel %vm1017, %v1904, 0
        %v1945 = vsel %vm1017, %v1905, 0
        %1947 = vmatprep.subr.bf16.mxu0 0
        %1948 = vmatpush1.bf16.msra.mxu0 %v1919
        %1949 = vmatprep.subr.bf16.mxu0 0
        %1950 = vmatpush1.bf16.msra.mxu0 %v1920
        %1951 = vmatprep.subr.bf16.mxu0 0
        %1952 = vmatpush1.bf16.msra.mxu0 0
        %1953 = vmatprep.subr.bf16.mxu0 0
        %1954 = vmatpush1.bf16.msra.mxu0 0
        %1955 = vmatprep.subr.bf16.mxu0 0
        %1956 = vmatpush1.bf16.msra.mxu0 0
        %1957 = vmatprep.subr.bf16.mxu0 0
        %1958 = vmatpush1.bf16.msra.mxu0 0
        %1959 = vmatprep.subr.bf16.mxu0 0
        %1960 = vmatpush1.bf16.msra.mxu0 0
        %1961 = vmatprep.subr.bf16.mxu0 0
        %1962 = vmatpush1.bf16.msra.mxu0 0
        %1963 = vmatprep.subr.bf16.mxu0 0
        %1964 = vmatpush1.bf16.msra.mxu0 0
        %1965 = vmatprep.subr.bf16.mxu0 0
        %1966 = vmatpush1.bf16.msra.mxu0 0
        %1967 = vmatprep.subr.bf16.mxu0 0
        %1968 = vmatpush1.bf16.msra.mxu0 0
        %1969 = vmatprep.subr.bf16.mxu0 0
        %1970 = vmatpush1.bf16.msra.mxu0 0
        %1971 = vmatprep.subr.bf16.mxu0 0
        %1972 = vmatpush1.bf16.msra.mxu0 0
        %1973 = vmatprep.subr.bf16.mxu0 0
        %1974 = vmatpush1.bf16.msra.mxu0 0
        %1975 = vmatprep.subr.bf16.mxu0 0
        %1976 = vmatpush1.bf16.msra.mxu0 0
        %1977 = vmatprep.subr.bf16.mxu0 0
        %1978 = vmatpush1.bf16.msra.mxu0 0
        %1979 = vmatprep.mubr.bf16.mxu0 0
        %1980 = vmatmul.mubr.bf16.gmra.mrb[0].mxu0 %v1924
        %v1981 = vpop.f32.mrb[0].mxu0
        %v1982 = vadd.f32 0.0, %v1981
        %v1983 = vpop.f32.mrb[0].mxu0
        %v1984 = vpop.f32.mrb[0].mxu0
        %v1985 = vadd.f32 0.0, %v1984
        %v1986 = vpop.f32.mrb[0].mxu0
        %1987 = vmatprep.mubr.bf16.mxu0 0
        %1988 = vmatmul.mubr.bf16.gmra.mrb[0].mxu0 %v1927
        %v1989 = vpop.f32.mrb[0].mxu0
        %v1990 = vadd.f32 0.0, %v1989
        %v1991 = vpop.f32.mrb[0].mxu0
        %v1992 = vpop.f32.mrb[0].mxu0
        %v1993 = vadd.f32 0.0, %v1992
        %v1994 = vpop.f32.mrb[0].mxu0
        %1995 = vmatprep.mubr.bf16.mxu0 0
        %1996 = vmatmul.mubr.bf16.gmra.mrb[0].mxu0 %v1930
        %v1997 = vpop.f32.mrb[0].mxu0
        %v1998 = vadd.f32 0.0, %v1997
        %v1999 = vpop.f32.mrb[0].mxu0
        %v2000 = vpop.f32.mrb[0].mxu0
        %v2001 = vadd.f32 0.0, %v2000
        %v2002 = vpop.f32.mrb[0].mxu0
        %2003 = vmatprep.mubr.bf16.mxu0 0
        %2004 = vmatmul.mubr.bf16.gmra.mrb[0].mxu0 %v1933
        %v2005 = vpop.f32.mrb[0].mxu0
        %v2006 = vadd.f32 0.0, %v2005
        %v2007 = vpop.f32.mrb[0].mxu0
        %v2008 = vpop.f32.mrb[0].mxu0
        %v2009 = vadd.f32 0.0, %v2008
        %v2010 = vpop.f32.mrb[0].mxu0
        %2011 = vmatprep.mubr.bf16.mxu0 0
        %2012 = vmatmul.mubr.bf16.gmra.mrb[0].mxu0 %v1936
        %v2013 = vpop.f32.mrb[0].mxu0
        %v2014 = vadd.f32 0.0, %v2013
        %v2015 = vpop.f32.mrb[0].mxu0
        %v2016 = vpop.f32.mrb[0].mxu0
        %v2017 = vadd.f32 0.0, %v2016
        %v2018 = vpop.f32.mrb[0].mxu0
        %2019 = vmatprep.mubr.bf16.mxu0 0
        %2020 = vmatmul.mubr.bf16.gmra.mrb[0].mxu0 %v1939
        %v2021 = vpop.f32.mrb[0].mxu0
        %v2022 = vadd.f32 0.0, %v2021
        %v2023 = vpop.f32.mrb[0].mxu0
        %v2024 = vpop.f32.mrb[0].mxu0
        %v2025 = vadd.f32 0.0, %v2024
        %v2026 = vpop.f32.mrb[0].mxu0
        %2027 = vmatprep.mubr.bf16.mxu0 0
        %2028 = vmatmul.mubr.bf16.gmra.mrb[0].mxu0 %v1942
        %v2029 = vpop.f32.mrb[0].mxu0
        %v2030 = vadd.f32 0.0, %v2029
        %v2031 = vpop.f32.mrb[0].mxu0
        %v2032 = vpop.f32.mrb[0].mxu0
        %v2033 = vadd.f32 0.0, %v2032
        %v2034 = vpop.f32.mrb[0].mxu0
        %2035 = vmatprep.mubr.bf16.mxu0 0
        %2036 = vmatmul.mubr.bf16.gmra.mrb[0].mxu0 %v1945
        %v2037 = vpop.f32.mrb[0].mxu0
        %v2038 = vadd.f32 0.0, %v2037
        %v2039 = vpop.f32.mrb[0].mxu0
        %v2040 = vpop.f32.mrb[0].mxu0
        %v2041 = vadd.f32 0.0, %v2040
        %v2042 = vpop.f32.mrb[0].mxu0
        %2043 = vdwg.mxu0
        %v2048 = vunpack.c.l.b16 %v1420
        %v2049 = vunpack.c.l.b16 %v1421
        %v2050 = vunpack.c.l.b16 %v1422
        %v2051 = vunpack.c.l.b16 %v1423
        %v2052 = vpack.c.b16 %v2049, %v2048
        %v2053 = vpack.c.b16 %v2051, %v2050
        %v2057 = vsel %vm1017, %v1412, 0
        %v2060 = vsel %vm1017, %v1413, 0
        %v2063 = vsel %vm1017, %v1414, 0
        %v2066 = vsel %vm1017, %v1415, 0
        %v2069 = vsel %vm1017, %v1416, 0
        %v2072 = vsel %vm1017, %v1417, 0
        %v2075 = vsel %vm1017, %v1418, 0
        %v2078 = vsel %vm1017, %v1419, 0
        %2080 = vmatprep.subr.bf16.mxu0 0
        %2081 = vmatpush1.bf16.msra.mxu0 %v2052
        %2082 = vmatprep.subr.bf16.mxu0 0
        %2083 = vmatpush1.bf16.msra.mxu0 %v2053
        %2084 = vmatprep.subr.bf16.mxu0 0
        %2085 = vmatpush1.bf16.msra.mxu0 0
        %2086 = vmatprep.subr.bf16.mxu0 0
        %2087 = vmatpush1.bf16.msra.mxu0 0
        %2088 = vmatprep.subr.bf16.mxu0 0
        %2089 = vmatpush1.bf16.msra.mxu0 0
        %2090 = vmatprep.subr.bf16.mxu0 0
        %2091 = vmatpush1.bf16.msra.mxu0 0
        %2092 = vmatprep.subr.bf16.mxu0 0
        %2093 = vmatpush1.bf16.msra.mxu0 0
        %2094 = vmatprep.subr.bf16.mxu0 0
        %2095 = vmatpush1.bf16.msra.mxu0 0
        %2096 = vmatprep.subr.bf16.mxu0 0
        %2097 = vmatpush1.bf16.msra.mxu0 0
        %2098 = vmatprep.subr.bf16.mxu0 0
        %2099 = vmatpush1.bf16.msra.mxu0 0
        %2100 = vmatprep.subr.bf16.mxu0 0
        %2101 = vmatpush1.bf16.msra.mxu0 0
        %2102 = vmatprep.subr.bf16.mxu0 0
        %2103 = vmatpush1.bf16.msra.mxu0 0
        %2104 = vmatprep.subr.bf16.mxu0 0
        %2105 = vmatpush1.bf16.msra.mxu0 0
        %2106 = vmatprep.subr.bf16.mxu0 0
        %2107 = vmatpush1.bf16.msra.mxu0 0
        %2108 = vmatprep.subr.bf16.mxu0 0
        %2109 = vmatpush1.bf16.msra.mxu0 0
        %2110 = vmatprep.subr.bf16.mxu0 0
        %2111 = vmatpush1.bf16.msra.mxu0 0
        %2112 = vmatprep.mubr.bf16.mxu0 0
        %2113 = vmatmul.mubr.bf16.gmra.mrb[0].mxu0 %v2057
        %v2114 = vpop.f32.mrb[0].mxu0
        %v2115 = vadd.f32 %v1982, %v2114
        %v2116 = vpop.f32.mrb[0].mxu0
        %v2117 = vpop.f32.mrb[0].mxu0
        %v2118 = vadd.f32 %v1985, %v2117
        %v2119 = vpop.f32.mrb[0].mxu0
        %2120 = vmatprep.mubr.bf16.mxu0 0
        %2121 = vmatmul.mubr.bf16.gmra.mrb[0].mxu0 %v2060
        %v2122 = vpop.f32.mrb[0].mxu0
        %v2123 = vadd.f32 %v1990, %v2122
        %v2124 = vpop.f32.mrb[0].mxu0
        %v2125 = vpop.f32.mrb[0].mxu0
        %v2126 = vadd.f32 %v1993, %v2125
        %v2127 = vpop.f32.mrb[0].mxu0
        %2128 = vmatprep.mubr.bf16.mxu0 0
        %2129 = vmatmul.mubr.bf16.gmra.mrb[0].mxu0 %v2063
        %v2130 = vpop.f32.mrb[0].mxu0
        %v2131 = vadd.f32 %v1998, %v2130
        %v2132 = vpop.f32.mrb[0].mxu0
        %v2133 = vpop.f32.mrb[0].mxu0
        %v2134 = vadd.f32 %v2001, %v2133
        %v2135 = vpop.f32.mrb[0].mxu0
        %2136 = vmatprep.mubr.bf16.mxu0 0
        %2137 = vmatmul.mubr.bf16.gmra.mrb[0].mxu0 %v2066
        %v2138 = vpop.f32.mrb[0].mxu0
        %v2139 = vadd.f32 %v2006, %v2138
        %v2140 = vpop.f32.mrb[0].mxu0
        %v2141 = vpop.f32.mrb[0].mxu0
        %v2142 = vadd.f32 %v2009, %v2141
        %v2143 = vpop.f32.mrb[0].mxu0
        %2144 = vmatprep.mubr.bf16.mxu0 0
        %2145 = vmatmul.mubr.bf16.gmra.mrb[0].mxu0 %v2069
        %v2146 = vpop.f32.mrb[0].mxu0
        %v2147 = vadd.f32 %v2014, %v2146
        %v2148 = vpop.f32.mrb[0].mxu0
        %v2149 = vpop.f32.mrb[0].mxu0
        %v2150 = vadd.f32 %v2017, %v2149
        %v2151 = vpop.f32.mrb[0].mxu0
        %2152 = vmatprep.mubr.bf16.mxu0 0
        %2153 = vmatmul.mubr.bf16.gmra.mrb[0].mxu0 %v2072
        %v2154 = vpop.f32.mrb[0].mxu0
        %v2155 = vadd.f32 %v2022, %v2154
        %v2156 = vpop.f32.mrb[0].mxu0
        %v2157 = vpop.f32.mrb[0].mxu0
        %v2158 = vadd.f32 %v2025, %v2157
        %v2159 = vpop.f32.mrb[0].mxu0
        %2160 = vmatprep.mubr.bf16.mxu0 0
        %2161 = vmatmul.mubr.bf16.gmra.mrb[0].mxu0 %v2075
        %v2162 = vpop.f32.mrb[0].mxu0
        %v2163 = vadd.f32 %v2030, %v2162
        %v2164 = vpop.f32.mrb[0].mxu0
        %v2165 = vpop.f32.mrb[0].mxu0
        %v2166 = vadd.f32 %v2033, %v2165
        %v2167 = vpop.f32.mrb[0].mxu0
        %2168 = vmatprep.mubr.bf16.mxu0 0
        %2169 = vmatmul.mubr.bf16.gmra.mrb[0].mxu0 %v2078
        %v2170 = vpop.f32.mrb[0].mxu0
        %v2171 = vadd.f32 %v2038, %v2170
        %v2172 = vpop.f32.mrb[0].mxu0
        %v2173 = vpop.f32.mrb[0].mxu0
        %v2174 = vadd.f32 %v2041, %v2173
        %v2175 = vpop.f32.mrb[0].mxu0
        %2176 = vdwg.mxu0
        %2177 = vrot.lane.b32.xlu0 %v993, 64
        %v2178 = vpop.permute.xlu0 %2177
        %2179 = vrot.lane.b32.xlu0 %v994, 64
        %v2180 = vpop.permute.xlu0 %2179
        %2181 = vrot.lane.b32.xlu0 %v995, 64
        %v2182 = vpop.permute.xlu0 %2181
        %2183 = vrot.lane.b32.xlu0 %v996, 64
        %v2184 = vpop.permute.xlu0 %2183
        %2185 = vrot.lane.b32.xlu0 %v997, 64
        %v2186 = vpop.permute.xlu0 %2185
        %2187 = vrot.lane.b32.xlu0 %v998, 64
        %v2188 = vpop.permute.xlu0 %2187
        %2189 = vrot.lane.b32.xlu0 %v999, 64
        %v2190 = vpop.permute.xlu0 %2189
        %2191 = vrot.lane.b32.xlu0 %v1000, 64
        %v2192 = vpop.permute.xlu0 %2191
        %2193 = vrot.lane.b32.xlu0 %v1001, 64
        %v2194 = vpop.permute.xlu0 %2193
        %2195 = vrot.lane.b32.xlu0 %v1002, 64
        %v2196 = vpop.permute.xlu0 %2195
        %2197 = vrot.lane.b32.xlu0 %v1003, 64
        %v2198 = vpop.permute.xlu0 %2197
        %2199 = vrot.lane.b32.xlu0 %v1004, 64
        %v2200 = vpop.permute.xlu0 %2199
        %2201 = vrot.lane.b32.xlu0 %v1005, 64
        %v2202 = vpop.permute.xlu0 %2201
        %2203 = vrot.lane.b32.xlu0 %v1006, 64
        %v2204 = vpop.permute.xlu0 %2203
        %2205 = vrot.lane.b32.xlu0 %v1007, 64
        %v2206 = vpop.permute.xlu0 %2205
        %2207 = vrot.lane.b32.xlu0 %v1008, 64
        %v2208 = vpop.permute.xlu0 %2207
        %v2210 = vsel %vm1017, %v2178, 0
        %v2213 = vsel %vm1017, %v2180, 0
        %v2216 = vsel %vm1017, %v2182, 0
        %v2219 = vsel %vm1017, %v2184, 0
        %v2222 = vsel %vm1017, %v2186, 0
        %v2225 = vsel %vm1017, %v2188, 0
        %v2228 = vsel %vm1017, %v2190, 0
        %v2231 = vsel %vm1017, %v2192, 0
        %v2234 = vsel %vm1017, %v2194, 0
        %v2237 = vsel %vm1017, %v2196, 0
        %v2240 = vsel %vm1017, %v2198, 0
        %v2243 = vsel %vm1017, %v2200, 0
        %v2246 = vsel %vm1017, %v2202, 0
        %v2249 = vsel %vm1017, %v2204, 0
        %v2252 = vsel %vm1017, %v2206, 0
        %v2255 = vsel %vm1017, %v2208, 0
        %2257 = vmatprep.subr.bf16.mxu0 0
        %2258 = vmatpush1.bf16.xpose.msra.mxu0 %v2234
        %2259 = vmatprep.subr.bf16.mxu0 0
        %2260 = vmatpush1.bf16.xpose.msra.mxu0 %v2237
        %2261 = vmatprep.subr.bf16.mxu0 0
        %2262 = vmatpush1.bf16.xpose.msra.mxu0 %v2240
        %2263 = vmatprep.subr.bf16.mxu0 0
        %2264 = vmatpush1.bf16.xpose.msra.mxu0 %v2243
        %2265 = vmatprep.subr.bf16.mxu0 0
        %2266 = vmatpush1.bf16.xpose.msra.mxu0 %v2246
        %2267 = vmatprep.subr.bf16.mxu0 0
        %2268 = vmatpush1.bf16.xpose.msra.mxu0 %v2249
        %2269 = vmatprep.subr.bf16.mxu0 0
        %2270 = vmatpush1.bf16.xpose.msra.mxu0 %v2252
        %2271 = vmatprep.subr.bf16.mxu0 0
        %2272 = vmatpush1.bf16.xpose.msra.mxu0 %v2255
        %2273 = vmatprep.subr.bf16.mxu0 0
        %2274 = vmatpush1.bf16.xpose.msra.mxu0 0
        %2275 = vmatprep.subr.bf16.mxu0 0
        %2276 = vmatpush1.bf16.xpose.msra.mxu0 0
        %2277 = vmatprep.subr.bf16.mxu0 0
        %2278 = vmatpush1.bf16.xpose.msra.mxu0 0
        %2279 = vmatprep.subr.bf16.mxu0 0
        %2280 = vmatpush1.bf16.xpose.msra.mxu0 0
        %2281 = vmatprep.subr.bf16.mxu0 0
        %2282 = vmatpush1.bf16.xpose.msra.mxu0 0
        %2283 = vmatprep.subr.bf16.mxu0 0
        %2284 = vmatpush1.bf16.xpose.msra.mxu0 0
        %2285 = vmatprep.subr.bf16.mxu0 0
        %2286 = vmatpush1.bf16.xpose.msra.mxu0 0
        %2287 = vmatprep.subr.bf16.mxu0 0
        %2288 = vmatpush1.bf16.xpose.msra.mxu0 0
        %2289 = vmatprep.mubr.bf16.mxu0 0
        %2290 = vmatmul.mubr.bf16.gmra.mrb[0].mxu0 %v2210
        %v2291 = vpop.f32.mrb[0].mxu0
        %v2292 = vadd.f32 0.0, %v2291
        %v2293 = vpop.f32.mrb[0].mxu0
        %v2294 = vpop.f32.mrb[0].mxu0
        %v2295 = vadd.f32 0.0, %v2294
        %v2296 = vpop.f32.mrb[0].mxu0
        %2297 = vmatprep.mubr.bf16.mxu0 0
        %2298 = vmatmul.mubr.bf16.gmra.mrb[0].mxu0 %v2213
        %v2299 = vpop.f32.mrb[0].mxu0
        %v2300 = vadd.f32 0.0, %v2299
        %v2301 = vpop.f32.mrb[0].mxu0
        %v2302 = vpop.f32.mrb[0].mxu0
        %v2303 = vadd.f32 0.0, %v2302
        %v2304 = vpop.f32.mrb[0].mxu0
        %2305 = vmatprep.mubr.bf16.mxu0 0
        %2306 = vmatmul.mubr.bf16.gmra.mrb[0].mxu0 %v2216
        %v2307 = vpop.f32.mrb[0].mxu0
        %v2308 = vadd.f32 0.0, %v2307
        %v2309 = vpop.f32.mrb[0].mxu0
        %v2310 = vpop.f32.mrb[0].mxu0
        %v2311 = vadd.f32 0.0, %v2310
        %v2312 = vpop.f32.mrb[0].mxu0
        %2313 = vmatprep.mubr.bf16.mxu0 0
        %2314 = vmatmul.mubr.bf16.gmra.mrb[0].mxu0 %v2219
        %v2315 = vpop.f32.mrb[0].mxu0
        %v2316 = vadd.f32 0.0, %v2315
        %v2317 = vpop.f32.mrb[0].mxu0
        %v2318 = vpop.f32.mrb[0].mxu0
        %v2319 = vadd.f32 0.0, %v2318
        %v2320 = vpop.f32.mrb[0].mxu0
        %2321 = vmatprep.mubr.bf16.mxu0 0
        %2322 = vmatmul.mubr.bf16.gmra.mrb[0].mxu0 %v2222
        %v2323 = vpop.f32.mrb[0].mxu0
        %v2324 = vadd.f32 0.0, %v2323
        %v2325 = vpop.f32.mrb[0].mxu0
        %v2326 = vpop.f32.mrb[0].mxu0
        %v2327 = vadd.f32 0.0, %v2326
        %v2328 = vpop.f32.mrb[0].mxu0
        %2329 = vmatprep.mubr.bf16.mxu0 0
        %2330 = vmatmul.mubr.bf16.gmra.mrb[0].mxu0 %v2225
        %v2331 = vpop.f32.mrb[0].mxu0
        %v2332 = vadd.f32 0.0, %v2331
        %v2333 = vpop.f32.mrb[0].mxu0
        %v2334 = vpop.f32.mrb[0].mxu0
        %v2335 = vadd.f32 0.0, %v2334
        %v2336 = vpop.f32.mrb[0].mxu0
        %2337 = vmatprep.mubr.bf16.mxu0 0
        %2338 = vmatmul.mubr.bf16.gmra.mrb[0].mxu0 %v2228
        %v2339 = vpop.f32.mrb[0].mxu0
        %v2340 = vadd.f32 0.0, %v2339
        %v2341 = vpop.f32.mrb[0].mxu0
        %v2342 = vpop.f32.mrb[0].mxu0
        %v2343 = vadd.f32 0.0, %v2342
        %v2344 = vpop.f32.mrb[0].mxu0
        %2345 = vmatprep.mubr.bf16.mxu0 0
        %2346 = vmatmul.mubr.bf16.gmra.mrb[0].mxu0 %v2231
        %v2347 = vpop.f32.mrb[0].mxu0
        %v2348 = vadd.f32 0.0, %v2347
        %v2349 = vpop.f32.mrb[0].mxu0
        %v2350 = vpop.f32.mrb[0].mxu0
        %v2351 = vadd.f32 0.0, %v2350
        %v2352 = vpop.f32.mrb[0].mxu0
        %2353 = vdwg.mxu0
        %2354 = vmax.xlane.f32.xlu0 %v2292
        %v2355 = vpop.xlane.xlu0 %2354
        %2356 = vmax.xlane.f32.xlu0 %v2295
        %v2357 = vpop.xlane.xlu0 %2356
        %2358 = vmax.xlane.f32.xlu0 %v2300
        %v2359 = vpop.xlane.xlu0 %2358
        %2360 = vmax.xlane.f32.xlu0 %v2303
        %v2361 = vpop.xlane.xlu0 %2360
        %2362 = vmax.xlane.f32.xlu0 %v2308
        %v2363 = vpop.xlane.xlu0 %2362
        %2364 = vmax.xlane.f32.xlu0 %v2311
        %v2365 = vpop.xlane.xlu0 %2364
        %2366 = vmax.xlane.f32.xlu0 %v2316
        %v2367 = vpop.xlane.xlu0 %2366
        %2368 = vmax.xlane.f32.xlu0 %v2319
        %v2369 = vpop.xlane.xlu0 %2368
        %2370 = vmax.xlane.f32.xlu0 %v2324
        %v2371 = vpop.xlane.xlu0 %2370
        %2372 = vmax.xlane.f32.xlu0 %v2327
        %v2373 = vpop.xlane.xlu0 %2372
        %2374 = vmax.xlane.f32.xlu0 %v2332
        %v2375 = vpop.xlane.xlu0 %2374
        %2376 = vmax.xlane.f32.xlu0 %v2335
        %v2377 = vpop.xlane.xlu0 %2376
        %2378 = vmax.xlane.f32.xlu0 %v2340
        %v2379 = vpop.xlane.xlu0 %2378
        %2380 = vmax.xlane.f32.xlu0 %v2343
        %v2381 = vpop.xlane.xlu0 %2380
        %2382 = vmax.xlane.f32.xlu0 %v2348
        %v2383 = vpop.xlane.xlu0 %2382
        %2384 = vmax.xlane.f32.xlu0 %v2351
        %v2385 = vpop.xlane.xlu0 %2384
        %v2386 = vsub.f32 %v2292, %v2355
        %v2387 = vsub.f32 %v2295, %v2357
        %v2388 = vsub.f32 %v2300, %v2359
        %v2389 = vsub.f32 %v2303, %v2361
        %v2390 = vsub.f32 %v2308, %v2363
        %v2391 = vsub.f32 %v2311, %v2365
        %v2392 = vsub.f32 %v2316, %v2367
        %v2393 = vsub.f32 %v2319, %v2369
        %v2394 = vsub.f32 %v2324, %v2371
        %v2395 = vsub.f32 %v2327, %v2373
        %v2396 = vsub.f32 %v2332, %v2375
        %v2397 = vsub.f32 %v2335, %v2377
        %v2398 = vsub.f32 %v2340, %v2379
        %v2399 = vsub.f32 %v2343, %v2381
        %v2400 = vsub.f32 %v2348, %v2383
        %v2401 = vsub.f32 %v2351, %v2385
        %v2402 = vmul.f32 %v2386, 1.442695
        %v2403 = vpow.pop %v2402
        %v2404 = vmul.f32 %v2387, 1.442695
        %v2405 = vpow.pop %v2404
        %v2406 = vmul.f32 %v2388, 1.442695
        %v2407 = vpow.pop %v2406
        %v2408 = vmul.f32 %v2389, 1.442695
        %v2409 = vpow.pop %v2408
        %v2410 = vmul.f32 %v2390, 1.442695
        %v2411 = vpow.pop %v2410
        %v2412 = vmul.f32 %v2391, 1.442695
        %v2413 = vpow.pop %v2412
        %v2414 = vmul.f32 %v2392, 1.442695
        %v2415 = vpow.pop %v2414
        %v2416 = vmul.f32 %v2393, 1.442695
        %v2417 = vpow.pop %v2416
        %v2418 = vmul.f32 %v2394, 1.442695
        %v2419 = vpow.pop %v2418
        %v2420 = vmul.f32 %v2395, 1.442695
        %v2421 = vpow.pop %v2420
        %v2422 = vmul.f32 %v2396, 1.442695
        %v2423 = vpow.pop %v2422
        %v2424 = vmul.f32 %v2397, 1.442695
        %v2425 = vpow.pop %v2424
        %v2426 = vmul.f32 %v2398, 1.442695
        %v2427 = vpow.pop %v2426
        %v2428 = vmul.f32 %v2399, 1.442695
        %v2429 = vpow.pop %v2428
        %v2430 = vmul.f32 %v2400, 1.442695
        %v2431 = vpow.pop %v2430
        %v2432 = vmul.f32 %v2401, 1.442695
        %v2433 = vpow.pop %v2432
        %2434 = vadd.xlane.f32.xlu0 %v2403
        %v2435 = vpop.xlane.xlu0 %2434
        %2436 = vadd.xlane.f32.xlu0 %v2405
        %v2437 = vpop.xlane.xlu0 %2436
        %2438 = vadd.xlane.f32.xlu0 %v2407
        %v2439 = vpop.xlane.xlu0 %2438
        %2440 = vadd.xlane.f32.xlu0 %v2409
        %v2441 = vpop.xlane.xlu0 %2440
        %2442 = vadd.xlane.f32.xlu0 %v2411
        %v2443 = vpop.xlane.xlu0 %2442
        %2444 = vadd.xlane.f32.xlu0 %v2413
        %v2445 = vpop.xlane.xlu0 %2444
        %2446 = vadd.xlane.f32.xlu0 %v2415
        %v2447 = vpop.xlane.xlu0 %2446
        %2448 = vadd.xlane.f32.xlu0 %v2417
        %v2449 = vpop.xlane.xlu0 %2448
        %2450 = vadd.xlane.f32.xlu0 %v2419
        %v2451 = vpop.xlane.xlu0 %2450
        %2452 = vadd.xlane.f32.xlu0 %v2421
        %v2453 = vpop.xlane.xlu0 %2452
        %2454 = vadd.xlane.f32.xlu0 %v2423
        %v2455 = vpop.xlane.xlu0 %2454
        %2456 = vadd.xlane.f32.xlu0 %v2425
        %v2457 = vpop.xlane.xlu0 %2456
        %2458 = vadd.xlane.f32.xlu0 %v2427
        %v2459 = vpop.xlane.xlu0 %2458
        %2460 = vadd.xlane.f32.xlu0 %v2429
        %v2461 = vpop.xlane.xlu0 %2460
        %2462 = vadd.xlane.f32.xlu0 %v2431
        %v2463 = vpop.xlane.xlu0 %2462
        %2464 = vadd.xlane.f32.xlu0 %v2433
        %v2465 = vpop.xlane.xlu0 %2464
        %v2466 = vpack.c.bf16 %v2405, %v2403
        %v2467 = vpack.c.bf16 %v2409, %v2407
        %v2468 = vpack.c.bf16 %v2413, %v2411
        %v2469 = vpack.c.bf16 %v2417, %v2415
        %v2470 = vpack.c.bf16 %v2421, %v2419
        %v2471 = vpack.c.bf16 %v2425, %v2423
        %v2472 = vpack.c.bf16 %v2429, %v2427
        %v2473 = vpack.c.bf16 %v2433, %v2431
        %2474 = vrot.lane.b32.xlu0 %v1009, 64
        %v2475 = vpop.permute.xlu0 %2474
        %2476 = vrot.lane.b32.xlu0 %v1010, 64
        %v2477 = vpop.permute.xlu0 %2476
        %2478 = vrot.lane.b32.xlu0 %v1011, 64
        %v2479 = vpop.permute.xlu0 %2478
        %2480 = vrot.lane.b32.xlu0 %v1012, 64
        %v2481 = vpop.permute.xlu0 %2480
        %2482 = vrot.lane.b32.xlu0 %v1013, 64
        %v2483 = vpop.permute.xlu0 %2482
        %2484 = vrot.lane.b32.xlu0 %v1014, 64
        %v2485 = vpop.permute.xlu0 %2484
        %2486 = vrot.lane.b32.xlu0 %v1015, 64
        %v2487 = vpop.permute.xlu0 %2486
        %2488 = vrot.lane.b32.xlu0 %v1016, 64
        %v2489 = vpop.permute.xlu0 %2488
        %2498 = vmatprep.subr.bf16.mxu0 0
        %2499 = vmatpush1.bf16.msra.mxu0 %v2475
        %2500 = vmatprep.subr.bf16.mxu0 0
        %2501 = vmatpush1.bf16.msra.mxu0 %v2477
        %2502 = vmatprep.subr.bf16.mxu0 0
        %2503 = vmatpush1.bf16.msra.mxu0 %v2479
        %2504 = vmatprep.subr.bf16.mxu0 0
        %2505 = vmatpush1.bf16.msra.mxu0 %v2481
        %2506 = vmatprep.subr.bf16.mxu0 0
        %2507 = vmatpush1.bf16.msra.mxu0 %v2483
        %2508 = vmatprep.subr.bf16.mxu0 0
        %2509 = vmatpush1.bf16.msra.mxu0 %v2485
        %2510 = vmatprep.subr.bf16.mxu0 0
        %2511 = vmatpush1.bf16.msra.mxu0 %v2487
        %2512 = vmatprep.subr.bf16.mxu0 0
        %2513 = vmatpush1.bf16.msra.mxu0 %v2489
        %2514 = vmatprep.subr.bf16.mxu0 0
        %2515 = vmatpush1.bf16.msra.mxu0 0
        %2516 = vmatprep.subr.bf16.mxu0 0
        %2517 = vmatpush1.bf16.msra.mxu0 0
        %2518 = vmatprep.subr.bf16.mxu0 0
        %2519 = vmatpush1.bf16.msra.mxu0 0
        %2520 = vmatprep.subr.bf16.mxu0 0
        %2521 = vmatpush1.bf16.msra.mxu0 0
        %2522 = vmatprep.subr.bf16.mxu0 0
        %2523 = vmatpush1.bf16.msra.mxu0 0
        %2524 = vmatprep.subr.bf16.mxu0 0
        %2525 = vmatpush1.bf16.msra.mxu0 0
        %2526 = vmatprep.subr.bf16.mxu0 0
        %2527 = vmatpush1.bf16.msra.mxu0 0
        %2528 = vmatprep.subr.bf16.mxu0 0
        %2529 = vmatpush1.bf16.msra.mxu0 0
        %2530 = vmatprep.mubr.bf16.mxu0 0
        %2531 = vmatmul.mubr.bf16.gmra.mrb[0].mxu0 %v2466
        %v2532 = vpop.f32.mrb[0].mxu0
        %v2533 = vadd.f32 0.0, %v2532
        %v2534 = vpop.f32.mrb[0].mxu0
        %v2535 = vpop.f32.mrb[0].mxu0
        %v2536 = vadd.f32 0.0, %v2535
        %v2537 = vpop.f32.mrb[0].mxu0
        %2538 = vmatprep.mubr.bf16.mxu0 0
        %2539 = vmatmul.mubr.bf16.gmra.mrb[0].mxu0 %v2467
        %v2540 = vpop.f32.mrb[0].mxu0
        %v2541 = vadd.f32 0.0, %v2540
        %v2542 = vpop.f32.mrb[0].mxu0
        %v2543 = vpop.f32.mrb[0].mxu0
        %v2544 = vadd.f32 0.0, %v2543
        %v2545 = vpop.f32.mrb[0].mxu0
        %2546 = vmatprep.mubr.bf16.mxu0 0
        %2547 = vmatmul.mubr.bf16.gmra.mrb[0].mxu0 %v2468
        %v2548 = vpop.f32.mrb[0].mxu0
        %v2549 = vadd.f32 0.0, %v2548
        %v2550 = vpop.f32.mrb[0].mxu0
        %v2551 = vpop.f32.mrb[0].mxu0
        %v2552 = vadd.f32 0.0, %v2551
        %v2553 = vpop.f32.mrb[0].mxu0
        %2554 = vmatprep.mubr.bf16.mxu0 0
        %2555 = vmatmul.mubr.bf16.gmra.mrb[0].mxu0 %v2469
        %v2556 = vpop.f32.mrb[0].mxu0
        %v2557 = vadd.f32 0.0, %v2556
        %v2558 = vpop.f32.mrb[0].mxu0
        %v2559 = vpop.f32.mrb[0].mxu0
        %v2560 = vadd.f32 0.0, %v2559
        %v2561 = vpop.f32.mrb[0].mxu0
        %2562 = vmatprep.mubr.bf16.mxu0 0
        %2563 = vmatmul.mubr.bf16.gmra.mrb[0].mxu0 %v2470
        %v2564 = vpop.f32.mrb[0].mxu0
        %v2565 = vadd.f32 0.0, %v2564
        %v2566 = vpop.f32.mrb[0].mxu0
        %v2567 = vpop.f32.mrb[0].mxu0
        %v2568 = vadd.f32 0.0, %v2567
        %v2569 = vpop.f32.mrb[0].mxu0
        %2570 = vmatprep.mubr.bf16.mxu0 0
        %2571 = vmatmul.mubr.bf16.gmra.mrb[0].mxu0 %v2471
        %v2572 = vpop.f32.mrb[0].mxu0
        %v2573 = vadd.f32 0.0, %v2572
        %v2574 = vpop.f32.mrb[0].mxu0
        %v2575 = vpop.f32.mrb[0].mxu0
        %v2576 = vadd.f32 0.0, %v2575
        %v2577 = vpop.f32.mrb[0].mxu0
        %2578 = vmatprep.mubr.bf16.mxu0 0
        %2579 = vmatmul.mubr.bf16.gmra.mrb[0].mxu0 %v2472
        %v2580 = vpop.f32.mrb[0].mxu0
        %v2581 = vadd.f32 0.0, %v2580
        %v2582 = vpop.f32.mrb[0].mxu0
        %v2583 = vpop.f32.mrb[0].mxu0
        %v2584 = vadd.f32 0.0, %v2583
        %v2585 = vpop.f32.mrb[0].mxu0
        %2586 = vmatprep.mubr.bf16.mxu0 0
        %2587 = vmatmul.mubr.bf16.gmra.mrb[0].mxu0 %v2473
        %v2588 = vpop.f32.mrb[0].mxu0
        %v2589 = vadd.f32 0.0, %v2588
        %v2590 = vpop.f32.mrb[0].mxu0
        %v2591 = vpop.f32.mrb[0].mxu0
        %v2592 = vadd.f32 0.0, %v2591
        %v2593 = vpop.f32.mrb[0].mxu0
        %2594 = vdwg.mxu0
        %v2595 = vrcp.pop %v2435
        %v2596 = vrcp.pop %v2437
        %v2597 = vrcp.pop %v2439
        %v2598 = vrcp.pop %v2441
        %v2599 = vrcp.pop %v2443
        %v2600 = vrcp.pop %v2445
        %v2601 = vrcp.pop %v2447
        %v2602 = vrcp.pop %v2449
        %v2603 = vrcp.pop %v2451
        %v2604 = vrcp.pop %v2453
        %v2605 = vrcp.pop %v2455
        %v2606 = vrcp.pop %v2457
        %v2607 = vrcp.pop %v2459
        %v2608 = vrcp.pop %v2461
        %v2609 = vrcp.pop %v2463
        %v2610 = vrcp.pop %v2465
        %v2611 = vmul.f32 %v2533, %v2595
        %v2612 = vmul.f32 %v2536, %v2596
        %v2613 = vmul.f32 %v2541, %v2597
        %v2614 = vmul.f32 %v2544, %v2598
        %v2615 = vmul.f32 %v2549, %v2599
        %v2616 = vmul.f32 %v2552, %v2600
        %v2617 = vmul.f32 %v2557, %v2601
        %v2618 = vmul.f32 %v2560, %v2602
        %v2619 = vmul.f32 %v2565, %v2603
        %v2620 = vmul.f32 %v2568, %v2604
        %v2621 = vmul.f32 %v2573, %v2605
        %v2622 = vmul.f32 %v2576, %v2606
        %v2623 = vmul.f32 %v2581, %v2607
        %v2624 = vmul.f32 %v2584, %v2608
        %v2625 = vmul.f32 %v2589, %v2609
        %v2626 = vmul.f32 %v2592, %v2610
        %v2627 = vpack.c.bf16 %v2612, %v2611
        %v2628 = vpack.c.bf16 %v2614, %v2613
        %v2629 = vpack.c.bf16 %v2616, %v2615
        %v2630 = vpack.c.bf16 %v2618, %v2617
        %v2631 = vpack.c.bf16 %v2620, %v2619
        %v2632 = vpack.c.bf16 %v2622, %v2621
        %v2633 = vpack.c.bf16 %v2624, %v2623
        %v2634 = vpack.c.bf16 %v2626, %v2625
        %s2635 = scalar_lea.vmem [#allocation10], 32
        %v2636 = vld [vmem:[%s2635] sm:$0xf]
        %v2637 = vld [vmem:[%s2635 + $0x4] sm:$0xf]
        %v2638 = vld [vmem:[%s2635 + $0x8] sm:$0xf]
        %v2639 = vld [vmem:[%s2635 + $0xc] sm:$0xf]
        %v2644 = vunpack.c.l.b16 %v2636
        %v2645 = vunpack.c.l.b16 %v2637
        %v2646 = vunpack.c.l.b16 %v2638
        %v2647 = vunpack.c.l.b16 %v2639
        %v2648 = vpack.c.b16 %v2645, %v2644
        %v2649 = vpack.c.b16 %v2647, %v2646
        %v2653 = vsel %vm1017, %v2627, 0
        %v2656 = vsel %vm1017, %v2628, 0
        %v2659 = vsel %vm1017, %v2629, 0
        %v2662 = vsel %vm1017, %v2630, 0
        %v2665 = vsel %vm1017, %v2631, 0
        %v2668 = vsel %vm1017, %v2632, 0
        %v2671 = vsel %vm1017, %v2633, 0
        %v2674 = vsel %vm1017, %v2634, 0
        %2676 = vmatprep.subr.bf16.mxu0 0
        %2677 = vmatpush1.bf16.msra.mxu0 %v2648
        %2678 = vmatprep.subr.bf16.mxu0 0
        %2679 = vmatpush1.bf16.msra.mxu0 %v2649
        %2680 = vmatprep.subr.bf16.mxu0 0
        %2681 = vmatpush1.bf16.msra.mxu0 0
        %2682 = vmatprep.subr.bf16.mxu0 0
        %2683 = vmatpush1.bf16.msra.mxu0 0
        %2684 = vmatprep.subr.bf16.mxu0 0
        %2685 = vmatpush1.bf16.msra.mxu0 0
        %2686 = vmatprep.subr.bf16.mxu0 0
        %2687 = vmatpush1.bf16.msra.mxu0 0
        %2688 = vmatprep.subr.bf16.mxu0 0
        %2689 = vmatpush1.bf16.msra.mxu0 0
        %2690 = vmatprep.subr.bf16.mxu0 0
        %2691 = vmatpush1.bf16.msra.mxu0 0
        %2692 = vmatprep.subr.bf16.mxu0 0
        %2693 = vmatpush1.bf16.msra.mxu0 0
        %2694 = vmatprep.subr.bf16.mxu0 0
        %2695 = vmatpush1.bf16.msra.mxu0 0
        %2696 = vmatprep.subr.bf16.mxu0 0
        %2697 = vmatpush1.bf16.msra.mxu0 0
        %2698 = vmatprep.subr.bf16.mxu0 0
        %2699 = vmatpush1.bf16.msra.mxu0 0
        %2700 = vmatprep.subr.bf16.mxu0 0
        %2701 = vmatpush1.bf16.msra.mxu0 0
        %2702 = vmatprep.subr.bf16.mxu0 0
        %2703 = vmatpush1.bf16.msra.mxu0 0
        %2704 = vmatprep.subr.bf16.mxu0 0
        %2705 = vmatpush1.bf16.msra.mxu0 0
        %2706 = vmatprep.subr.bf16.mxu0 0
        %2707 = vmatpush1.bf16.msra.mxu0 0
        %2708 = vmatprep.mubr.bf16.mxu0 0
        %2709 = vmatmul.mubr.bf16.gmra.mrb[0].mxu0 %v2653
        %v2710 = vpop.f32.mrb[0].mxu0
        %v2711 = vadd.f32 0.0, %v2710
        %v2712 = vpop.f32.mrb[0].mxu0
        %v2713 = vpop.f32.mrb[0].mxu0
        %v2714 = vadd.f32 0.0, %v2713
        %v2715 = vpop.f32.mrb[0].mxu0
        %2716 = vmatprep.mubr.bf16.mxu0 0
        %2717 = vmatmul.mubr.bf16.gmra.mrb[0].mxu0 %v2656
        %v2718 = vpop.f32.mrb[0].mxu0
        %v2719 = vadd.f32 0.0, %v2718
        %v2720 = vpop.f32.mrb[0].mxu0
        %v2721 = vpop.f32.mrb[0].mxu0
        %v2722 = vadd.f32 0.0, %v2721
        %v2723 = vpop.f32.mrb[0].mxu0
        %2724 = vmatprep.mubr.bf16.mxu0 0
        %2725 = vmatmul.mubr.bf16.gmra.mrb[0].mxu0 %v2659
        %v2726 = vpop.f32.mrb[0].mxu0
        %v2727 = vadd.f32 0.0, %v2726
        %v2728 = vpop.f32.mrb[0].mxu0
        %v2729 = vpop.f32.mrb[0].mxu0
        %v2730 = vadd.f32 0.0, %v2729
        %v2731 = vpop.f32.mrb[0].mxu0
        %2732 = vmatprep.mubr.bf16.mxu0 0
        %2733 = vmatmul.mubr.bf16.gmra.mrb[0].mxu0 %v2662
        %v2734 = vpop.f32.mrb[0].mxu0
        %v2735 = vadd.f32 0.0, %v2734
        %v2736 = vpop.f32.mrb[0].mxu0
        %v2737 = vpop.f32.mrb[0].mxu0
        %v2738 = vadd.f32 0.0, %v2737
        %v2739 = vpop.f32.mrb[0].mxu0
        %2740 = vmatprep.mubr.bf16.mxu0 0
        %2741 = vmatmul.mubr.bf16.gmra.mrb[0].mxu0 %v2665
        %v2742 = vpop.f32.mrb[0].mxu0
        %v2743 = vadd.f32 0.0, %v2742
        %v2744 = vpop.f32.mrb[0].mxu0
        %v2745 = vpop.f32.mrb[0].mxu0
        %v2746 = vadd.f32 0.0, %v2745
        %v2747 = vpop.f32.mrb[0].mxu0
        %2748 = vmatprep.mubr.bf16.mxu0 0
        %2749 = vmatmul.mubr.bf16.gmra.mrb[0].mxu0 %v2668
        %v2750 = vpop.f32.mrb[0].mxu0
        %v2751 = vadd.f32 0.0, %v2750
        %v2752 = vpop.f32.mrb[0].mxu0
        %v2753 = vpop.f32.mrb[0].mxu0
        %v2754 = vadd.f32 0.0, %v2753
        %v2755 = vpop.f32.mrb[0].mxu0
        %2756 = vmatprep.mubr.bf16.mxu0 0
        %2757 = vmatmul.mubr.bf16.gmra.mrb[0].mxu0 %v2671
        %v2758 = vpop.f32.mrb[0].mxu0
        %v2759 = vadd.f32 0.0, %v2758
        %v2760 = vpop.f32.mrb[0].mxu0
        %v2761 = vpop.f32.mrb[0].mxu0
        %v2762 = vadd.f32 0.0, %v2761
        %v2763 = vpop.f32.mrb[0].mxu0
        %2764 = vmatprep.mubr.bf16.mxu0 0
        %2765 = vmatmul.mubr.bf16.gmra.mrb[0].mxu0 %v2674
        %v2766 = vpop.f32.mrb[0].mxu0
        %v2767 = vadd.f32 0.0, %v2766
        %v2768 = vpop.f32.mrb[0].mxu0
        %v2769 = vpop.f32.mrb[0].mxu0
        %v2770 = vadd.f32 0.0, %v2769
        %v2771 = vpop.f32.mrb[0].mxu0
        %2772 = vdwg.mxu0
        %v2773 = vadd.f32 %v2115, %v2711
        %v2774 = vadd.f32 %v2118, %v2714
        %v2775 = vadd.f32 %v2123, %v2719
        %v2776 = vadd.f32 %v2126, %v2722
        %v2777 = vadd.f32 %v2131, %v2727
        %v2778 = vadd.f32 %v2134, %v2730
        %v2779 = vadd.f32 %v2139, %v2735
        %v2780 = vadd.f32 %v2142, %v2738
        %v2781 = vadd.f32 %v2147, %v2743
        %v2782 = vadd.f32 %v2150, %v2746
        %v2783 = vadd.f32 %v2155, %v2751
        %v2784 = vadd.f32 %v2158, %v2754
        %v2785 = vadd.f32 %v2163, %v2759
        %v2786 = vadd.f32 %v2166, %v2762
        %v2787 = vadd.f32 %v2171, %v2767
        %v2788 = vadd.f32 %v2174, %v2770
        %2789 = vrot.lane.b32.xlu0 %v993, 32
        %v2790 = vpop.permute.xlu0 %2789
        %2791 = vrot.lane.b32.xlu0 %v994, 32
        %v2792 = vpop.permute.xlu0 %2791
        %2793 = vrot.lane.b32.xlu0 %v995, 32
        %v2794 = vpop.permute.xlu0 %2793
        %2795 = vrot.lane.b32.xlu0 %v996, 32
        %v2796 = vpop.permute.xlu0 %2795
        %2797 = vrot.lane.b32.xlu0 %v997, 32
        %v2798 = vpop.permute.xlu0 %2797
        %2799 = vrot.lane.b32.xlu0 %v998, 32
        %v2800 = vpop.permute.xlu0 %2799
        %2801 = vrot.lane.b32.xlu0 %v999, 32
        %v2802 = vpop.permute.xlu0 %2801
        %2803 = vrot.lane.b32.xlu0 %v1000, 32
        %v2804 = vpop.permute.xlu0 %2803
        %2805 = vrot.lane.b32.xlu0 %v1001, 32
        %v2806 = vpop.permute.xlu0 %2805
        %2807 = vrot.lane.b32.xlu0 %v1002, 32
        %v2808 = vpop.permute.xlu0 %2807
        %2809 = vrot.lane.b32.xlu0 %v1003, 32
        %v2810 = vpop.permute.xlu0 %2809
        %2811 = vrot.lane.b32.xlu0 %v1004, 32
        %v2812 = vpop.permute.xlu0 %2811
        %2813 = vrot.lane.b32.xlu0 %v1005, 32
        %v2814 = vpop.permute.xlu0 %2813
        %2815 = vrot.lane.b32.xlu0 %v1006, 32
        %v2816 = vpop.permute.xlu0 %2815
        %2817 = vrot.lane.b32.xlu0 %v1007, 32
        %v2818 = vpop.permute.xlu0 %2817
        %2819 = vrot.lane.b32.xlu0 %v1008, 32
        %v2820 = vpop.permute.xlu0 %2819
        %v2822 = vsel %vm1017, %v2790, 0
        %v2825 = vsel %vm1017, %v2792, 0
        %v2828 = vsel %vm1017, %v2794, 0
        %v2831 = vsel %vm1017, %v2796, 0
        %v2834 = vsel %vm1017, %v2798, 0
        %v2837 = vsel %vm1017, %v2800, 0
        %v2840 = vsel %vm1017, %v2802, 0
        %v2843 = vsel %vm1017, %v2804, 0
        %v2846 = vsel %vm1017, %v2806, 0
        %v2849 = vsel %vm1017, %v2808, 0
        %v2852 = vsel %vm1017, %v2810, 0
        %v2855 = vsel %vm1017, %v2812, 0
        %v2858 = vsel %vm1017, %v2814, 0
        %v2861 = vsel %vm1017, %v2816, 0
        %v2864 = vsel %vm1017, %v2818, 0
        %v2867 = vsel %vm1017, %v2820, 0
        %2869 = vmatprep.subr.bf16.mxu0 0
        %2870 = vmatpush1.bf16.xpose.msra.mxu0 %v2846
        %2871 = vmatprep.subr.bf16.mxu0 0
        %2872 = vmatpush1.bf16.xpose.msra.mxu0 %v2849
        %2873 = vmatprep.subr.bf16.mxu0 0
        %2874 = vmatpush1.bf16.xpose.msra.mxu0 %v2852
        %2875 = vmatprep.subr.bf16.mxu0 0
        %2876 = vmatpush1.bf16.xpose.msra.mxu0 %v2855
        %2877 = vmatprep.subr.bf16.mxu0 0
        %2878 = vmatpush1.bf16.xpose.msra.mxu0 %v2858
        %2879 = vmatprep.subr.bf16.mxu0 0
        %2880 = vmatpush1.bf16.xpose.msra.mxu0 %v2861
        %2881 = vmatprep.subr.bf16.mxu0 0
        %2882 = vmatpush1.bf16.xpose.msra.mxu0 %v2864
        %2883 = vmatprep.subr.bf16.mxu0 0
        %2884 = vmatpush1.bf16.xpose.msra.mxu0 %v2867
        %2885 = vmatprep.subr.bf16.mxu0 0
        %2886 = vmatpush1.bf16.xpose.msra.mxu0 0
        %2887 = vmatprep.subr.bf16.mxu0 0
        %2888 = vmatpush1.bf16.xpose.msra.mxu0 0
        %2889 = vmatprep.subr.bf16.mxu0 0
        %2890 = vmatpush1.bf16.xpose.msra.mxu0 0
        %2891 = vmatprep.subr.bf16.mxu0 0
        %2892 = vmatpush1.bf16.xpose.msra.mxu0 0
        %2893 = vmatprep.subr.bf16.mxu0 0
        %2894 = vmatpush1.bf16.xpose.msra.mxu0 0
        %2895 = vmatprep.subr.bf16.mxu0 0
        %2896 = vmatpush1.bf16.xpose.msra.mxu0 0
        %2897 = vmatprep.subr.bf16.mxu0 0
        %2898 = vmatpush1.bf16.xpose.msra.mxu0 0
        %2899 = vmatprep.subr.bf16.mxu0 0
        %2900 = vmatpush1.bf16.xpose.msra.mxu0 0
        %2901 = vmatprep.mubr.bf16.mxu0 0
        %2902 = vmatmul.mubr.bf16.gmra.mrb[0].mxu0 %v2822
        %v2903 = vpop.f32.mrb[0].mxu0
        %v2904 = vadd.f32 0.0, %v2903
        %v2905 = vpop.f32.mrb[0].mxu0
        %v2906 = vpop.f32.mrb[0].mxu0
        %v2907 = vadd.f32 0.0, %v2906
        %v2908 = vpop.f32.mrb[0].mxu0
        %2909 = vmatprep.mubr.bf16.mxu0 0
        %2910 = vmatmul.mubr.bf16.gmra.mrb[0].mxu0 %v2825
        %v2911 = vpop.f32.mrb[0].mxu0
        %v2912 = vadd.f32 0.0, %v2911
        %v2913 = vpop.f32.mrb[0].mxu0
        %v2914 = vpop.f32.mrb[0].mxu0
        %v2915 = vadd.f32 0.0, %v2914
        %v2916 = vpop.f32.mrb[0].mxu0
        %2917 = vmatprep.mubr.bf16.mxu0 0
        %2918 = vmatmul.mubr.bf16.gmra.mrb[0].mxu0 %v2828
        %v2919 = vpop.f32.mrb[0].mxu0
        %v2920 = vadd.f32 0.0, %v2919
        %v2921 = vpop.f32.mrb[0].mxu0
        %v2922 = vpop.f32.mrb[0].mxu0
        %v2923 = vadd.f32 0.0, %v2922
        %v2924 = vpop.f32.mrb[0].mxu0
        %2925 = vmatprep.mubr.bf16.mxu0 0
        %2926 = vmatmul.mubr.bf16.gmra.mrb[0].mxu0 %v2831
        %v2927 = vpop.f32.mrb[0].mxu0
        %v2928 = vadd.f32 0.0, %v2927
        %v2929 = vpop.f32.mrb[0].mxu0
        %v2930 = vpop.f32.mrb[0].mxu0
        %v2931 = vadd.f32 0.0, %v2930
        %v2932 = vpop.f32.mrb[0].mxu0
        %2933 = vmatprep.mubr.bf16.mxu0 0
        %2934 = vmatmul.mubr.bf16.gmra.mrb[0].mxu0 %v2834
        %v2935 = vpop.f32.mrb[0].mxu0
        %v2936 = vadd.f32 0.0, %v2935
        %v2937 = vpop.f32.mrb[0].mxu0
        %v2938 = vpop.f32.mrb[0].mxu0
        %v2939 = vadd.f32 0.0, %v2938
        %v2940 = vpop.f32.mrb[0].mxu0
        %2941 = vmatprep.mubr.bf16.mxu0 0
        %2942 = vmatmul.mubr.bf16.gmra.mrb[0].mxu0 %v2837
        %v2943 = vpop.f32.mrb[0].mxu0
        %v2944 = vadd.f32 0.0, %v2943
        %v2945 = vpop.f32.mrb[0].mxu0
        %v2946 = vpop.f32.mrb[0].mxu0
        %v2947 = vadd.f32 0.0, %v2946
        %v2948 = vpop.f32.mrb[0].mxu0
        %2949 = vmatprep.mubr.bf16.mxu0 0
        %2950 = vmatmul.mubr.bf16.gmra.mrb[0].mxu0 %v2840
        %v2951 = vpop.f32.mrb[0].mxu0
        %v2952 = vadd.f32 0.0, %v2951
        %v2953 = vpop.f32.mrb[0].mxu0
        %v2954 = vpop.f32.mrb[0].mxu0
        %v2955 = vadd.f32 0.0, %v2954
        %v2956 = vpop.f32.mrb[0].mxu0
        %2957 = vmatprep.mubr.bf16.mxu0 0
        %2958 = vmatmul.mubr.bf16.gmra.mrb[0].mxu0 %v2843
        %v2959 = vpop.f32.mrb[0].mxu0
        %v2960 = vadd.f32 0.0, %v2959
        %v2961 = vpop.f32.mrb[0].mxu0
        %v2962 = vpop.f32.mrb[0].mxu0
        %v2963 = vadd.f32 0.0, %v2962
        %v2964 = vpop.f32.mrb[0].mxu0
        %2965 = vdwg.mxu0
        %2966 = vmax.xlane.f32.xlu0 %v2904
        %v2967 = vpop.xlane.xlu0 %2966
        %2968 = vmax.xlane.f32.xlu0 %v2907
        %v2969 = vpop.xlane.xlu0 %2968
        %2970 = vmax.xlane.f32.xlu0 %v2912
        %v2971 = vpop.xlane.xlu0 %2970
        %2972 = vmax.xlane.f32.xlu0 %v2915
        %v2973 = vpop.xlane.xlu0 %2972
        %2974 = vmax.xlane.f32.xlu0 %v2920
        %v2975 = vpop.xlane.xlu0 %2974
        %2976 = vmax.xlane.f32.xlu0 %v2923
        %v2977 = vpop.xlane.xlu0 %2976
        %2978 = vmax.xlane.f32.xlu0 %v2928
        %v2979 = vpop.xlane.xlu0 %2978
        %2980 = vmax.xlane.f32.xlu0 %v2931
        %v2981 = vpop.xlane.xlu0 %2980
        %2982 = vmax.xlane.f32.xlu0 %v2936
        %v2983 = vpop.xlane.xlu0 %2982
        %2984 = vmax.xlane.f32.xlu0 %v2939
        %v2985 = vpop.xlane.xlu0 %2984
        %2986 = vmax.xlane.f32.xlu0 %v2944
        %v2987 = vpop.xlane.xlu0 %2986
        %2988 = vmax.xlane.f32.xlu0 %v2947
        %v2989 = vpop.xlane.xlu0 %2988
        %2990 = vmax.xlane.f32.xlu0 %v2952
        %v2991 = vpop.xlane.xlu0 %2990
        %2992 = vmax.xlane.f32.xlu0 %v2955
        %v2993 = vpop.xlane.xlu0 %2992
        %2994 = vmax.xlane.f32.xlu0 %v2960
        %v2995 = vpop.xlane.xlu0 %2994
        %2996 = vmax.xlane.f32.xlu0 %v2963
        %v2997 = vpop.xlane.xlu0 %2996
        %v2998 = vsub.f32 %v2904, %v2967
        %v2999 = vsub.f32 %v2907, %v2969
        %v3000 = vsub.f32 %v2912, %v2971
        %v3001 = vsub.f32 %v2915, %v2973
        %v3002 = vsub.f32 %v2920, %v2975
        %v3003 = vsub.f32 %v2923, %v2977
        %v3004 = vsub.f32 %v2928, %v2979
        %v3005 = vsub.f32 %v2931, %v2981
        %v3006 = vsub.f32 %v2936, %v2983
        %v3007 = vsub.f32 %v2939, %v2985
        %v3008 = vsub.f32 %v2944, %v2987
        %v3009 = vsub.f32 %v2947, %v2989
        %v3010 = vsub.f32 %v2952, %v2991
        %v3011 = vsub.f32 %v2955, %v2993
        %v3012 = vsub.f32 %v2960, %v2995
        %v3013 = vsub.f32 %v2963, %v2997
        %v3014 = vmul.f32 %v2998, 1.442695
        %v3015 = vpow.pop %v3014
        %v3016 = vmul.f32 %v2999, 1.442695
        %v3017 = vpow.pop %v3016
        %v3018 = vmul.f32 %v3000, 1.442695
        %v3019 = vpow.pop %v3018
        %v3020 = vmul.f32 %v3001, 1.442695
        %v3021 = vpow.pop %v3020
        %v3022 = vmul.f32 %v3002, 1.442695
        %v3023 = vpow.pop %v3022
        %v3024 = vmul.f32 %v3003, 1.442695
        %v3025 = vpow.pop %v3024
        %v3026 = vmul.f32 %v3004, 1.442695
        %v3027 = vpow.pop %v3026
        %v3028 = vmul.f32 %v3005, 1.442695
        %v3029 = vpow.pop %v3028
        %v3030 = vmul.f32 %v3006, 1.442695
        %v3031 = vpow.pop %v3030
        %v3032 = vmul.f32 %v3007, 1.442695
        %v3033 = vpow.pop %v3032
        %v3034 = vmul.f32 %v3008, 1.442695
        %v3035 = vpow.pop %v3034
        %v3036 = vmul.f32 %v3009, 1.442695
        %v3037 = vpow.pop %v3036
        %v3038 = vmul.f32 %v3010, 1.442695
        %v3039 = vpow.pop %v3038
        %v3040 = vmul.f32 %v3011, 1.442695
        %v3041 = vpow.pop %v3040
        %v3042 = vmul.f32 %v3012, 1.442695
        %v3043 = vpow.pop %v3042
        %v3044 = vmul.f32 %v3013, 1.442695
        %v3045 = vpow.pop %v3044
        %3046 = vadd.xlane.f32.xlu0 %v3015
        %v3047 = vpop.xlane.xlu0 %3046
        %3048 = vadd.xlane.f32.xlu0 %v3017
        %v3049 = vpop.xlane.xlu0 %3048
        %3050 = vadd.xlane.f32.xlu0 %v3019
        %v3051 = vpop.xlane.xlu0 %3050
        %3052 = vadd.xlane.f32.xlu0 %v3021
        %v3053 = vpop.xlane.xlu0 %3052
        %3054 = vadd.xlane.f32.xlu0 %v3023
        %v3055 = vpop.xlane.xlu0 %3054
        %3056 = vadd.xlane.f32.xlu0 %v3025
        %v3057 = vpop.xlane.xlu0 %3056
        %3058 = vadd.xlane.f32.xlu0 %v3027
        %v3059 = vpop.xlane.xlu0 %3058
        %3060 = vadd.xlane.f32.xlu0 %v3029
        %v3061 = vpop.xlane.xlu0 %3060
        %3062 = vadd.xlane.f32.xlu0 %v3031
        %v3063 = vpop.xlane.xlu0 %3062
        %3064 = vadd.xlane.f32.xlu0 %v3033
        %v3065 = vpop.xlane.xlu0 %3064
        %3066 = vadd.xlane.f32.xlu0 %v3035
        %v3067 = vpop.xlane.xlu0 %3066
        %3068 = vadd.xlane.f32.xlu0 %v3037
        %v3069 = vpop.xlane.xlu0 %3068
        %3070 = vadd.xlane.f32.xlu0 %v3039
        %v3071 = vpop.xlane.xlu0 %3070
        %3072 = vadd.xlane.f32.xlu0 %v3041
        %v3073 = vpop.xlane.xlu0 %3072
        %3074 = vadd.xlane.f32.xlu0 %v3043
        %v3075 = vpop.xlane.xlu0 %3074
        %3076 = vadd.xlane.f32.xlu0 %v3045
        %v3077 = vpop.xlane.xlu0 %3076
        %v3078 = vpack.c.bf16 %v3017, %v3015
        %v3079 = vpack.c.bf16 %v3021, %v3019
        %v3080 = vpack.c.bf16 %v3025, %v3023
        %v3081 = vpack.c.bf16 %v3029, %v3027
        %v3082 = vpack.c.bf16 %v3033, %v3031
        %v3083 = vpack.c.bf16 %v3037, %v3035
        %v3084 = vpack.c.bf16 %v3041, %v3039
        %v3085 = vpack.c.bf16 %v3045, %v3043
        %3086 = vrot.lane.b32.xlu0 %v1009, 32
        %v3087 = vpop.permute.xlu0 %3086
        %3088 = vrot.lane.b32.xlu0 %v1010, 32
        %v3089 = vpop.permute.xlu0 %3088
        %3090 = vrot.lane.b32.xlu0 %v1011, 32
        %v3091 = vpop.permute.xlu0 %3090
        %3092 = vrot.lane.b32.xlu0 %v1012, 32
        %v3093 = vpop.permute.xlu0 %3092
        %3094 = vrot.lane.b32.xlu0 %v1013, 32
        %v3095 = vpop.permute.xlu0 %3094
        %3096 = vrot.lane.b32.xlu0 %v1014, 32
        %v3097 = vpop.permute.xlu0 %3096
        %3098 = vrot.lane.b32.xlu0 %v1015, 32
        %v3099 = vpop.permute.xlu0 %3098
        %3100 = vrot.lane.b32.xlu0 %v1016, 32
        %v3101 = vpop.permute.xlu0 %3100
        %3110 = vmatprep.subr.bf16.mxu0 0
        %3111 = vmatpush1.bf16.msra.mxu0 %v3087
        %3112 = vmatprep.subr.bf16.mxu0 0
        %3113 = vmatpush1.bf16.msra.mxu0 %v3089
        %3114 = vmatprep.subr.bf16.mxu0 0
        %3115 = vmatpush1.bf16.msra.mxu0 %v3091
        %3116 = vmatprep.subr.bf16.mxu0 0
        %3117 = vmatpush1.bf16.msra.mxu0 %v3093
        %3118 = vmatprep.subr.bf16.mxu0 0
        %3119 = vmatpush1.bf16.msra.mxu0 %v3095
        %3120 = vmatprep.subr.bf16.mxu0 0
        %3121 = vmatpush1.bf16.msra.mxu0 %v3097
        %3122 = vmatprep.subr.bf16.mxu0 0
        %3123 = vmatpush1.bf16.msra.mxu0 %v3099
        %3124 = vmatprep.subr.bf16.mxu0 0
        %3125 = vmatpush1.bf16.msra.mxu0 %v3101
        %3126 = vmatprep.subr.bf16.mxu0 0
        %3127 = vmatpush1.bf16.msra.mxu0 0
        %3128 = vmatprep.subr.bf16.mxu0 0
        %3129 = vmatpush1.bf16.msra.mxu0 0
        %3130 = vmatprep.subr.bf16.mxu0 0
        %3131 = vmatpush1.bf16.msra.mxu0 0
        %3132 = vmatprep.subr.bf16.mxu0 0
        %3133 = vmatpush1.bf16.msra.mxu0 0
        %3134 = vmatprep.subr.bf16.mxu0 0
        %3135 = vmatpush1.bf16.msra.mxu0 0
        %3136 = vmatprep.subr.bf16.mxu0 0
        %3137 = vmatpush1.bf16.msra.mxu0 0
        %3138 = vmatprep.subr.bf16.mxu0 0
        %3139 = vmatpush1.bf16.msra.mxu0 0
        %3140 = vmatprep.subr.bf16.mxu0 0
        %3141 = vmatpush1.bf16.msra.mxu0 0
        %3142 = vmatprep.mubr.bf16.mxu0 0
        %3143 = vmatmul.mubr.bf16.gmra.mrb[0].mxu0 %v3078
        %v3144 = vpop.f32.mrb[0].mxu0
        %v3145 = vadd.f32 0.0, %v3144
        %v3146 = vpop.f32.mrb[0].mxu0
        %v3147 = vpop.f32.mrb[0].mxu0
        %v3148 = vadd.f32 0.0, %v3147
        %v3149 = vpop.f32.mrb[0].mxu0
        %3150 = vmatprep.mubr.bf16.mxu0 0
        %3151 = vmatmul.mubr.bf16.gmra.mrb[0].mxu0 %v3079
        %v3152 = vpop.f32.mrb[0].mxu0
        %v3153 = vadd.f32 0.0, %v3152
        %v3154 = vpop.f32.mrb[0].mxu0
        %v3155 = vpop.f32.mrb[0].mxu0
        %v3156 = vadd.f32 0.0, %v3155
        %v3157 = vpop.f32.mrb[0].mxu0
        %3158 = vmatprep.mubr.bf16.mxu0 0
        %3159 = vmatmul.mubr.bf16.gmra.mrb[0].mxu0 %v3080
        %v3160 = vpop.f32.mrb[0].mxu0
        %v3161 = vadd.f32 0.0, %v3160
        %v3162 = vpop.f32.mrb[0].mxu0
        %v3163 = vpop.f32.mrb[0].mxu0
        %v3164 = vadd.f32 0.0, %v3163
        %v3165 = vpop.f32.mrb[0].mxu0
        %3166 = vmatprep.mubr.bf16.mxu0 0
        %3167 = vmatmul.mubr.bf16.gmra.mrb[0].mxu0 %v3081
        %v3168 = vpop.f32.mrb[0].mxu0
        %v3169 = vadd.f32 0.0, %v3168
        %v3170 = vpop.f32.mrb[0].mxu0
        %v3171 = vpop.f32.mrb[0].mxu0
        %v3172 = vadd.f32 0.0, %v3171
        %v3173 = vpop.f32.mrb[0].mxu0
        %3174 = vmatprep.mubr.bf16.mxu0 0
        %3175 = vmatmul.mubr.bf16.gmra.mrb[0].mxu0 %v3082
        %v3176 = vpop.f32.mrb[0].mxu0
        %v3177 = vadd.f32 0.0, %v3176
        %v3178 = vpop.f32.mrb[0].mxu0
        %v3179 = vpop.f32.mrb[0].mxu0
        %v3180 = vadd.f32 0.0, %v3179
        %v3181 = vpop.f32.mrb[0].mxu0
        %3182 = vmatprep.mubr.bf16.mxu0 0
        %3183 = vmatmul.mubr.bf16.gmra.mrb[0].mxu0 %v3083
        %v3184 = vpop.f32.mrb[0].mxu0
        %v3185 = vadd.f32 0.0, %v3184
        %v3186 = vpop.f32.mrb[0].mxu0
        %v3187 = vpop.f32.mrb[0].mxu0
        %v3188 = vadd.f32 0.0, %v3187
        %v3189 = vpop.f32.mrb[0].mxu0
        %3190 = vmatprep.mubr.bf16.mxu0 0
        %3191 = vmatmul.mubr.bf16.gmra.mrb[0].mxu0 %v3084
        %v3192 = vpop.f32.mrb[0].mxu0
        %v3193 = vadd.f32 0.0, %v3192
        %v3194 = vpop.f32.mrb[0].mxu0
        %v3195 = vpop.f32.mrb[0].mxu0
        %v3196 = vadd.f32 0.0, %v3195
        %v3197 = vpop.f32.mrb[0].mxu0
        %3198 = vmatprep.mubr.bf16.mxu0 0
        %3199 = vmatmul.mubr.bf16.gmra.mrb[0].mxu0 %v3085
        %v3200 = vpop.f32.mrb[0].mxu0
        %v3201 = vadd.f32 0.0, %v3200
        %v3202 = vpop.f32.mrb[0].mxu0
        %v3203 = vpop.f32.mrb[0].mxu0
        %v3204 = vadd.f32 0.0, %v3203
        %v3205 = vpop.f32.mrb[0].mxu0
        %3206 = vdwg.mxu0
        %v3207 = vrcp.pop %v3047
        %v3208 = vrcp.pop %v3049
        %v3209 = vrcp.pop %v3051
        %v3210 = vrcp.pop %v3053
        %v3211 = vrcp.pop %v3055
        %v3212 = vrcp.pop %v3057
        %v3213 = vrcp.pop %v3059
        %v3214 = vrcp.pop %v3061
        %v3215 = vrcp.pop %v3063
        %v3216 = vrcp.pop %v3065
        %v3217 = vrcp.pop %v3067
        %v3218 = vrcp.pop %v3069
        %v3219 = vrcp.pop %v3071
        %v3220 = vrcp.pop %v3073
        %v3221 = vrcp.pop %v3075
        %v3222 = vrcp.pop %v3077
        %v3223 = vmul.f32 %v3145, %v3207
        %v3224 = vmul.f32 %v3148, %v3208
        %v3225 = vmul.f32 %v3153, %v3209
        %v3226 = vmul.f32 %v3156, %v3210
        %v3227 = vmul.f32 %v3161, %v3211
        %v3228 = vmul.f32 %v3164, %v3212
        %v3229 = vmul.f32 %v3169, %v3213
        %v3230 = vmul.f32 %v3172, %v3214
        %v3231 = vmul.f32 %v3177, %v3215
        %v3232 = vmul.f32 %v3180, %v3216
        %v3233 = vmul.f32 %v3185, %v3217
        %v3234 = vmul.f32 %v3188, %v3218
        %v3235 = vmul.f32 %v3193, %v3219
        %v3236 = vmul.f32 %v3196, %v3220
        %v3237 = vmul.f32 %v3201, %v3221
        %v3238 = vmul.f32 %v3204, %v3222
        %v3239 = vpack.c.bf16 %v3224, %v3223
        %v3240 = vpack.c.bf16 %v3226, %v3225
        %v3241 = vpack.c.bf16 %v3228, %v3227
        %v3242 = vpack.c.bf16 %v3230, %v3229
        %v3243 = vpack.c.bf16 %v3232, %v3231
        %v3244 = vpack.c.bf16 %v3234, %v3233
        %v3245 = vpack.c.bf16 %v3236, %v3235
        %v3246 = vpack.c.bf16 %v3238, %v3237
        %s3247 = scalar_lea.vmem [#allocation10], 48
        %v3248 = vld [vmem:[%s3247] sm:$0xf]
        %v3249 = vld [vmem:[%s3247 + $0x4] sm:$0xf]
        %v3250 = vld [vmem:[%s3247 + $0x8] sm:$0xf]
        %v3251 = vld [vmem:[%s3247 + $0xc] sm:$0xf]
        %v3256 = vunpack.c.l.b16 %v3248
        %v3257 = vunpack.c.l.b16 %v3249
        %v3258 = vunpack.c.l.b16 %v3250
        %v3259 = vunpack.c.l.b16 %v3251
        %v3260 = vpack.c.b16 %v3257, %v3256
        %v3261 = vpack.c.b16 %v3259, %v3258
        %v3265 = vsel %vm1017, %v3239, 0
        %v3268 = vsel %vm1017, %v3240, 0
        %v3271 = vsel %vm1017, %v3241, 0
        %v3274 = vsel %vm1017, %v3242, 0
        %v3277 = vsel %vm1017, %v3243, 0
        %v3280 = vsel %vm1017, %v3244, 0
        %v3283 = vsel %vm1017, %v3245, 0
        %v3286 = vsel %vm1017, %v3246, 0
        %3288 = vmatprep.subr.bf16.mxu0 0
        %3289 = vmatpush1.bf16.msra.mxu0 %v3260
        %3290 = vmatprep.subr.bf16.mxu0 0
        %3291 = vmatpush1.bf16.msra.mxu0 %v3261
        %3292 = vmatprep.subr.bf16.mxu0 0
        %3293 = vmatpush1.bf16.msra.mxu0 0
        %3294 = vmatprep.subr.bf16.mxu0 0
        %3295 = vmatpush1.bf16.msra.mxu0 0
        %3296 = vmatprep.subr.bf16.mxu0 0
        %3297 = vmatpush1.bf16.msra.mxu0 0
        %3298 = vmatprep.subr.bf16.mxu0 0
        %3299 = vmatpush1.bf16.msra.mxu0 0
        %3300 = vmatprep.subr.bf16.mxu0 0
        %3301 = vmatpush1.bf16.msra.mxu0 0
        %3302 = vmatprep.subr.bf16.mxu0 0
        %3303 = vmatpush1.bf16.msra.mxu0 0
        %3304 = vmatprep.subr.bf16.mxu0 0
        %3305 = vmatpush1.bf16.msra.mxu0 0
        %3306 = vmatprep.subr.bf16.mxu0 0
        %3307 = vmatpush1.bf16.msra.mxu0 0
        %3308 = vmatprep.subr.bf16.mxu0 0
        %3309 = vmatpush1.bf16.msra.mxu0 0
        %3310 = vmatprep.subr.bf16.mxu0 0
        %3311 = vmatpush1.bf16.msra.mxu0 0
        %3312 = vmatprep.subr.bf16.mxu0 0
        %3313 = vmatpush1.bf16.msra.mxu0 0
        %3314 = vmatprep.subr.bf16.mxu0 0
        %3315 = vmatpush1.bf16.msra.mxu0 0
        %3316 = vmatprep.subr.bf16.mxu0 0
        %3317 = vmatpush1.bf16.msra.mxu0 0
        %3318 = vmatprep.subr.bf16.mxu0 0
        %3319 = vmatpush1.bf16.msra.mxu0 0
        %3320 = vmatprep.mubr.bf16.mxu0 0
        %3321 = vmatmul.mubr.bf16.gmra.mrb[0].mxu0 %v3265
        %v3322 = vpop.f32.mrb[0].mxu0
        %v3323 = vadd.f32 0.0, %v3322
        %v3324 = vpop.f32.mrb[0].mxu0
        %v3325 = vpop.f32.mrb[0].mxu0
        %v3326 = vadd.f32 0.0, %v3325
        %v3327 = vpop.f32.mrb[0].mxu0
        %3328 = vmatprep.mubr.bf16.mxu0 0
        %3329 = vmatmul.mubr.bf16.gmra.mrb[0].mxu0 %v3268
        %v3330 = vpop.f32.mrb[0].mxu0
        %v3331 = vadd.f32 0.0, %v3330
        %v3332 = vpop.f32.mrb[0].mxu0
        %v3333 = vpop.f32.mrb[0].mxu0
        %v3334 = vadd.f32 0.0, %v3333
        %v3335 = vpop.f32.mrb[0].mxu0
        %3336 = vmatprep.mubr.bf16.mxu0 0
        %3337 = vmatmul.mubr.bf16.gmra.mrb[0].mxu0 %v3271
        %v3338 = vpop.f32.mrb[0].mxu0
        %v3339 = vadd.f32 0.0, %v3338
        %v3340 = vpop.f32.mrb[0].mxu0
        %v3341 = vpop.f32.mrb[0].mxu0
        %v3342 = vadd.f32 0.0, %v3341
        %v3343 = vpop.f32.mrb[0].mxu0
        %3344 = vmatprep.mubr.bf16.mxu0 0
        %3345 = vmatmul.mubr.bf16.gmra.mrb[0].mxu0 %v3274
        %v3346 = vpop.f32.mrb[0].mxu0
        %v3347 = vadd.f32 0.0, %v3346
        %v3348 = vpop.f32.mrb[0].mxu0
        %v3349 = vpop.f32.mrb[0].mxu0
        %v3350 = vadd.f32 0.0, %v3349
        %v3351 = vpop.f32.mrb[0].mxu0
        %3352 = vmatprep.mubr.bf16.mxu0 0
        %3353 = vmatmul.mubr.bf16.gmra.mrb[0].mxu0 %v3277
        %v3354 = vpop.f32.mrb[0].mxu0
        %v3355 = vadd.f32 0.0, %v3354
        %v3356 = vpop.f32.mrb[0].mxu0
        %v3357 = vpop.f32.mrb[0].mxu0
        %v3358 = vadd.f32 0.0, %v3357
        %v3359 = vpop.f32.mrb[0].mxu0
        %3360 = vmatprep.mubr.bf16.mxu0 0
        %3361 = vmatmul.mubr.bf16.gmra.mrb[0].mxu0 %v3280
        %v3362 = vpop.f32.mrb[0].mxu0
        %v3363 = vadd.f32 0.0, %v3362
        %v3364 = vpop.f32.mrb[0].mxu0
        %v3365 = vpop.f32.mrb[0].mxu0
        %v3366 = vadd.f32 0.0, %v3365
        %v3367 = vpop.f32.mrb[0].mxu0
        %3368 = vmatprep.mubr.bf16.mxu0 0
        %3369 = vmatmul.mubr.bf16.gmra.mrb[0].mxu0 %v3283
        %v3370 = vpop.f32.mrb[0].mxu0
        %v3371 = vadd.f32 0.0, %v3370
        %v3372 = vpop.f32.mrb[0].mxu0
        %v3373 = vpop.f32.mrb[0].mxu0
        %v3374 = vadd.f32 0.0, %v3373
        %v3375 = vpop.f32.mrb[0].mxu0
        %3376 = vmatprep.mubr.bf16.mxu0 0
        %3377 = vmatmul.mubr.bf16.gmra.mrb[0].mxu0 %v3286
        %v3378 = vpop.f32.mrb[0].mxu0
        %v3379 = vadd.f32 0.0, %v3378
        %v3380 = vpop.f32.mrb[0].mxu0
        %v3381 = vpop.f32.mrb[0].mxu0
        %v3382 = vadd.f32 0.0, %v3381
        %v3383 = vpop.f32.mrb[0].mxu0
        %3384 = vdwg.mxu0
        %v3385 = vadd.f32 %v2773, %v3323
        %v3386 = vadd.f32 %v2774, %v3326
        %v3387 = vadd.f32 %v2775, %v3331
        %v3388 = vadd.f32 %v2776, %v3334
        %v3389 = vadd.f32 %v2777, %v3339
        %v3390 = vadd.f32 %v2778, %v3342
        %v3391 = vadd.f32 %v2779, %v3347
        %v3392 = vadd.f32 %v2780, %v3350
        %v3393 = vadd.f32 %v2781, %v3355
        %v3394 = vadd.f32 %v2782, %v3358
        %v3395 = vadd.f32 %v2783, %v3363
        %v3396 = vadd.f32 %v2784, %v3366
        %v3397 = vadd.f32 %v2785, %v3371
        %v3398 = vadd.f32 %v2786, %v3374
        %v3399 = vadd.f32 %v2787, %v3379
        %v3400 = vadd.f32 %v2788, %v3382
        %v3401 = vadd.f32 %v381, %v3385
        %v3402 = vadd.f32 %v382, %v3386
        %v3403 = vadd.f32 %v383, %v3387
        %v3404 = vadd.f32 %v384, %v3388
        %v3405 = vadd.f32 %v385, %v3389
        %v3406 = vadd.f32 %v386, %v3390
        %v3407 = vadd.f32 %v387, %v3391
        %v3408 = vadd.f32 %v388, %v3392
        %v3409 = vadd.f32 %v389, %v3393
        %v3410 = vadd.f32 %v390, %v3394
        %v3411 = vadd.f32 %v391, %v3395
        %v3412 = vadd.f32 %v392, %v3396
        %v3413 = vadd.f32 %v393, %v3397
        %v3414 = vadd.f32 %v394, %v3398
        %v3415 = vadd.f32 %v395, %v3399
        %v3416 = vadd.f32 %v396, %v3400
        %3417 = vadd.xlane.f32.xlu0 %v3401
        %v3418 = vpop.xlane.xlu0 %3417
        %3419 = vadd.xlane.f32.xlu0 %v3402
        %v3420 = vpop.xlane.xlu0 %3419
        %3421 = vadd.xlane.f32.xlu0 %v3403
        %v3422 = vpop.xlane.xlu0 %3421
        %3423 = vadd.xlane.f32.xlu0 %v3404
        %v3424 = vpop.xlane.xlu0 %3423
        %3425 = vadd.xlane.f32.xlu0 %v3405
        %v3426 = vpop.xlane.xlu0 %3425
        %3427 = vadd.xlane.f32.xlu0 %v3406
        %v3428 = vpop.xlane.xlu0 %3427
        %3429 = vadd.xlane.f32.xlu0 %v3407
        %v3430 = vpop.xlane.xlu0 %3429
        %3431 = vadd.xlane.f32.xlu0 %v3408
        %v3432 = vpop.xlane.xlu0 %3431
        %3433 = vadd.xlane.f32.xlu0 %v3409
        %v3434 = vpop.xlane.xlu0 %3433
        %3435 = vadd.xlane.f32.xlu0 %v3410
        %v3436 = vpop.xlane.xlu0 %3435
        %3437 = vadd.xlane.f32.xlu0 %v3411
        %v3438 = vpop.xlane.xlu0 %3437
        %3439 = vadd.xlane.f32.xlu0 %v3412
        %v3440 = vpop.xlane.xlu0 %3439
        %3441 = vadd.xlane.f32.xlu0 %v3413
        %v3442 = vpop.xlane.xlu0 %3441
        %3443 = vadd.xlane.f32.xlu0 %v3414
        %v3444 = vpop.xlane.xlu0 %3443
        %3445 = vadd.xlane.f32.xlu0 %v3415
        %v3446 = vpop.xlane.xlu0 %3445
        %3447 = vadd.xlane.f32.xlu0 %v3416
        %v3448 = vpop.xlane.xlu0 %3447
        %v3449 = vmul.f32 %v3418, %v430
        %v3450 = vmul.f32 %v3420, %v430
        %v3451 = vmul.f32 %v3422, %v430
        %v3452 = vmul.f32 %v3424, %v430
        %v3453 = vmul.f32 %v3426, %v430
        %v3454 = vmul.f32 %v3428, %v430
        %v3455 = vmul.f32 %v3430, %v430
        %v3456 = vmul.f32 %v3432, %v430
        %v3457 = vmul.f32 %v3434, %v430
        %v3458 = vmul.f32 %v3436, %v430
        %v3459 = vmul.f32 %v3438, %v430
        %v3460 = vmul.f32 %v3440, %v430
        %v3461 = vmul.f32 %v3442, %v430
        %v3462 = vmul.f32 %v3444, %v430
        %v3463 = vmul.f32 %v3446, %v430
        %v3464 = vmul.f32 %v3448, %v430
        %v3465 = vsub.f32 %v3401, %v3449
        %v3466 = vsub.f32 %v3402, %v3450
        %v3467 = vsub.f32 %v3403, %v3451
        %v3468 = vsub.f32 %v3404, %v3452
        %v3469 = vsub.f32 %v3405, %v3453
        %v3470 = vsub.f32 %v3406, %v3454
        %v3471 = vsub.f32 %v3407, %v3455
        %v3472 = vsub.f32 %v3408, %v3456
        %v3473 = vsub.f32 %v3409, %v3457
        %v3474 = vsub.f32 %v3410, %v3458
        %v3475 = vsub.f32 %v3411, %v3459
        %v3476 = vsub.f32 %v3412, %v3460
        %v3477 = vsub.f32 %v3413, %v3461
        %v3478 = vsub.f32 %v3414, %v3462
        %v3479 = vsub.f32 %v3415, %v3463
        %v3480 = vsub.f32 %v3416, %v3464
        %v3481 = vmul.f32 %v3465, %v3465
        %v3482 = vmul.f32 %v3466, %v3466
        %v3483 = vmul.f32 %v3467, %v3467
        %v3484 = vmul.f32 %v3468, %v3468
        %v3485 = vmul.f32 %v3469, %v3469
        %v3486 = vmul.f32 %v3470, %v3470
        %v3487 = vmul.f32 %v3471, %v3471
        %v3488 = vmul.f32 %v3472, %v3472
        %v3489 = vmul.f32 %v3473, %v3473
        %v3490 = vmul.f32 %v3474, %v3474
        %v3491 = vmul.f32 %v3475, %v3475
        %v3492 = vmul.f32 %v3476, %v3476
        %v3493 = vmul.f32 %v3477, %v3477
        %v3494 = vmul.f32 %v3478, %v3478
        %v3495 = vmul.f32 %v3479, %v3479
        %v3496 = vmul.f32 %v3480, %v3480
        %3497 = vadd.xlane.f32.xlu0 %v3481
        %v3498 = vpop.xlane.xlu0 %3497
        %3499 = vadd.xlane.f32.xlu0 %v3482
        %v3500 = vpop.xlane.xlu0 %3499
        %3501 = vadd.xlane.f32.xlu0 %v3483
        %v3502 = vpop.xlane.xlu0 %3501
        %3503 = vadd.xlane.f32.xlu0 %v3484
        %v3504 = vpop.xlane.xlu0 %3503
        %3505 = vadd.xlane.f32.xlu0 %v3485
        %v3506 = vpop.xlane.xlu0 %3505
        %3507 = vadd.xlane.f32.xlu0 %v3486
        %v3508 = vpop.xlane.xlu0 %3507
        %3509 = vadd.xlane.f32.xlu0 %v3487
        %v3510 = vpop.xlane.xlu0 %3509
        %3511 = vadd.xlane.f32.xlu0 %v3488
        %v3512 = vpop.xlane.xlu0 %3511
        %3513 = vadd.xlane.f32.xlu0 %v3489
        %v3514 = vpop.xlane.xlu0 %3513
        %3515 = vadd.xlane.f32.xlu0 %v3490
        %v3516 = vpop.xlane.xlu0 %3515
        %3517 = vadd.xlane.f32.xlu0 %v3491
        %v3518 = vpop.xlane.xlu0 %3517
        %3519 = vadd.xlane.f32.xlu0 %v3492
        %v3520 = vpop.xlane.xlu0 %3519
        %3521 = vadd.xlane.f32.xlu0 %v3493
        %v3522 = vpop.xlane.xlu0 %3521
        %3523 = vadd.xlane.f32.xlu0 %v3494
        %v3524 = vpop.xlane.xlu0 %3523
        %3525 = vadd.xlane.f32.xlu0 %v3495
        %v3526 = vpop.xlane.xlu0 %3525
        %3527 = vadd.xlane.f32.xlu0 %v3496
        %v3528 = vpop.xlane.xlu0 %3527
        %v3529 = vmul.f32 %v3498, %v430
        %v3530 = vmul.f32 %v3500, %v430
        %v3531 = vmul.f32 %v3502, %v430
        %v3532 = vmul.f32 %v3504, %v430
        %v3533 = vmul.f32 %v3506, %v430
        %v3534 = vmul.f32 %v3508, %v430
        %v3535 = vmul.f32 %v3510, %v430
        %v3536 = vmul.f32 %v3512, %v430
        %v3537 = vmul.f32 %v3514, %v430
        %v3538 = vmul.f32 %v3516, %v430
        %v3539 = vmul.f32 %v3518, %v430
        %v3540 = vmul.f32 %v3520, %v430
        %v3541 = vmul.f32 %v3522, %v430
        %v3542 = vmul.f32 %v3524, %v430
        %v3543 = vmul.f32 %v3526, %v430
        %v3544 = vmul.f32 %v3528, %v430
        %v3545 = vadd.f32 %v3529, 1e-05
        %v3546 = vadd.f32 %v3530, 1e-05
        %v3547 = vadd.f32 %v3531, 1e-05
        %v3548 = vadd.f32 %v3532, 1e-05
        %v3549 = vadd.f32 %v3533, 1e-05
        %v3550 = vadd.f32 %v3534, 1e-05
        %v3551 = vadd.f32 %v3535, 1e-05
        %v3552 = vadd.f32 %v3536, 1e-05
        %v3553 = vadd.f32 %v3537, 1e-05
        %v3554 = vadd.f32 %v3538, 1e-05
        %v3555 = vadd.f32 %v3539, 1e-05
        %v3556 = vadd.f32 %v3540, 1e-05
        %v3557 = vadd.f32 %v3541, 1e-05
        %v3558 = vadd.f32 %v3542, 1e-05
        %v3559 = vadd.f32 %v3543, 1e-05
        %v3560 = vadd.f32 %v3544, 1e-05
        %v3561 = vrsqrt.pop %v3545
        %v3562 = vrsqrt.pop %v3546
        %v3563 = vrsqrt.pop %v3547
        %v3564 = vrsqrt.pop %v3548
        %v3565 = vrsqrt.pop %v3549
        %v3566 = vrsqrt.pop %v3550
        %v3567 = vrsqrt.pop %v3551
        %v3568 = vrsqrt.pop %v3552
        %v3569 = vrsqrt.pop %v3553
        %v3570 = vrsqrt.pop %v3554
        %v3571 = vrsqrt.pop %v3555
        %v3572 = vrsqrt.pop %v3556
        %v3573 = vrsqrt.pop %v3557
        %v3574 = vrsqrt.pop %v3558
        %v3575 = vrsqrt.pop %v3559
        %v3576 = vrsqrt.pop %v3560
        %v3577 = vmul.f32 %v3465, %v3561
        %v3578 = vmul.f32 %v3466, %v3562
        %v3579 = vmul.f32 %v3467, %v3563
        %v3580 = vmul.f32 %v3468, %v3564
        %v3581 = vmul.f32 %v3469, %v3565
        %v3582 = vmul.f32 %v3470, %v3566
        %v3583 = vmul.f32 %v3471, %v3567
        %v3584 = vmul.f32 %v3472, %v3568
        %v3585 = vmul.f32 %v3473, %v3569
        %v3586 = vmul.f32 %v3474, %v3570
        %v3587 = vmul.f32 %v3475, %v3571
        %v3588 = vmul.f32 %v3476, %v3572
        %v3589 = vmul.f32 %v3477, %v3573
        %v3590 = vmul.f32 %v3478, %v3574
        %v3591 = vmul.f32 %v3479, %v3575
        %v3592 = vmul.f32 %v3480, %v3576
        %v3593 = vlaneseq
        %v3594 = vshrl.u32 %v3593, 7
        %v3595 = vsub.s32 2, %v3594
        %v3596 = vrot.slane %v397, %v3595
        %v3597 = vmul.f32 %v3577, %v3596
        %v3598 = vmul.f32 %v3578, %v3596
        %v3599 = vmul.f32 %v3579, %v3596
        %v3600 = vmul.f32 %v3580, %v3596
        %v3601 = vmul.f32 %v3581, %v3596
        %v3602 = vmul.f32 %v3582, %v3596
        %v3603 = vmul.f32 %v3583, %v3596
        %v3604 = vmul.f32 %v3584, %v3596
        %v3605 = vmul.f32 %v3585, %v3596
        %v3606 = vmul.f32 %v3586, %v3596
        %v3607 = vmul.f32 %v3587, %v3596
        %v3608 = vmul.f32 %v3588, %v3596
        %v3609 = vmul.f32 %v3589, %v3596
        %v3610 = vmul.f32 %v3590, %v3596
        %v3611 = vmul.f32 %v3591, %v3596
        %v3612 = vmul.f32 %v3592, %v3596
        %v3613 = vlaneseq
        %v3614 = vshrl.u32 %v3613, 7
        %v3615 = vsub.s32 3, %v3614
        %v3616 = vrot.slane %v397, %v3615
        %v3617 = vadd.f32 %v3597, %v3616
        %v3618 = vadd.f32 %v3598, %v3616
        %v3619 = vadd.f32 %v3599, %v3616
        %v3620 = vadd.f32 %v3600, %v3616
        %v3621 = vadd.f32 %v3601, %v3616
        %v3622 = vadd.f32 %v3602, %v3616
        %v3623 = vadd.f32 %v3603, %v3616
        %v3624 = vadd.f32 %v3604, %v3616
        %v3625 = vadd.f32 %v3605, %v3616
        %v3626 = vadd.f32 %v3606, %v3616
        %v3627 = vadd.f32 %v3607, %v3616
        %v3628 = vadd.f32 %v3608, %v3616
        %v3629 = vadd.f32 %v3609, %v3616
        %v3630 = vadd.f32 %v3610, %v3616
        %v3631 = vadd.f32 %v3611, %v3616
        %v3632 = vadd.f32 %v3612, %v3616
        %v3633 = vpack.c.bf16 %v3618, %v3617
        %v3634 = vpack.c.bf16 %v3620, %v3619
        %v3635 = vpack.c.bf16 %v3622, %v3621
        %v3636 = vpack.c.bf16 %v3624, %v3623
        %v3637 = vpack.c.bf16 %v3626, %v3625
        %v3638 = vpack.c.bf16 %v3628, %v3627
        %v3639 = vpack.c.bf16 %v3630, %v3629
        %v3640 = vpack.c.bf16 %v3632, %v3631
        %v3641 = vld [vmem:[#allocation11] sm:$0xff]
        %v3642 = vld [vmem:[#allocation11 + $0x8] sm:$0xff]
        %v3643 = vld [vmem:[#allocation11 + $0x10] sm:$0xff]
        %v3644 = vld [vmem:[#allocation11 + $0x18] sm:$0xff]
        %v3645 = vld [vmem:[#allocation11 + $0x20] sm:$0xff]
        %v3646 = vld [vmem:[#allocation11 + $0x28] sm:$0xff]
        %v3647 = vld [vmem:[#allocation11 + $0x30] sm:$0xff]
        %v3648 = vld [vmem:[#allocation11 + $0x38] sm:$0xff]
        %v3649 = vld [vmem:[#allocation11 + $0x40] sm:$0xff]
        %v3650 = vld [vmem:[#allocation11 + $0x48] sm:$0xff]
        %v3651 = vld [vmem:[#allocation11 + $0x50] sm:$0xff]
        %v3652 = vld [vmem:[#allocation11 + $0x58] sm:$0xff]
        %v3653 = vld [vmem:[#allocation11 + $0x60] sm:$0xff]
        %v3654 = vld [vmem:[#allocation11 + $0x68] sm:$0xff]
        %v3655 = vld [vmem:[#allocation11 + $0x70] sm:$0xff]
        %v3656 = vld [vmem:[#allocation11 + $0x78] sm:$0xff]
        %v3657 = vld [vmem:[#allocation11 + $0x80] sm:$0xff]
        %v3658 = vld [vmem:[#allocation11 + $0x88] sm:$0xff]
        %v3659 = vld [vmem:[#allocation11 + $0x90] sm:$0xff]
        %v3660 = vld [vmem:[#allocation11 + $0x98] sm:$0xff]
        %v3661 = vld [vmem:[#allocation11 + $0xa0] sm:$0xff]
        %v3662 = vld [vmem:[#allocation11 + $0xa8] sm:$0xff]
        %v3663 = vld [vmem:[#allocation11 + $0xb0] sm:$0xff]
        %v3664 = vld [vmem:[#allocation11 + $0xb8] sm:$0xff]
        %v3665 = vld [vmem:[#allocation11 + $0xc0] sm:$0xff]
        %v3666 = vld [vmem:[#allocation11 + $0xc8] sm:$0xff]
        %v3667 = vld [vmem:[#allocation11 + $0xd0] sm:$0xff]
        %v3668 = vld [vmem:[#allocation11 + $0xd8] sm:$0xff]
        %v3669 = vld [vmem:[#allocation11 + $0xe0] sm:$0xff]
        %v3670 = vld [vmem:[#allocation11 + $0xe8] sm:$0xff]
        %v3671 = vld [vmem:[#allocation11 + $0xf0] sm:$0xff]
        %v3672 = vld [vmem:[#allocation11 + $0xf8] sm:$0xff]
        %v3673 = vld [vmem:[#allocation7] sm:$0xf]
        %v3675 = vlaneseq
        %v3676 = vshrl.u32 %v3675, 7
        %v3677 = vsub.s32 0, %v3676
        %v3678 = vrot.slane %v3673, %v3677
        %v3679 = vlaneseq
        %v3680 = vshrl.u32 %v3679, 7
        %v3681 = vsub.s32 1, %v3680
        %v3682 = vrot.slane %v3673, %v3681
        %v3683 = vlaneseq
        %v3684 = vshrl.u32 %v3683, 7
        %v3685 = vsub.s32 2, %v3684
        %v3686 = vrot.slane %v3673, %v3685
        %v3687 = vlaneseq
        %v3688 = vshrl.u32 %v3687, 7
        %v3689 = vsub.s32 3, %v3688
        %v3690 = vrot.slane %v3673, %v3689
        %v3727 = vunpack.c.l.b16 %v3641
        %v3728 = vunpack.c.h.b16 %v3641
        %v3729 = vunpack.c.l.b16 %v3642
        %v3730 = vunpack.c.h.b16 %v3642
        %v3731 = vunpack.c.l.b16 %v3643
        %v3732 = vunpack.c.h.b16 %v3643
        %v3733 = vunpack.c.l.b16 %v3644
        %v3734 = vunpack.c.h.b16 %v3644
        %v3735 = vunpack.c.l.b16 %v3645
        %v3736 = vunpack.c.h.b16 %v3645
        %v3737 = vunpack.c.l.b16 %v3646
        %v3738 = vunpack.c.h.b16 %v3646
        %v3739 = vunpack.c.l.b16 %v3647
        %v3740 = vunpack.c.h.b16 %v3647
        %v3741 = vunpack.c.l.b16 %v3648
        %v3742 = vunpack.c.h.b16 %v3648
        %v3743 = vunpack.c.l.b16 %v3649
        %v3744 = vunpack.c.h.b16 %v3649
        %v3745 = vunpack.c.l.b16 %v3650
        %v3746 = vunpack.c.h.b16 %v3650
        %v3747 = vunpack.c.l.b16 %v3651
        %v3748 = vunpack.c.h.b16 %v3651
        %v3749 = vunpack.c.l.b16 %v3652
        %v3750 = vunpack.c.h.b16 %v3652
        %v3751 = vunpack.c.l.b16 %v3653
        %v3752 = vunpack.c.h.b16 %v3653
        %v3753 = vunpack.c.l.b16 %v3654
        %v3754 = vunpack.c.h.b16 %v3654
        %v3755 = vunpack.c.l.b16 %v3655
        %v3756 = vunpack.c.h.b16 %v3655
        %v3757 = vunpack.c.l.b16 %v3656
        %v3758 = vunpack.c.h.b16 %v3656
        %v3759 = vunpack.c.l.b16 %v3657
        %v3760 = vunpack.c.h.b16 %v3657
        %v3761 = vunpack.c.l.b16 %v3658
        %v3762 = vunpack.c.h.b16 %v3658
        %v3763 = vunpack.c.l.b16 %v3659
        %v3764 = vunpack.c.h.b16 %v3659
        %v3765 = vunpack.c.l.b16 %v3660
        %v3766 = vunpack.c.h.b16 %v3660
        %v3767 = vunpack.c.l.b16 %v3661
        %v3768 = vunpack.c.h.b16 %v3661
        %v3769 = vunpack.c.l.b16 %v3662
        %v3770 = vunpack.c.h.b16 %v3662
        %v3771 = vunpack.c.l.b16 %v3663
        %v3772 = vunpack.c.h.b16 %v3663
        %v3773 = vunpack.c.l.b16 %v3664
        %v3774 = vunpack.c.h.b16 %v3664
        %v3775 = vunpack.c.l.b16 %v3665
        %v3776 = vunpack.c.h.b16 %v3665
        %v3777 = vunpack.c.l.b16 %v3666
        %v3778 = vunpack.c.h.b16 %v3666
        %v3779 = vunpack.c.l.b16 %v3667
        %v3780 = vunpack.c.h.b16 %v3667
        %v3781 = vunpack.c.l.b16 %v3668
        %v3782 = vunpack.c.h.b16 %v3668
        %v3783 = vunpack.c.l.b16 %v3669
        %v3784 = vunpack.c.h.b16 %v3669
        %v3785 = vunpack.c.l.b16 %v3670
        %v3786 = vunpack.c.h.b16 %v3670
        %v3787 = vunpack.c.l.b16 %v3671
        %v3788 = vunpack.c.h.b16 %v3671
        %v3789 = vunpack.c.l.b16 %v3672
        %v3790 = vunpack.c.h.b16 %v3672
        %v3791 = vpack.c.b16 %v3731, %v3727
        %v3792 = vpack.c.b16 %v3732, %v3728
        %v3793 = vpack.c.b16 %v3733, %v3729
        %v3794 = vpack.c.b16 %v3734, %v3730
        %v3795 = vpack.c.b16 %v3739, %v3735
        %v3796 = vpack.c.b16 %v3740, %v3736
        %v3797 = vpack.c.b16 %v3741, %v3737
        %v3798 = vpack.c.b16 %v3742, %v3738
        %v3799 = vpack.c.b16 %v3747, %v3743
        %v3800 = vpack.c.b16 %v3748, %v3744
        %v3801 = vpack.c.b16 %v3749, %v3745
        %v3802 = vpack.c.b16 %v3750, %v3746
        %v3803 = vpack.c.b16 %v3755, %v3751
        %v3804 = vpack.c.b16 %v3756, %v3752
        %v3805 = vpack.c.b16 %v3757, %v3753
        %v3806 = vpack.c.b16 %v3758, %v3754
        %v3807 = vpack.c.b16 %v3763, %v3759
        %v3808 = vpack.c.b16 %v3764, %v3760
        %v3809 = vpack.c.b16 %v3765, %v3761
        %v3810 = vpack.c.b16 %v3766, %v3762
        %v3811 = vpack.c.b16 %v3771, %v3767
        %v3812 = vpack.c.b16 %v3772, %v3768
        %v3813 = vpack.c.b16 %v3773, %v3769
        %v3814 = vpack.c.b16 %v3774, %v3770
        %v3815 = vpack.c.b16 %v3779, %v3775
        %v3816 = vpack.c.b16 %v3780, %v3776
        %v3817 = vpack.c.b16 %v3781, %v3777
        %v3818 = vpack.c.b16 %v3782, %v3778
        %v3819 = vpack.c.b16 %v3787, %v3783
        %v3820 = vpack.c.b16 %v3788, %v3784
        %v3821 = vpack.c.b16 %v3789, %v3785
        %v3822 = vpack.c.b16 %v3790, %v3786
        %3855 = vmatprep.subr.bf16.mxu0 %v3792
        %3856 = vmatpush1.bf16.msra.mxu0 %v3791
        %3857 = vmatprep.subr.bf16.mxu0 %v3796
        %3858 = vmatpush1.bf16.msra.mxu0 %v3795
        %3859 = vmatprep.subr.bf16.mxu0 %v3800
        %3860 = vmatpush1.bf16.msra.mxu0 %v3799
        %3861 = vmatprep.subr.bf16.mxu0 %v3804
        %3862 = vmatpush1.bf16.msra.mxu0 %v3803
        %3863 = vmatprep.subr.bf16.mxu0 %v3808
        %3864 = vmatpush1.bf16.msra.mxu0 %v3807
        %3865 = vmatprep.subr.bf16.mxu0 %v3812
        %3866 = vmatpush1.bf16.msra.mxu0 %v3811
        %3867 = vmatprep.subr.bf16.mxu0 %v3816
        %3868 = vmatpush1.bf16.msra.mxu0 %v3815
        %3869 = vmatprep.subr.bf16.mxu0 %v3820
        %3870 = vmatpush1.bf16.msra.mxu0 %v3819
        %3871 = vmatprep.subr.bf16.mxu0 0
        %3872 = vmatpush1.bf16.msra.mxu0 0
        %3873 = vmatprep.subr.bf16.mxu0 0
        %3874 = vmatpush1.bf16.msra.mxu0 0
        %3875 = vmatprep.subr.bf16.mxu0 0
        %3876 = vmatpush1.bf16.msra.mxu0 0
        %3877 = vmatprep.subr.bf16.mxu0 0
        %3878 = vmatpush1.bf16.msra.mxu0 0
        %3879 = vmatprep.subr.bf16.mxu0 0
        %3880 = vmatpush1.bf16.msra.mxu0 0
        %3881 = vmatprep.subr.bf16.mxu0 0
        %3882 = vmatpush1.bf16.msra.mxu0 0
        %3883 = vmatprep.subr.bf16.mxu0 0
        %3884 = vmatpush1.bf16.msra.mxu0 0
        %3885 = vmatprep.subr.bf16.mxu0 0
        %3886 = vmatpush1.bf16.msra.mxu0 0
        %3887 = vmatprep.mubr.bf16.mxu0 0
        %3888 = vmatmul.mubr.bf16.gmra.mrb[0].mxu0 %v3633
        %v3889 = vpop.f32.mrb[0].mxu0
        %v3890 = vadd.f32 %v3678, %v3889
        %v3891 = vpop.f32.mrb[0].mxu0
        %v3892 = vadd.f32 %v3682, %v3891
        %v3893 = vpop.f32.mrb[0].mxu0
        %v3894 = vadd.f32 %v3678, %v3893
        %v3895 = vpop.f32.mrb[0].mxu0
        %v3896 = vadd.f32 %v3682, %v3895
        %3897 = vmatprep.mubr.bf16.mxu0 0
        %3898 = vmatmul.mubr.bf16.gmra.mrb[0].mxu0 %v3634
        %v3899 = vpop.f32.mrb[0].mxu0
        %v3900 = vadd.f32 %v3678, %v3899
        %v3901 = vpop.f32.mrb[0].mxu0
        %v3902 = vadd.f32 %v3682, %v3901
        %v3903 = vpop.f32.mrb[0].mxu0
        %v3904 = vadd.f32 %v3678, %v3903
        %v3905 = vpop.f32.mrb[0].mxu0
        %v3906 = vadd.f32 %v3682, %v3905
        %3907 = vmatprep.mubr.bf16.mxu0 0
        %3908 = vmatmul.mubr.bf16.gmra.mrb[0].mxu0 %v3635
        %v3909 = vpop.f32.mrb[0].mxu0
        %v3910 = vadd.f32 %v3678, %v3909
        %v3911 = vpop.f32.mrb[0].mxu0
        %v3912 = vadd.f32 %v3682, %v3911
        %v3913 = vpop.f32.mrb[0].mxu0
        %v3914 = vadd.f32 %v3678, %v3913
        %v3915 = vpop.f32.mrb[0].mxu0
        %v3916 = vadd.f32 %v3682, %v3915
        %3917 = vmatprep.mubr.bf16.mxu0 0
        %3918 = vmatmul.mubr.bf16.gmra.mrb[0].mxu0 %v3636
        %v3919 = vpop.f32.mrb[0].mxu0
        %v3920 = vadd.f32 %v3678, %v3919
        %v3921 = vpop.f32.mrb[0].mxu0
        %v3922 = vadd.f32 %v3682, %v3921
        %v3923 = vpop.f32.mrb[0].mxu0
        %v3924 = vadd.f32 %v3678, %v3923
        %v3925 = vpop.f32.mrb[0].mxu0
        %v3926 = vadd.f32 %v3682, %v3925
        %3927 = vmatprep.mubr.bf16.mxu0 0
        %3928 = vmatmul.mubr.bf16.gmra.mrb[0].mxu0 %v3637
        %v3929 = vpop.f32.mrb[0].mxu0
        %v3930 = vadd.f32 %v3678, %v3929
        %v3931 = vpop.f32.mrb[0].mxu0
        %v3932 = vadd.f32 %v3682, %v3931
        %v3933 = vpop.f32.mrb[0].mxu0
        %v3934 = vadd.f32 %v3678, %v3933
        %v3935 = vpop.f32.mrb[0].mxu0
        %v3936 = vadd.f32 %v3682, %v3935
        %3937 = vmatprep.mubr.bf16.mxu0 0
        %3938 = vmatmul.mubr.bf16.gmra.mrb[0].mxu0 %v3638
        %v3939 = vpop.f32.mrb[0].mxu0
        %v3940 = vadd.f32 %v3678, %v3939
        %v3941 = vpop.f32.mrb[0].mxu0
        %v3942 = vadd.f32 %v3682, %v3941
        %v3943 = vpop.f32.mrb[0].mxu0
        %v3944 = vadd.f32 %v3678, %v3943
        %v3945 = vpop.f32.mrb[0].mxu0
        %v3946 = vadd.f32 %v3682, %v3945
        %3947 = vmatprep.mubr.bf16.mxu0 0
        %3948 = vmatmul.mubr.bf16.gmra.mrb[0].mxu0 %v3639
        %v3949 = vpop.f32.mrb[0].mxu0
        %v3950 = vadd.f32 %v3678, %v3949
        %v3951 = vpop.f32.mrb[0].mxu0
        %v3952 = vadd.f32 %v3682, %v3951
        %v3953 = vpop.f32.mrb[0].mxu0
        %v3954 = vadd.f32 %v3678, %v3953
        %v3955 = vpop.f32.mrb[0].mxu0
        %v3956 = vadd.f32 %v3682, %v3955
        %3957 = vmatprep.mubr.bf16.mxu0 0
        %3958 = vmatmul.mubr.bf16.gmra.mrb[0].mxu0 %v3640
        %v3959 = vpop.f32.mrb[0].mxu0
        %v3960 = vadd.f32 %v3678, %v3959
        %v3961 = vpop.f32.mrb[0].mxu0
        %v3962 = vadd.f32 %v3682, %v3961
        %v3963 = vpop.f32.mrb[0].mxu0
        %v3964 = vadd.f32 %v3678, %v3963
        %v3965 = vpop.f32.mrb[0].mxu0
        %v3966 = vadd.f32 %v3682, %v3965
        %3967 = vdwg.mxu0
        %3968 = vmatprep.subr.bf16.mxu0 %v3794
        %3969 = vmatpush1.bf16.msra.mxu0 %v3793
        %3970 = vmatprep.subr.bf16.mxu0 %v3798
        %3971 = vmatpush1.bf16.msra.mxu0 %v3797
        %3972 = vmatprep.subr.bf16.mxu0 %v3802
        %3973 = vmatpush1.bf16.msra.mxu0 %v3801
        %3974 = vmatprep.subr.bf16.mxu0 %v3806
        %3975 = vmatpush1.bf16.msra.mxu0 %v3805
        %3976 = vmatprep.subr.bf16.mxu0 %v3810
        %3977 = vmatpush1.bf16.msra.mxu0 %v3809
        %3978 = vmatprep.subr.bf16.mxu0 %v3814
        %3979 = vmatpush1.bf16.msra.mxu0 %v3813
        %3980 = vmatprep.subr.bf16.mxu0 %v3818
        %3981 = vmatpush1.bf16.msra.mxu0 %v3817
        %3982 = vmatprep.subr.bf16.mxu0 %v3822
        %3983 = vmatpush1.bf16.msra.mxu0 %v3821
        %3984 = vmatprep.subr.bf16.mxu0 0
        %3985 = vmatpush1.bf16.msra.mxu0 0
        %3986 = vmatprep.subr.bf16.mxu0 0
        %3987 = vmatpush1.bf16.msra.mxu0 0
        %3988 = vmatprep.subr.bf16.mxu0 0
        %3989 = vmatpush1.bf16.msra.mxu0 0
        %3990 = vmatprep.subr.bf16.mxu0 0
        %3991 = vmatpush1.bf16.msra.mxu0 0
        %3992 = vmatprep.subr.bf16.mxu0 0
        %3993 = vmatpush1.bf16.msra.mxu0 0
        %3994 = vmatprep.subr.bf16.mxu0 0
        %3995 = vmatpush1.bf16.msra.mxu0 0
        %3996 = vmatprep.subr.bf16.mxu0 0
        %3997 = vmatpush1.bf16.msra.mxu0 0
        %3998 = vmatprep.subr.bf16.mxu0 0
        %3999 = vmatpush1.bf16.msra.mxu0 0
        %4000 = vmatprep.mubr.bf16.mxu0 0
        %4001 = vmatmul.mubr.bf16.gmra.mrb[0].mxu0 %v3633
        %v4002 = vpop.f32.mrb[0].mxu0
        %v4003 = vadd.f32 %v3686, %v4002
        %v4004 = vpop.f32.mrb[0].mxu0
        %v4005 = vadd.f32 %v3690, %v4004
        %v4006 = vpop.f32.mrb[0].mxu0
        %v4007 = vadd.f32 %v3686, %v4006
        %v4008 = vpop.f32.mrb[0].mxu0
        %v4009 = vadd.f32 %v3690, %v4008
        %4010 = vmatprep.mubr.bf16.mxu0 0
        %4011 = vmatmul.mubr.bf16.gmra.mrb[0].mxu0 %v3634
        %v4012 = vpop.f32.mrb[0].mxu0
        %v4013 = vadd.f32 %v3686, %v4012
        %v4014 = vpop.f32.mrb[0].mxu0
        %v4015 = vadd.f32 %v3690, %v4014
        %v4016 = vpop.f32.mrb[0].mxu0
        %v4017 = vadd.f32 %v3686, %v4016
        %v4018 = vpop.f32.mrb[0].mxu0
        %v4019 = vadd.f32 %v3690, %v4018
        %4020 = vmatprep.mubr.bf16.mxu0 0
        %4021 = vmatmul.mubr.bf16.gmra.mrb[0].mxu0 %v3635
        %v4022 = vpop.f32.mrb[0].mxu0
        %v4023 = vadd.f32 %v3686, %v4022
        %v4024 = vpop.f32.mrb[0].mxu0
        %v4025 = vadd.f32 %v3690, %v4024
        %v4026 = vpop.f32.mrb[0].mxu0
        %v4027 = vadd.f32 %v3686, %v4026
        %v4028 = vpop.f32.mrb[0].mxu0
        %v4029 = vadd.f32 %v3690, %v4028
        %4030 = vmatprep.mubr.bf16.mxu0 0
        %4031 = vmatmul.mubr.bf16.gmra.mrb[0].mxu0 %v3636
        %v4032 = vpop.f32.mrb[0].mxu0
        %v4033 = vadd.f32 %v3686, %v4032
        %v4034 = vpop.f32.mrb[0].mxu0
        %v4035 = vadd.f32 %v3690, %v4034
        %v4036 = vpop.f32.mrb[0].mxu0
        %v4037 = vadd.f32 %v3686, %v4036
        %v4038 = vpop.f32.mrb[0].mxu0
        %v4039 = vadd.f32 %v3690, %v4038
        %4040 = vmatprep.mubr.bf16.mxu0 0
        %4041 = vmatmul.mubr.bf16.gmra.mrb[0].mxu0 %v3637
        %v4042 = vpop.f32.mrb[0].mxu0
        %v4043 = vadd.f32 %v3686, %v4042
        %v4044 = vpop.f32.mrb[0].mxu0
        %v4045 = vadd.f32 %v3690, %v4044
        %v4046 = vpop.f32.mrb[0].mxu0
        %v4047 = vadd.f32 %v3686, %v4046
        %v4048 = vpop.f32.mrb[0].mxu0
        %v4049 = vadd.f32 %v3690, %v4048
        %4050 = vmatprep.mubr.bf16.mxu0 0
        %4051 = vmatmul.mubr.bf16.gmra.mrb[0].mxu0 %v3638
        %v4052 = vpop.f32.mrb[0].mxu0
        %v4053 = vadd.f32 %v3686, %v4052
        %v4054 = vpop.f32.mrb[0].mxu0
        %v4055 = vadd.f32 %v3690, %v4054
        %v4056 = vpop.f32.mrb[0].mxu0
        %v4057 = vadd.f32 %v3686, %v4056
        %v4058 = vpop.f32.mrb[0].mxu0
        %v4059 = vadd.f32 %v3690, %v4058
        %4060 = vmatprep.mubr.bf16.mxu0 0
        %4061 = vmatmul.mubr.bf16.gmra.mrb[0].mxu0 %v3639
        %v4062 = vpop.f32.mrb[0].mxu0
        %v4063 = vadd.f32 %v3686, %v4062
        %v4064 = vpop.f32.mrb[0].mxu0
        %v4065 = vadd.f32 %v3690, %v4064
        %v4066 = vpop.f32.mrb[0].mxu0
        %v4067 = vadd.f32 %v3686, %v4066
        %v4068 = vpop.f32.mrb[0].mxu0
        %v4069 = vadd.f32 %v3690, %v4068
        %4070 = vmatprep.mubr.bf16.mxu0 0
        %4071 = vmatmul.mubr.bf16.gmra.mrb[0].mxu0 %v3640
        %v4072 = vpop.f32.mrb[0].mxu0
        %v4073 = vadd.f32 %v3686, %v4072
        %v4074 = vpop.f32.mrb[0].mxu0
        %v4075 = vadd.f32 %v3690, %v4074
        %v4076 = vpop.f32.mrb[0].mxu0
        %v4077 = vadd.f32 %v3686, %v4076
        %v4078 = vpop.f32.mrb[0].mxu0
        %v4079 = vadd.f32 %v3690, %v4078
        %4080 = vdwg.mxu0
        %v4081 = vmul.f32 %v3890, 0.5
        %v4082 = vmul.f32 %v3892, 0.5
        %v4083 = vmul.f32 %v4003, 0.5
        %v4084 = vmul.f32 %v4005, 0.5
        %v4085 = vmul.f32 %v3894, 0.5
        %v4086 = vmul.f32 %v3896, 0.5
        %v4087 = vmul.f32 %v4007, 0.5
        %v4088 = vmul.f32 %v4009, 0.5
        %v4089 = vmul.f32 %v3900, 0.5
        %v4090 = vmul.f32 %v3902, 0.5
        %v4091 = vmul.f32 %v4013, 0.5
        %v4092 = vmul.f32 %v4015, 0.5
        %v4093 = vmul.f32 %v3904, 0.5
        %v4094 = vmul.f32 %v3906, 0.5
        %v4095 = vmul.f32 %v4017, 0.5
        %v4096 = vmul.f32 %v4019, 0.5
        %v4097 = vmul.f32 %v3910, 0.5
        %v4098 = vmul.f32 %v3912, 0.5
        %v4099 = vmul.f32 %v4023, 0.5
        %v4100 = vmul.f32 %v4025, 0.5
        %v4101 = vmul.f32 %v3914, 0.5
        %v4102 = vmul.f32 %v3916, 0.5
        %v4103 = vmul.f32 %v4027, 0.5
        %v4104 = vmul.f32 %v4029, 0.5
        %v4105 = vmul.f32 %v3920, 0.5
        %v4106 = vmul.f32 %v3922, 0.5
        %v4107 = vmul.f32 %v4033, 0.5
        %v4108 = vmul.f32 %v4035, 0.5
        %v4109 = vmul.f32 %v3924, 0.5
        %v4110 = vmul.f32 %v3926, 0.5
        %v4111 = vmul.f32 %v4037, 0.5
        %v4112 = vmul.f32 %v4039, 0.5
        %v4113 = vmul.f32 %v3930, 0.5
        %v4114 = vmul.f32 %v3932, 0.5
        %v4115 = vmul.f32 %v4043, 0.5
        %v4116 = vmul.f32 %v4045, 0.5
        %v4117 = vmul.f32 %v3934, 0.5
        %v4118 = vmul.f32 %v3936, 0.5
        %v4119 = vmul.f32 %v4047, 0.5
        %v4120 = vmul.f32 %v4049, 0.5
        %v4121 = vmul.f32 %v3940, 0.5
        %v4122 = vmul.f32 %v3942, 0.5
        %v4123 = vmul.f32 %v4053, 0.5
        %v4124 = vmul.f32 %v4055, 0.5
        %v4125 = vmul.f32 %v3944, 0.5
        %v4126 = vmul.f32 %v3946, 0.5
        %v4127 = vmul.f32 %v4057, 0.5
        %v4128 = vmul.f32 %v4059, 0.5
        %v4129 = vmul.f32 %v3950, 0.5
        %v4130 = vmul.f32 %v3952, 0.5
        %v4131 = vmul.f32 %v4063, 0.5
        %v4132 = vmul.f32 %v4065, 0.5
        %v4133 = vmul.f32 %v3954, 0.5
        %v4134 = vmul.f32 %v3956, 0.5
        %v4135 = vmul.f32 %v4067, 0.5
        %v4136 = vmul.f32 %v4069, 0.5
        %v4137 = vmul.f32 %v3960, 0.5
        %v4138 = vmul.f32 %v3962, 0.5
        %v4139 = vmul.f32 %v4073, 0.5
        %v4140 = vmul.f32 %v4075, 0.5
        %v4141 = vmul.f32 %v3964, 0.5
        %v4142 = vmul.f32 %v3966, 0.5
        %v4143 = vmul.f32 %v4077, 0.5
        %v4144 = vmul.f32 %v4079, 0.5
        %v4145 = vmul.f32 %v3890, %v3890
        %v4146 = vmul.f32 %v3892, %v3892
        %v4147 = vmul.f32 %v4003, %v4003
        %v4148 = vmul.f32 %v4005, %v4005
        %v4149 = vmul.f32 %v3894, %v3894
        %v4150 = vmul.f32 %v3896, %v3896
        %v4151 = vmul.f32 %v4007, %v4007
        %v4152 = vmul.f32 %v4009, %v4009
        %v4153 = vmul.f32 %v3900, %v3900
        %v4154 = vmul.f32 %v3902, %v3902
        %v4155 = vmul.f32 %v4013, %v4013
        %v4156 = vmul.f32 %v4015, %v4015
        %v4157 = vmul.f32 %v3904, %v3904
        %v4158 = vmul.f32 %v3906, %v3906
        %v4159 = vmul.f32 %v4017, %v4017
        %v4160 = vmul.f32 %v4019, %v4019
        %v4161 = vmul.f32 %v3910, %v3910
        %v4162 = vmul.f32 %v3912, %v3912
        %v4163 = vmul.f32 %v4023, %v4023
        %v4164 = vmul.f32 %v4025, %v4025
        %v4165 = vmul.f32 %v3914, %v3914
        %v4166 = vmul.f32 %v3916, %v3916
        %v4167 = vmul.f32 %v4027, %v4027
        %v4168 = vmul.f32 %v4029, %v4029
        %v4169 = vmul.f32 %v3920, %v3920
        %v4170 = vmul.f32 %v3922, %v3922
        %v4171 = vmul.f32 %v4033, %v4033
        %v4172 = vmul.f32 %v4035, %v4035
        %v4173 = vmul.f32 %v3924, %v3924
        %v4174 = vmul.f32 %v3926, %v3926
        %v4175 = vmul.f32 %v4037, %v4037
        %v4176 = vmul.f32 %v4039, %v4039
        %v4177 = vmul.f32 %v3930, %v3930
        %v4178 = vmul.f32 %v3932, %v3932
        %v4179 = vmul.f32 %v4043, %v4043
        %v4180 = vmul.f32 %v4045, %v4045
        %v4181 = vmul.f32 %v3934, %v3934
        %v4182 = vmul.f32 %v3936, %v3936
        %v4183 = vmul.f32 %v4047, %v4047
        %v4184 = vmul.f32 %v4049, %v4049
        %v4185 = vmul.f32 %v3940, %v3940
        %v4186 = vmul.f32 %v3942, %v3942
        %v4187 = vmul.f32 %v4053, %v4053
        %v4188 = vmul.f32 %v4055, %v4055
        %v4189 = vmul.f32 %v3944, %v3944
        %v4190 = vmul.f32 %v3946, %v3946
        %v4191 = vmul.f32 %v4057, %v4057
        %v4192 = vmul.f32 %v4059, %v4059
        %v4193 = vmul.f32 %v3950, %v3950
        %v4194 = vmul.f32 %v3952, %v3952
        %v4195 = vmul.f32 %v4063, %v4063
        %v4196 = vmul.f32 %v4065, %v4065
        %v4197 = vmul.f32 %v3954, %v3954
        %v4198 = vmul.f32 %v3956, %v3956
        %v4199 = vmul.f32 %v4067, %v4067
        %v4200 = vmul.f32 %v4069, %v4069
        %v4201 = vmul.f32 %v3960, %v3960
        %v4202 = vmul.f32 %v3962, %v3962
        %v4203 = vmul.f32 %v4073, %v4073
        %v4204 = vmul.f32 %v4075, %v4075
        %v4205 = vmul.f32 %v3964, %v3964
        %v4206 = vmul.f32 %v3966, %v3966
        %v4207 = vmul.f32 %v4077, %v4077
        %v4208 = vmul.f32 %v4079, %v4079
        %v4209 = vmul.f32 %v4145, %v3890
        %v4210 = vmul.f32 %v4146, %v3892
        %v4211 = vmul.f32 %v4147, %v4003
        %v4212 = vmul.f32 %v4148, %v4005
        %v4213 = vmul.f32 %v4149, %v3894
        %v4214 = vmul.f32 %v4150, %v3896
        %v4215 = vmul.f32 %v4151, %v4007
        %v4216 = vmul.f32 %v4152, %v4009
        %v4217 = vmul.f32 %v4153, %v3900
        %v4218 = vmul.f32 %v4154, %v3902
        %v4219 = vmul.f32 %v4155, %v4013
        %v4220 = vmul.f32 %v4156, %v4015
        %v4221 = vmul.f32 %v4157, %v3904
        %v4222 = vmul.f32 %v4158, %v3906
        %v4223 = vmul.f32 %v4159, %v4017
        %v4224 = vmul.f32 %v4160, %v4019
        %v4225 = vmul.f32 %v4161, %v3910
        %v4226 = vmul.f32 %v4162, %v3912
        %v4227 = vmul.f32 %v4163, %v4023
        %v4228 = vmul.f32 %v4164, %v4025
        %v4229 = vmul.f32 %v4165, %v3914
        %v4230 = vmul.f32 %v4166, %v3916
        %v4231 = vmul.f32 %v4167, %v4027
        %v4232 = vmul.f32 %v4168, %v4029
        %v4233 = vmul.f32 %v4169, %v3920
        %v4234 = vmul.f32 %v4170, %v3922
        %v4235 = vmul.f32 %v4171, %v4033
        %v4236 = vmul.f32 %v4172, %v4035
        %v4237 = vmul.f32 %v4173, %v3924
        %v4238 = vmul.f32 %v4174, %v3926
        %v4239 = vmul.f32 %v4175, %v4037
        %v4240 = vmul.f32 %v4176, %v4039
        %v4241 = vmul.f32 %v4177, %v3930
        %v4242 = vmul.f32 %v4178, %v3932
        %v4243 = vmul.f32 %v4179, %v4043
        %v4244 = vmul.f32 %v4180, %v4045
        %v4245 = vmul.f32 %v4181, %v3934
        %v4246 = vmul.f32 %v4182, %v3936
        %v4247 = vmul.f32 %v4183, %v4047
        %v4248 = vmul.f32 %v4184, %v4049
        %v4249 = vmul.f32 %v4185, %v3940
        %v4250 = vmul.f32 %v4186, %v3942
        %v4251 = vmul.f32 %v4187, %v4053
        %v4252 = vmul.f32 %v4188, %v4055
        %v4253 = vmul.f32 %v4189, %v3944
        %v4254 = vmul.f32 %v4190, %v3946
        %v4255 = vmul.f32 %v4191, %v4057
        %v4256 = vmul.f32 %v4192, %v4059
        %v4257 = vmul.f32 %v4193, %v3950
        %v4258 = vmul.f32 %v4194, %v3952
        %v4259 = vmul.f32 %v4195, %v4063
        %v4260 = vmul.f32 %v4196, %v4065
        %v4261 = vmul.f32 %v4197, %v3954
        %v4262 = vmul.f32 %v4198, %v3956
        %v4263 = vmul.f32 %v4199, %v4067
        %v4264 = vmul.f32 %v4200, %v4069
        %v4265 = vmul.f32 %v4201, %v3960
        %v4266 = vmul.f32 %v4202, %v3962
        %v4267 = vmul.f32 %v4203, %v4073
        %v4268 = vmul.f32 %v4204, %v4075
        %v4269 = vmul.f32 %v4205, %v3964
        %v4270 = vmul.f32 %v4206, %v3966
        %v4271 = vmul.f32 %v4207, %v4077
        %v4272 = vmul.f32 %v4208, %v4079
        %v4273 = vmul.f32 %v4209, 0.044715
        %v4274 = vmul.f32 %v4210, 0.044715
        %v4275 = vmul.f32 %v4211, 0.044715
        %v4276 = vmul.f32 %v4212, 0.044715
        %v4277 = vmul.f32 %v4213, 0.044715
        %v4278 = vmul.f32 %v4214, 0.044715
        %v4279 = vmul.f32 %v4215, 0.044715
        %v4280 = vmul.f32 %v4216, 0.044715
        %v4281 = vmul.f32 %v4217, 0.044715
        %v4282 = vmul.f32 %v4218, 0.044715
        %v4283 = vmul.f32 %v4219, 0.044715
        %v4284 = vmul.f32 %v4220, 0.044715
        %v4285 = vmul.f32 %v4221, 0.044715
        %v4286 = vmul.f32 %v4222, 0.044715
        %v4287 = vmul.f32 %v4223, 0.044715
        %v4288 = vmul.f32 %v4224, 0.044715
        %v4289 = vmul.f32 %v4225, 0.044715
        %v4290 = vmul.f32 %v4226, 0.044715
        %v4291 = vmul.f32 %v4227, 0.044715
        %v4292 = vmul.f32 %v4228, 0.044715
        %v4293 = vmul.f32 %v4229, 0.044715
        %v4294 = vmul.f32 %v4230, 0.044715
        %v4295 = vmul.f32 %v4231, 0.044715
        %v4296 = vmul.f32 %v4232, 0.044715
        %v4297 = vmul.f32 %v4233, 0.044715
        %v4298 = vmul.f32 %v4234, 0.044715
        %v4299 = vmul.f32 %v4235, 0.044715
        %v4300 = vmul.f32 %v4236, 0.044715
        %v4301 = vmul.f32 %v4237, 0.044715
        %v4302 = vmul.f32 %v4238, 0.044715
        %v4303 = vmul.f32 %v4239, 0.044715
        %v4304 = vmul.f32 %v4240, 0.044715
        %v4305 = vmul.f32 %v4241, 0.044715
        %v4306 = vmul.f32 %v4242, 0.044715
        %v4307 = vmul.f32 %v4243, 0.044715
        %v4308 = vmul.f32 %v4244, 0.044715
        %v4309 = vmul.f32 %v4245, 0.044715
        %v4310 = vmul.f32 %v4246, 0.044715
        %v4311 = vmul.f32 %v4247, 0.044715
        %v4312 = vmul.f32 %v4248, 0.044715
        %v4313 = vmul.f32 %v4249, 0.044715
        %v4314 = vmul.f32 %v4250, 0.044715
        %v4315 = vmul.f32 %v4251, 0.044715
        %v4316 = vmul.f32 %v4252, 0.044715
        %v4317 = vmul.f32 %v4253, 0.044715
        %v4318 = vmul.f32 %v4254, 0.044715
        %v4319 = vmul.f32 %v4255, 0.044715
        %v4320 = vmul.f32 %v4256, 0.044715
        %v4321 = vmul.f32 %v4257, 0.044715
        %v4322 = vmul.f32 %v4258, 0.044715
        %v4323 = vmul.f32 %v4259, 0.044715
        %v4324 = vmul.f32 %v4260, 0.044715
        %v4325 = vmul.f32 %v4261, 0.044715
        %v4326 = vmul.f32 %v4262, 0.044715
        %v4327 = vmul.f32 %v4263, 0.044715
        %v4328 = vmul.f32 %v4264, 0.044715
        %v4329 = vmul.f32 %v4265, 0.044715
        %v4330 = vmul.f32 %v4266, 0.044715
        %v4331 = vmul.f32 %v4267, 0.044715
        %v4332 = vmul.f32 %v4268, 0.044715
        %v4333 = vmul.f32 %v4269, 0.044715
        %v4334 = vmul.f32 %v4270, 0.044715
        %v4335 = vmul.f32 %v4271, 0.044715
        %v4336 = vmul.f32 %v4272, 0.044715
        %v4337 = vadd.f32 %v3890, %v4273
        %v4338 = vadd.f32 %v3892, %v4274
        %v4339 = vadd.f32 %v4003, %v4275
        %v4340 = vadd.f32 %v4005, %v4276
        %v4341 = vadd.f32 %v3894, %v4277
        %v4342 = vadd.f32 %v3896, %v4278
        %v4343 = vadd.f32 %v4007, %v4279
        %v4344 = vadd.f32 %v4009, %v4280
        %v4345 = vadd.f32 %v3900, %v4281
        %v4346 = vadd.f32 %v3902, %v4282
        %v4347 = vadd.f32 %v4013, %v4283
        %v4348 = vadd.f32 %v4015, %v4284
        %v4349 = vadd.f32 %v3904, %v4285
        %v4350 = vadd.f32 %v3906, %v4286
        %v4351 = vadd.f32 %v4017, %v4287
        %v4352 = vadd.f32 %v4019, %v4288
        %v4353 = vadd.f32 %v3910, %v4289
        %v4354 = vadd.f32 %v3912, %v4290
        %v4355 = vadd.f32 %v4023, %v4291
        %v4356 = vadd.f32 %v4025, %v4292
        %v4357 = vadd.f32 %v3914, %v4293
        %v4358 = vadd.f32 %v3916, %v4294
        %v4359 = vadd.f32 %v4027, %v4295
        %v4360 = vadd.f32 %v4029, %v4296
        %v4361 = vadd.f32 %v3920, %v4297
        %v4362 = vadd.f32 %v3922, %v4298
        %v4363 = vadd.f32 %v4033, %v4299
        %v4364 = vadd.f32 %v4035, %v4300
        %v4365 = vadd.f32 %v3924, %v4301
        %v4366 = vadd.f32 %v3926, %v4302
        %v4367 = vadd.f32 %v4037, %v4303
        %v4368 = vadd.f32 %v4039, %v4304
        %v4369 = vadd.f32 %v3930, %v4305
        %v4370 = vadd.f32 %v3932, %v4306
        %v4371 = vadd.f32 %v4043, %v4307
        %v4372 = vadd.f32 %v4045, %v4308
        %v4373 = vadd.f32 %v3934, %v4309
        %v4374 = vadd.f32 %v3936, %v4310
        %v4375 = vadd.f32 %v4047, %v4311
        %v4376 = vadd.f32 %v4049, %v4312
        %v4377 = vadd.f32 %v3940, %v4313
        %v4378 = vadd.f32 %v3942, %v4314
        %v4379 = vadd.f32 %v4053, %v4315
        %v4380 = vadd.f32 %v4055, %v4316
        %v4381 = vadd.f32 %v3944, %v4317
        %v4382 = vadd.f32 %v3946, %v4318
        %v4383 = vadd.f32 %v4057, %v4319
        %v4384 = vadd.f32 %v4059, %v4320
        %v4385 = vadd.f32 %v3950, %v4321
        %v4386 = vadd.f32 %v3952, %v4322
        %v4387 = vadd.f32 %v4063, %v4323
        %v4388 = vadd.f32 %v4065, %v4324
        %v4389 = vadd.f32 %v3954, %v4325
        %v4390 = vadd.f32 %v3956, %v4326
        %v4391 = vadd.f32 %v4067, %v4327
        %v4392 = vadd.f32 %v4069, %v4328
        %v4393 = vadd.f32 %v3960, %v4329
        %v4394 = vadd.f32 %v3962, %v4330
        %v4395 = vadd.f32 %v4073, %v4331
        %v4396 = vadd.f32 %v4075, %v4332
        %v4397 = vadd.f32 %v3964, %v4333
        %v4398 = vadd.f32 %v3966, %v4334
        %v4399 = vadd.f32 %v4077, %v4335
        %v4400 = vadd.f32 %v4079, %v4336
        %v4401 = vmul.f32 %v4337, 0.7978846
        %v4402 = vmul.f32 %v4338, 0.7978846
        %v4403 = vmul.f32 %v4339, 0.7978846
        %v4404 = vmul.f32 %v4340, 0.7978846
        %v4405 = vmul.f32 %v4341, 0.7978846
        %v4406 = vmul.f32 %v4342, 0.7978846
        %v4407 = vmul.f32 %v4343, 0.7978846
        %v4408 = vmul.f32 %v4344, 0.7978846
        %v4409 = vmul.f32 %v4345, 0.7978846
        %v4410 = vmul.f32 %v4346, 0.7978846
        %v4411 = vmul.f32 %v4347, 0.7978846
        %v4412 = vmul.f32 %v4348, 0.7978846
        %v4413 = vmul.f32 %v4349, 0.7978846
        %v4414 = vmul.f32 %v4350, 0.7978846
        %v4415 = vmul.f32 %v4351, 0.7978846
        %v4416 = vmul.f32 %v4352, 0.7978846
        %v4417 = vmul.f32 %v4353, 0.7978846
        %v4418 = vmul.f32 %v4354, 0.7978846
        %v4419 = vmul.f32 %v4355, 0.7978846
        %v4420 = vmul.f32 %v4356, 0.7978846
        %v4421 = vmul.f32 %v4357, 0.7978846
        %v4422 = vmul.f32 %v4358, 0.7978846
        %v4423 = vmul.f32 %v4359, 0.7978846
        %v4424 = vmul.f32 %v4360, 0.7978846
        %v4425 = vmul.f32 %v4361, 0.7978846
        %v4426 = vmul.f32 %v4362, 0.7978846
        %v4427 = vmul.f32 %v4363, 0.7978846
        %v4428 = vmul.f32 %v4364, 0.7978846
        %v4429 = vmul.f32 %v4365, 0.7978846
        %v4430 = vmul.f32 %v4366, 0.7978846
        %v4431 = vmul.f32 %v4367, 0.7978846
        %v4432 = vmul.f32 %v4368, 0.7978846
        %v4433 = vmul.f32 %v4369, 0.7978846
        %v4434 = vmul.f32 %v4370, 0.7978846
        %v4435 = vmul.f32 %v4371, 0.7978846
        %v4436 = vmul.f32 %v4372, 0.7978846
        %v4437 = vmul.f32 %v4373, 0.7978846
        %v4438 = vmul.f32 %v4374, 0.7978846
        %v4439 = vmul.f32 %v4375, 0.7978846
        %v4440 = vmul.f32 %v4376, 0.7978846
        %v4441 = vmul.f32 %v4377, 0.7978846
        %v4442 = vmul.f32 %v4378, 0.7978846
        %v4443 = vmul.f32 %v4379, 0.7978846
        %v4444 = vmul.f32 %v4380, 0.7978846
        %v4445 = vmul.f32 %v4381, 0.7978846
        %v4446 = vmul.f32 %v4382, 0.7978846
        %v4447 = vmul.f32 %v4383, 0.7978846
        %v4448 = vmul.f32 %v4384, 0.7978846
        %v4449 = vmul.f32 %v4385, 0.7978846
        %v4450 = vmul.f32 %v4386, 0.7978846
        %v4451 = vmul.f32 %v4387, 0.7978846
        %v4452 = vmul.f32 %v4388, 0.7978846
        %v4453 = vmul.f32 %v4389, 0.7978846
        %v4454 = vmul.f32 %v4390, 0.7978846
        %v4455 = vmul.f32 %v4391, 0.7978846
        %v4456 = vmul.f32 %v4392, 0.7978846
        %v4457 = vmul.f32 %v4393, 0.7978846
        %v4458 = vmul.f32 %v4394, 0.7978846
        %v4459 = vmul.f32 %v4395, 0.7978846
        %v4460 = vmul.f32 %v4396, 0.7978846
        %v4461 = vmul.f32 %v4397, 0.7978846
        %v4462 = vmul.f32 %v4398, 0.7978846
        %v4463 = vmul.f32 %v4399, 0.7978846
        %v4464 = vmul.f32 %v4400, 0.7978846
        %v4465 = vtanh.pop %v4401
        %v4466 = vtanh.pop %v4402
        %v4467 = vtanh.pop %v4403
        %v4468 = vtanh.pop %v4404
        %v4469 = vtanh.pop %v4405
        %v4470 = vtanh.pop %v4406
        %v4471 = vtanh.pop %v4407
        %v4472 = vtanh.pop %v4408
        %v4473 = vtanh.pop %v4409
        %v4474 = vtanh.pop %v4410
        %v4475 = vtanh.pop %v4411
        %v4476 = vtanh.pop %v4412
        %v4477 = vtanh.pop %v4413
        %v4478 = vtanh.pop %v4414
        %v4479 = vtanh.pop %v4415
        %v4480 = vtanh.pop %v4416
        %v4481 = vtanh.pop %v4417
        %v4482 = vtanh.pop %v4418
        %v4483 = vtanh.pop %v4419
        %v4484 = vtanh.pop %v4420
        %v4485 = vtanh.pop %v4421
        %v4486 = vtanh.pop %v4422
        %v4487 = vtanh.pop %v4423
        %v4488 = vtanh.pop %v4424
        %v4489 = vtanh.pop %v4425
        %v4490 = vtanh.pop %v4426
        %v4491 = vtanh.pop %v4427
        %v4492 = vtanh.pop %v4428
        %v4493 = vtanh.pop %v4429
        %v4494 = vtanh.pop %v4430
        %v4495 = vtanh.pop %v4431
        %v4496 = vtanh.pop %v4432
        %v4497 = vtanh.pop %v4433
        %v4498 = vtanh.pop %v4434
        %v4499 = vtanh.pop %v4435
        %v4500 = vtanh.pop %v4436
        %v4501 = vtanh.pop %v4437
        %v4502 = vtanh.pop %v4438
        %v4503 = vtanh.pop %v4439
        %v4504 = vtanh.pop %v4440
        %v4505 = vtanh.pop %v4441
        %v4506 = vtanh.pop %v4442
        %v4507 = vtanh.pop %v4443
        %v4508 = vtanh.pop %v4444
        %v4509 = vtanh.pop %v4445
        %v4510 = vtanh.pop %v4446
        %v4511 = vtanh.pop %v4447
        %v4512 = vtanh.pop %v4448
        %v4513 = vtanh.pop %v4449
        %v4514 = vtanh.pop %v4450
        %v4515 = vtanh.pop %v4451
        %v4516 = vtanh.pop %v4452
        %v4517 = vtanh.pop %v4453
        %v4518 = vtanh.pop %v4454
        %v4519 = vtanh.pop %v4455
        %v4520 = vtanh.pop %v4456
        %v4521 = vtanh.pop %v4457
        %v4522 = vtanh.pop %v4458
        %v4523 = vtanh.pop %v4459
        %v4524 = vtanh.pop %v4460
        %v4525 = vtanh.pop %v4461
        %v4526 = vtanh.pop %v4462
        %v4527 = vtanh.pop %v4463
        %v4528 = vtanh.pop %v4464
        %v4529 = vadd.f32 %v4465, 1.0
        %v4530 = vadd.f32 %v4466, 1.0
        %v4531 = vadd.f32 %v4467, 1.0
        %v4532 = vadd.f32 %v4468, 1.0
        %v4533 = vadd.f32 %v4469, 1.0
        %v4534 = vadd.f32 %v4470, 1.0
        %v4535 = vadd.f32 %v4471, 1.0
        %v4536 = vadd.f32 %v4472, 1.0
        %v4537 = vadd.f32 %v4473, 1.0
        %v4538 = vadd.f32 %v4474, 1.0
        %v4539 = vadd.f32 %v4475, 1.0
        %v4540 = vadd.f32 %v4476, 1.0
        %v4541 = vadd.f32 %v4477, 1.0
        %v4542 = vadd.f32 %v4478, 1.0
        %v4543 = vadd.f32 %v4479, 1.0
        %v4544 = vadd.f32 %v4480, 1.0
        %v4545 = vadd.f32 %v4481, 1.0
        %v4546 = vadd.f32 %v4482, 1.0
        %v4547 = vadd.f32 %v4483, 1.0
        %v4548 = vadd.f32 %v4484, 1.0
        %v4549 = vadd.f32 %v4485, 1.0
        %v4550 = vadd.f32 %v4486, 1.0
        %v4551 = vadd.f32 %v4487, 1.0
        %v4552 = vadd.f32 %v4488, 1.0
        %v4553 = vadd.f32 %v4489, 1.0
        %v4554 = vadd.f32 %v4490, 1.0
        %v4555 = vadd.f32 %v4491, 1.0
        %v4556 = vadd.f32 %v4492, 1.0
        %v4557 = vadd.f32 %v4493, 1.0
        %v4558 = vadd.f32 %v4494, 1.0
        %v4559 = vadd.f32 %v4495, 1.0
        %v4560 = vadd.f32 %v4496, 1.0
        %v4561 = vadd.f32 %v4497, 1.0
        %v4562 = vadd.f32 %v4498, 1.0
        %v4563 = vadd.f32 %v4499, 1.0
        %v4564 = vadd.f32 %v4500, 1.0
        %v4565 = vadd.f32 %v4501, 1.0
        %v4566 = vadd.f32 %v4502, 1.0
        %v4567 = vadd.f32 %v4503, 1.0
        %v4568 = vadd.f32 %v4504, 1.0
        %v4569 = vadd.f32 %v4505, 1.0
        %v4570 = vadd.f32 %v4506, 1.0
        %v4571 = vadd.f32 %v4507, 1.0
        %v4572 = vadd.f32 %v4508, 1.0
        %v4573 = vadd.f32 %v4509, 1.0
        %v4574 = vadd.f32 %v4510, 1.0
        %v4575 = vadd.f32 %v4511, 1.0
        %v4576 = vadd.f32 %v4512, 1.0
        %v4577 = vadd.f32 %v4513, 1.0
        %v4578 = vadd.f32 %v4514, 1.0
        %v4579 = vadd.f32 %v4515, 1.0
        %v4580 = vadd.f32 %v4516, 1.0
        %v4581 = vadd.f32 %v4517, 1.0
        %v4582 = vadd.f32 %v4518, 1.0
        %v4583 = vadd.f32 %v4519, 1.0
        %v4584 = vadd.f32 %v4520, 1.0
        %v4585 = vadd.f32 %v4521, 1.0
        %v4586 = vadd.f32 %v4522, 1.0
        %v4587 = vadd.f32 %v4523, 1.0
        %v4588 = vadd.f32 %v4524, 1.0
        %v4589 = vadd.f32 %v4525, 1.0
        %v4590 = vadd.f32 %v4526, 1.0
        %v4591 = vadd.f32 %v4527, 1.0
        %v4592 = vadd.f32 %v4528, 1.0
        %v4593 = vmul.f32 %v4081, %v4529
        %v4594 = vmul.f32 %v4082, %v4530
        %v4595 = vmul.f32 %v4083, %v4531
        %v4596 = vmul.f32 %v4084, %v4532
        %v4597 = vmul.f32 %v4085, %v4533
        %v4598 = vmul.f32 %v4086, %v4534
        %v4599 = vmul.f32 %v4087, %v4535
        %v4600 = vmul.f32 %v4088, %v4536
        %v4601 = vmul.f32 %v4089, %v4537
        %v4602 = vmul.f32 %v4090, %v4538
        %v4603 = vmul.f32 %v4091, %v4539
        %v4604 = vmul.f32 %v4092, %v4540
        %v4605 = vmul.f32 %v4093, %v4541
        %v4606 = vmul.f32 %v4094, %v4542
        %v4607 = vmul.f32 %v4095, %v4543
        %v4608 = vmul.f32 %v4096, %v4544
        %v4609 = vmul.f32 %v4097, %v4545
        %v4610 = vmul.f32 %v4098, %v4546
        %v4611 = vmul.f32 %v4099, %v4547
        %v4612 = vmul.f32 %v4100, %v4548
        %v4613 = vmul.f32 %v4101, %v4549
        %v4614 = vmul.f32 %v4102, %v4550
        %v4615 = vmul.f32 %v4103, %v4551
        %v4616 = vmul.f32 %v4104, %v4552
        %v4617 = vmul.f32 %v4105, %v4553
        %v4618 = vmul.f32 %v4106, %v4554
        %v4619 = vmul.f32 %v4107, %v4555
        %v4620 = vmul.f32 %v4108, %v4556
        %v4621 = vmul.f32 %v4109, %v4557
        %v4622 = vmul.f32 %v4110, %v4558
        %v4623 = vmul.f32 %v4111, %v4559
        %v4624 = vmul.f32 %v4112, %v4560
        %v4625 = vmul.f32 %v4113, %v4561
        %v4626 = vmul.f32 %v4114, %v4562
        %v4627 = vmul.f32 %v4115, %v4563
        %v4628 = vmul.f32 %v4116, %v4564
        %v4629 = vmul.f32 %v4117, %v4565
        %v4630 = vmul.f32 %v4118, %v4566
        %v4631 = vmul.f32 %v4119, %v4567
        %v4632 = vmul.f32 %v4120, %v4568
        %v4633 = vmul.f32 %v4121, %v4569
        %v4634 = vmul.f32 %v4122, %v4570
        %v4635 = vmul.f32 %v4123, %v4571
        %v4636 = vmul.f32 %v4124, %v4572
        %v4637 = vmul.f32 %v4125, %v4573
        %v4638 = vmul.f32 %v4126, %v4574
        %v4639 = vmul.f32 %v4127, %v4575
        %v4640 = vmul.f32 %v4128, %v4576
        %v4641 = vmul.f32 %v4129, %v4577
        %v4642 = vmul.f32 %v4130, %v4578
        %v4643 = vmul.f32 %v4131, %v4579
        %v4644 = vmul.f32 %v4132, %v4580
        %v4645 = vmul.f32 %v4133, %v4581
        %v4646 = vmul.f32 %v4134, %v4582
        %v4647 = vmul.f32 %v4135, %v4583
        %v4648 = vmul.f32 %v4136, %v4584
        %v4649 = vmul.f32 %v4137, %v4585
        %v4650 = vmul.f32 %v4138, %v4586
        %v4651 = vmul.f32 %v4139, %v4587
        %v4652 = vmul.f32 %v4140, %v4588
        %v4653 = vmul.f32 %v4141, %v4589
        %v4654 = vmul.f32 %v4142, %v4590
        %v4655 = vmul.f32 %v4143, %v4591
        %v4656 = vmul.f32 %v4144, %v4592
        %v4657 = vpack.c.bf16 %v4597, %v4593
        %v4658 = vpack.c.bf16 %v4598, %v4594
        %v4659 = vpack.c.bf16 %v4599, %v4595
        %v4660 = vpack.c.bf16 %v4600, %v4596
        %v4661 = vpack.c.bf16 %v4605, %v4601
        %v4662 = vpack.c.bf16 %v4606, %v4602
        %v4663 = vpack.c.bf16 %v4607, %v4603
        %v4664 = vpack.c.bf16 %v4608, %v4604
        %v4665 = vpack.c.bf16 %v4613, %v4609
        %v4666 = vpack.c.bf16 %v4614, %v4610
        %v4667 = vpack.c.bf16 %v4615, %v4611
        %v4668 = vpack.c.bf16 %v4616, %v4612
        %v4669 = vpack.c.bf16 %v4621, %v4617
        %v4670 = vpack.c.bf16 %v4622, %v4618
        %v4671 = vpack.c.bf16 %v4623, %v4619
        %v4672 = vpack.c.bf16 %v4624, %v4620
        %v4673 = vpack.c.bf16 %v4629, %v4625
        %v4674 = vpack.c.bf16 %v4630, %v4626
        %v4675 = vpack.c.bf16 %v4631, %v4627
        %v4676 = vpack.c.bf16 %v4632, %v4628
        %v4677 = vpack.c.bf16 %v4637, %v4633
        %v4678 = vpack.c.bf16 %v4638, %v4634
        %v4679 = vpack.c.bf16 %v4639, %v4635
        %v4680 = vpack.c.bf16 %v4640, %v4636
        %v4681 = vpack.c.bf16 %v4645, %v4641
        %v4682 = vpack.c.bf16 %v4646, %v4642
        %v4683 = vpack.c.bf16 %v4647, %v4643
        %v4684 = vpack.c.bf16 %v4648, %v4644
        %v4685 = vpack.c.bf16 %v4653, %v4649
        %v4686 = vpack.c.bf16 %v4654, %v4650
        %v4687 = vpack.c.bf16 %v4655, %v4651
        %v4688 = vpack.c.bf16 %v4656, %v4652
        %v4689 = vld [vmem:[#allocation13] sm:$0xf]
        %v4690 = vld [vmem:[#allocation13 + $0x4] sm:$0xf]
        %v4691 = vld [vmem:[#allocation13 + $0x8] sm:$0xf]
        %v4692 = vld [vmem:[#allocation13 + $0xc] sm:$0xf]
        %v4693 = vld [vmem:[#allocation13 + $0x10] sm:$0xf]
        %v4694 = vld [vmem:[#allocation13 + $0x14] sm:$0xf]
        %v4695 = vld [vmem:[#allocation13 + $0x18] sm:$0xf]
        %v4696 = vld [vmem:[#allocation13 + $0x1c] sm:$0xf]
        %v4697 = vld [vmem:[#allocation13 + $0x20] sm:$0xf]
        %v4698 = vld [vmem:[#allocation13 + $0x24] sm:$0xf]
        %v4699 = vld [vmem:[#allocation13 + $0x28] sm:$0xf]
        %v4700 = vld [vmem:[#allocation13 + $0x2c] sm:$0xf]
        %v4701 = vld [vmem:[#allocation13 + $0x30] sm:$0xf]
        %v4702 = vld [vmem:[#allocation13 + $0x34] sm:$0xf]
        %v4703 = vld [vmem:[#allocation13 + $0x38] sm:$0xf]
        %v4704 = vld [vmem:[#allocation13 + $0x3c] sm:$0xf]
        %v4705 = vld [vmem:[#allocation13 + $0x40] sm:$0xf]
        %v4706 = vld [vmem:[#allocation13 + $0x44] sm:$0xf]
        %v4707 = vld [vmem:[#allocation13 + $0x48] sm:$0xf]
        %v4708 = vld [vmem:[#allocation13 + $0x4c] sm:$0xf]
        %v4709 = vld [vmem:[#allocation13 + $0x50] sm:$0xf]
        %v4710 = vld [vmem:[#allocation13 + $0x54] sm:$0xf]
        %v4711 = vld [vmem:[#allocation13 + $0x58] sm:$0xf]
        %v4712 = vld [vmem:[#allocation13 + $0x5c] sm:$0xf]
        %v4713 = vld [vmem:[#allocation13 + $0x60] sm:$0xf]
        %v4714 = vld [vmem:[#allocation13 + $0x64] sm:$0xf]
        %v4715 = vld [vmem:[#allocation13 + $0x68] sm:$0xf]
        %v4716 = vld [vmem:[#allocation13 + $0x6c] sm:$0xf]
        %v4717 = vld [vmem:[#allocation13 + $0x70] sm:$0xf]
        %v4718 = vld [vmem:[#allocation13 + $0x74] sm:$0xf]
        %v4719 = vld [vmem:[#allocation13 + $0x78] sm:$0xf]
        %v4720 = vld [vmem:[#allocation13 + $0x7c] sm:$0xf]
        %v4721 = vld [vmem:[#allocation13 + $0x80] sm:$0xf]
        %v4722 = vld [vmem:[#allocation13 + $0x84] sm:$0xf]
        %v4723 = vld [vmem:[#allocation13 + $0x88] sm:$0xf]
        %v4724 = vld [vmem:[#allocation13 + $0x8c] sm:$0xf]
        %v4725 = vld [vmem:[#allocation13 + $0x90] sm:$0xf]
        %v4726 = vld [vmem:[#allocation13 + $0x94] sm:$0xf]
        %v4727 = vld [vmem:[#allocation13 + $0x98] sm:$0xf]
        %v4728 = vld [vmem:[#allocation13 + $0x9c] sm:$0xf]
        %v4729 = vld [vmem:[#allocation13 + $0xa0] sm:$0xf]
        %v4730 = vld [vmem:[#allocation13 + $0xa4] sm:$0xf]
        %v4731 = vld [vmem:[#allocation13 + $0xa8] sm:$0xf]
        %v4732 = vld [vmem:[#allocation13 + $0xac] sm:$0xf]
        %v4733 = vld [vmem:[#allocation13 + $0xb0] sm:$0xf]
        %v4734 = vld [vmem:[#allocation13 + $0xb4] sm:$0xf]
        %v4735 = vld [vmem:[#allocation13 + $0xb8] sm:$0xf]
        %v4736 = vld [vmem:[#allocation13 + $0xbc] sm:$0xf]
        %v4737 = vld [vmem:[#allocation13 + $0xc0] sm:$0xf]
        %v4738 = vld [vmem:[#allocation13 + $0xc4] sm:$0xf]
        %v4739 = vld [vmem:[#allocation13 + $0xc8] sm:$0xf]
        %v4740 = vld [vmem:[#allocation13 + $0xcc] sm:$0xf]
        %v4741 = vld [vmem:[#allocation13 + $0xd0] sm:$0xf]
        %v4742 = vld [vmem:[#allocation13 + $0xd4] sm:$0xf]
        %v4743 = vld [vmem:[#allocation13 + $0xd8] sm:$0xf]
        %v4744 = vld [vmem:[#allocation13 + $0xdc] sm:$0xf]
        %v4745 = vld [vmem:[#allocation13 + $0xe0] sm:$0xf]
        %v4746 = vld [vmem:[#allocation13 + $0xe4] sm:$0xf]
        %v4747 = vld [vmem:[#allocation13 + $0xe8] sm:$0xf]
        %v4748 = vld [vmem:[#allocation13 + $0xec] sm:$0xf]
        %v4749 = vld [vmem:[#allocation13 + $0xf0] sm:$0xf]
        %v4750 = vld [vmem:[#allocation13 + $0xf4] sm:$0xf]
        %v4751 = vld [vmem:[#allocation13 + $0xf8] sm:$0xf]
        %v4752 = vld [vmem:[#allocation13 + $0xfc] sm:$0xf]
        %v4753 = vlaneseq
        %v4754 = vshrl.u32 %v4753, 7
        %v4755 = vsub.s32 4, %v4754
        %v4756 = vrot.slane %v397, %v4755
        %v4821 = vunpack.c.l.b16 %v4689
        %v4822 = vunpack.c.l.b16 %v4690
        %v4823 = vunpack.c.l.b16 %v4691
        %v4824 = vunpack.c.l.b16 %v4692
        %v4825 = vunpack.c.l.b16 %v4693
        %v4826 = vunpack.c.l.b16 %v4694
        %v4827 = vunpack.c.l.b16 %v4695
        %v4828 = vunpack.c.l.b16 %v4696
        %v4829 = vunpack.c.l.b16 %v4697
        %v4830 = vunpack.c.l.b16 %v4698
        %v4831 = vunpack.c.l.b16 %v4699
        %v4832 = vunpack.c.l.b16 %v4700
        %v4833 = vunpack.c.l.b16 %v4701
        %v4834 = vunpack.c.l.b16 %v4702
        %v4835 = vunpack.c.l.b16 %v4703
        %v4836 = vunpack.c.l.b16 %v4704
        %v4837 = vunpack.c.l.b16 %v4705
        %v4838 = vunpack.c.l.b16 %v4706
        %v4839 = vunpack.c.l.b16 %v4707
        %v4840 = vunpack.c.l.b16 %v4708
        %v4841 = vunpack.c.l.b16 %v4709
        %v4842 = vunpack.c.l.b16 %v4710
        %v4843 = vunpack.c.l.b16 %v4711
        %v4844 = vunpack.c.l.b16 %v4712
        %v4845 = vunpack.c.l.b16 %v4713
        %v4846 = vunpack.c.l.b16 %v4714
        %v4847 = vunpack.c.l.b16 %v4715
        %v4848 = vunpack.c.l.b16 %v4716
        %v4849 = vunpack.c.l.b16 %v4717
        %v4850 = vunpack.c.l.b16 %v4718
        %v4851 = vunpack.c.l.b16 %v4719
        %v4852 = vunpack.c.l.b16 %v4720
        %v4853 = vunpack.c.l.b16 %v4721
        %v4854 = vunpack.c.l.b16 %v4722
        %v4855 = vunpack.c.l.b16 %v4723
        %v4856 = vunpack.c.l.b16 %v4724
        %v4857 = vunpack.c.l.b16 %v4725
        %v4858 = vunpack.c.l.b16 %v4726
        %v4859 = vunpack.c.l.b16 %v4727
        %v4860 = vunpack.c.l.b16 %v4728
        %v4861 = vunpack.c.l.b16 %v4729
        %v4862 = vunpack.c.l.b16 %v4730
        %v4863 = vunpack.c.l.b16 %v4731
        %v4864 = vunpack.c.l.b16 %v4732
        %v4865 = vunpack.c.l.b16 %v4733
        %v4866 = vunpack.c.l.b16 %v4734
        %v4867 = vunpack.c.l.b16 %v4735
        %v4868 = vunpack.c.l.b16 %v4736
        %v4869 = vunpack.c.l.b16 %v4737
        %v4870 = vunpack.c.l.b16 %v4738
        %v4871 = vunpack.c.l.b16 %v4739
        %v4872 = vunpack.c.l.b16 %v4740
        %v4873 = vunpack.c.l.b16 %v4741
        %v4874 = vunpack.c.l.b16 %v4742
        %v4875 = vunpack.c.l.b16 %v4743
        %v4876 = vunpack.c.l.b16 %v4744
        %v4877 = vunpack.c.l.b16 %v4745
        %v4878 = vunpack.c.l.b16 %v4746
        %v4879 = vunpack.c.l.b16 %v4747
        %v4880 = vunpack.c.l.b16 %v4748
        %v4881 = vunpack.c.l.b16 %v4749
        %v4882 = vunpack.c.l.b16 %v4750
        %v4883 = vunpack.c.l.b16 %v4751
        %v4884 = vunpack.c.l.b16 %v4752
        %v4885 = vpack.c.b16 %v4822, %v4821
        %v4886 = vpack.c.b16 %v4824, %v4823
        %v4887 = vpack.c.b16 %v4826, %v4825
        %v4888 = vpack.c.b16 %v4828, %v4827
        %v4889 = vpack.c.b16 %v4830, %v4829
        %v4890 = vpack.c.b16 %v4832, %v4831
        %v4891 = vpack.c.b16 %v4834, %v4833
        %v4892 = vpack.c.b16 %v4836, %v4835
        %v4893 = vpack.c.b16 %v4838, %v4837
        %v4894 = vpack.c.b16 %v4840, %v4839
        %v4895 = vpack.c.b16 %v4842, %v4841
        %v4896 = vpack.c.b16 %v4844, %v4843
        %v4897 = vpack.c.b16 %v4846, %v4845
        %v4898 = vpack.c.b16 %v4848, %v4847
        %v4899 = vpack.c.b16 %v4850, %v4849
        %v4900 = vpack.c.b16 %v4852, %v4851
        %v4901 = vpack.c.b16 %v4854, %v4853
        %v4902 = vpack.c.b16 %v4856, %v4855
        %v4903 = vpack.c.b16 %v4858, %v4857
        %v4904 = vpack.c.b16 %v4860, %v4859
        %v4905 = vpack.c.b16 %v4862, %v4861
        %v4906 = vpack.c.b16 %v4864, %v4863
        %v4907 = vpack.c.b16 %v4866, %v4865
        %v4908 = vpack.c.b16 %v4868, %v4867
        %v4909 = vpack.c.b16 %v4870, %v4869
        %v4910 = vpack.c.b16 %v4872, %v4871
        %v4911 = vpack.c.b16 %v4874, %v4873
        %v4912 = vpack.c.b16 %v4876, %v4875
        %v4913 = vpack.c.b16 %v4878, %v4877
        %v4914 = vpack.c.b16 %v4880, %v4879
        %v4915 = vpack.c.b16 %v4882, %v4881
        %v4916 = vpack.c.b16 %v4884, %v4883
        %4949 = vmatprep.subr.bf16.mxu0 0
        %4950 = vmatpush1.bf16.msra.mxu0 %v4885
        %4951 = vmatprep.subr.bf16.mxu0 0
        %4952 = vmatpush1.bf16.msra.mxu0 %v4886
        %4953 = vmatprep.subr.bf16.mxu0 0
        %4954 = vmatpush1.bf16.msra.mxu0 %v4887
        %4955 = vmatprep.subr.bf16.mxu0 0
        %4956 = vmatpush1.bf16.msra.mxu0 %v4888
        %4957 = vmatprep.subr.bf16.mxu0 0
        %4958 = vmatpush1.bf16.msra.mxu0 %v4889
        %4959 = vmatprep.subr.bf16.mxu0 0
        %4960 = vmatpush1.bf16.msra.mxu0 %v4890
        %4961 = vmatprep.subr.bf16.mxu0 0
        %4962 = vmatpush1.bf16.msra.mxu0 %v4891
        %4963 = vmatprep.subr.bf16.mxu0 0
        %4964 = vmatpush1.bf16.msra.mxu0 %v4892
        %4965 = vmatprep.subr.bf16.mxu0 0
        %4966 = vmatpush1.bf16.msra.mxu0 %v4893
        %4967 = vmatprep.subr.bf16.mxu0 0
        %4968 = vmatpush1.bf16.msra.mxu0 %v4894
        %4969 = vmatprep.subr.bf16.mxu0 0
        %4970 = vmatpush1.bf16.msra.mxu0 %v4895
        %4971 = vmatprep.subr.bf16.mxu0 0
        %4972 = vmatpush1.bf16.msra.mxu0 %v4896
        %4973 = vmatprep.subr.bf16.mxu0 0
        %4974 = vmatpush1.bf16.msra.mxu0 %v4897
        %4975 = vmatprep.subr.bf16.mxu0 0
        %4976 = vmatpush1.bf16.msra.mxu0 %v4898
        %4977 = vmatprep.subr.bf16.mxu0 0
        %4978 = vmatpush1.bf16.msra.mxu0 %v4899
        %4979 = vmatprep.subr.bf16.mxu0 0
        %4980 = vmatpush1.bf16.msra.mxu0 %v4900
        %4981 = vmatprep.mubr.bf16.mxu0 %v4658
        %4982 = vmatmul.mubr.bf16.gmra.mrb[0].mxu0 %v4657
        %v4983 = vpop.f32.mrb[0].mxu0
        %v4984 = vadd.f32 %v4756, %v4983
        %v4985 = vpop.f32.mrb[0].mxu0
        %v4986 = vpop.f32.mrb[0].mxu0
        %v4987 = vadd.f32 %v4756, %v4986
        %v4988 = vpop.f32.mrb[0].mxu0
        %4989 = vmatprep.mubr.bf16.mxu0 %v4662
        %4990 = vmatmul.mubr.bf16.gmra.mrb[0].mxu0 %v4661
        %v4991 = vpop.f32.mrb[0].mxu0
        %v4992 = vadd.f32 %v4756, %v4991
        %v4993 = vpop.f32.mrb[0].mxu0
        %v4994 = vpop.f32.mrb[0].mxu0
        %v4995 = vadd.f32 %v4756, %v4994
        %v4996 = vpop.f32.mrb[0].mxu0
        %4997 = vmatprep.mubr.bf16.mxu0 %v4666
        %4998 = vmatmul.mubr.bf16.gmra.mrb[0].mxu0 %v4665
        %v4999 = vpop.f32.mrb[0].mxu0
        %v5000 = vadd.f32 %v4756, %v4999
        %v5001 = vpop.f32.mrb[0].mxu0
        %v5002 = vpop.f32.mrb[0].mxu0
        %v5003 = vadd.f32 %v4756, %v5002
        %v5004 = vpop.f32.mrb[0].mxu0
        %5005 = vmatprep.mubr.bf16.mxu0 %v4670
        %5006 = vmatmul.mubr.bf16.gmra.mrb[0].mxu0 %v4669
        %v5007 = vpop.f32.mrb[0].mxu0
        %v5008 = vadd.f32 %v4756, %v5007
        %v5009 = vpop.f32.mrb[0].mxu0
        %v5010 = vpop.f32.mrb[0].mxu0
        %v5011 = vadd.f32 %v4756, %v5010
        %v5012 = vpop.f32.mrb[0].mxu0
        %5013 = vmatprep.mubr.bf16.mxu0 %v4674
        %5014 = vmatmul.mubr.bf16.gmra.mrb[0].mxu0 %v4673
        %v5015 = vpop.f32.mrb[0].mxu0
        %v5016 = vadd.f32 %v4756, %v5015
        %v5017 = vpop.f32.mrb[0].mxu0
        %v5018 = vpop.f32.mrb[0].mxu0
        %v5019 = vadd.f32 %v4756, %v5018
        %v5020 = vpop.f32.mrb[0].mxu0
        %5021 = vmatprep.mubr.bf16.mxu0 %v4678
        %5022 = vmatmul.mubr.bf16.gmra.mrb[0].mxu0 %v4677
        %v5023 = vpop.f32.mrb[0].mxu0
        %v5024 = vadd.f32 %v4756, %v5023
        %v5025 = vpop.f32.mrb[0].mxu0
        %v5026 = vpop.f32.mrb[0].mxu0
        %v5027 = vadd.f32 %v4756, %v5026
        %v5028 = vpop.f32.mrb[0].mxu0
        %5029 = vmatprep.mubr.bf16.mxu0 %v4682
        %5030 = vmatmul.mubr.bf16.gmra.mrb[0].mxu0 %v4681
        %v5031 = vpop.f32.mrb[0].mxu0
        %v5032 = vadd.f32 %v4756, %v5031
        %v5033 = vpop.f32.mrb[0].mxu0
        %v5034 = vpop.f32.mrb[0].mxu0
        %v5035 = vadd.f32 %v4756, %v5034
        %v5036 = vpop.f32.mrb[0].mxu0
        %5037 = vmatprep.mubr.bf16.mxu0 %v4686
        %5038 = vmatmul.mubr.bf16.gmra.mrb[0].mxu0 %v4685
        %v5039 = vpop.f32.mrb[0].mxu0
        %v5040 = vadd.f32 %v4756, %v5039
        %v5041 = vpop.f32.mrb[0].mxu0
        %v5042 = vpop.f32.mrb[0].mxu0
        %v5043 = vadd.f32 %v4756, %v5042
        %v5044 = vpop.f32.mrb[0].mxu0
        %5045 = vdwg.mxu0
        %5046 = vmatprep.subr.bf16.mxu0 0
        %5047 = vmatpush1.bf16.msra.mxu0 %v4901
        %5048 = vmatprep.subr.bf16.mxu0 0
        %5049 = vmatpush1.bf16.msra.mxu0 %v4902
        %5050 = vmatprep.subr.bf16.mxu0 0
        %5051 = vmatpush1.bf16.msra.mxu0 %v4903
        %5052 = vmatprep.subr.bf16.mxu0 0
        %5053 = vmatpush1.bf16.msra.mxu0 %v4904
        %5054 = vmatprep.subr.bf16.mxu0 0
        %5055 = vmatpush1.bf16.msra.mxu0 %v4905
        %5056 = vmatprep.subr.bf16.mxu0 0
        %5057 = vmatpush1.bf16.msra.mxu0 %v4906
        %5058 = vmatprep.subr.bf16.mxu0 0
        %5059 = vmatpush1.bf16.msra.mxu0 %v4907
        %5060 = vmatprep.subr.bf16.mxu0 0
        %5061 = vmatpush1.bf16.msra.mxu0 %v4908
        %5062 = vmatprep.subr.bf16.mxu0 0
        %5063 = vmatpush1.bf16.msra.mxu0 %v4909
        %5064 = vmatprep.subr.bf16.mxu0 0
        %5065 = vmatpush1.bf16.msra.mxu0 %v4910
        %5066 = vmatprep.subr.bf16.mxu0 0
        %5067 = vmatpush1.bf16.msra.mxu0 %v4911
        %5068 = vmatprep.subr.bf16.mxu0 0
        %5069 = vmatpush1.bf16.msra.mxu0 %v4912
        %5070 = vmatprep.subr.bf16.mxu0 0
        %5071 = vmatpush1.bf16.msra.mxu0 %v4913
        %5072 = vmatprep.subr.bf16.mxu0 0
        %5073 = vmatpush1.bf16.msra.mxu0 %v4914
        %5074 = vmatprep.subr.bf16.mxu0 0
        %5075 = vmatpush1.bf16.msra.mxu0 %v4915
        %5076 = vmatprep.subr.bf16.mxu0 0
        %5077 = vmatpush1.bf16.msra.mxu0 %v4916
        %5078 = vmatprep.mubr.bf16.mxu0 %v4660
        %5079 = vmatmul.mubr.bf16.gmra.mrb[0].mxu0 %v4659
        %v5080 = vpop.f32.mrb[0].mxu0
        %v5081 = vadd.f32 %v4984, %v5080
        %v5082 = vpop.f32.mrb[0].mxu0
        %v5083 = vpop.f32.mrb[0].mxu0
        %v5084 = vadd.f32 %v4987, %v5083
        %v5085 = vpop.f32.mrb[0].mxu0
        %5086 = vmatprep.mubr.bf16.mxu0 %v4664
        %5087 = vmatmul.mubr.bf16.gmra.mrb[0].mxu0 %v4663
        %v5088 = vpop.f32.mrb[0].mxu0
        %v5089 = vadd.f32 %v4992, %v5088
        %v5090 = vpop.f32.mrb[0].mxu0
        %v5091 = vpop.f32.mrb[0].mxu0
        %v5092 = vadd.f32 %v4995, %v5091
        %v5093 = vpop.f32.mrb[0].mxu0
        %5094 = vmatprep.mubr.bf16.mxu0 %v4668
        %5095 = vmatmul.mubr.bf16.gmra.mrb[0].mxu0 %v4667
        %v5096 = vpop.f32.mrb[0].mxu0
        %v5097 = vadd.f32 %v5000, %v5096
        %v5098 = vpop.f32.mrb[0].mxu0
        %v5099 = vpop.f32.mrb[0].mxu0
        %v5100 = vadd.f32 %v5003, %v5099
        %v5101 = vpop.f32.mrb[0].mxu0
        %5102 = vmatprep.mubr.bf16.mxu0 %v4672
        %5103 = vmatmul.mubr.bf16.gmra.mrb[0].mxu0 %v4671
        %v5104 = vpop.f32.mrb[0].mxu0
        %v5105 = vadd.f32 %v5008, %v5104
        %v5106 = vpop.f32.mrb[0].mxu0
        %v5107 = vpop.f32.mrb[0].mxu0
        %v5108 = vadd.f32 %v5011, %v5107
        %v5109 = vpop.f32.mrb[0].mxu0
        %5110 = vmatprep.mubr.bf16.mxu0 %v4676
        %5111 = vmatmul.mubr.bf16.gmra.mrb[0].mxu0 %v4675
        %v5112 = vpop.f32.mrb[0].mxu0
        %v5113 = vadd.f32 %v5016, %v5112
        %v5114 = vpop.f32.mrb[0].mxu0
        %v5115 = vpop.f32.mrb[0].mxu0
        %v5116 = vadd.f32 %v5019, %v5115
        %v5117 = vpop.f32.mrb[0].mxu0
        %5118 = vmatprep.mubr.bf16.mxu0 %v4680
        %5119 = vmatmul.mubr.bf16.gmra.mrb[0].mxu0 %v4679
        %v5120 = vpop.f32.mrb[0].mxu0
        %v5121 = vadd.f32 %v5024, %v5120
        %v5122 = vpop.f32.mrb[0].mxu0
        %v5123 = vpop.f32.mrb[0].mxu0
        %v5124 = vadd.f32 %v5027, %v5123
        %v5125 = vpop.f32.mrb[0].mxu0
        %5126 = vmatprep.mubr.bf16.mxu0 %v4684
        %5127 = vmatmul.mubr.bf16.gmra.mrb[0].mxu0 %v4683
        %v5128 = vpop.f32.mrb[0].mxu0
        %v5129 = vadd.f32 %v5032, %v5128
        %v5130 = vpop.f32.mrb[0].mxu0
        %v5131 = vpop.f32.mrb[0].mxu0
        %v5132 = vadd.f32 %v5035, %v5131
        %v5133 = vpop.f32.mrb[0].mxu0
        %5134 = vmatprep.mubr.bf16.mxu0 %v4688
        %5135 = vmatmul.mubr.bf16.gmra.mrb[0].mxu0 %v4687
        %v5136 = vpop.f32.mrb[0].mxu0
        %v5137 = vadd.f32 %v5040, %v5136
        %v5138 = vpop.f32.mrb[0].mxu0
        %v5139 = vpop.f32.mrb[0].mxu0
        %v5140 = vadd.f32 %v5043, %v5139
        %v5141 = vpop.f32.mrb[0].mxu0
        %5142 = vdwg.mxu0
        %v5143 = vadd.f32 %v3617, %v5081
        %v5144 = vadd.f32 %v3618, %v5084
        %v5145 = vadd.f32 %v3619, %v5089
        %v5146 = vadd.f32 %v3620, %v5092
        %v5147 = vadd.f32 %v3621, %v5097
        %v5148 = vadd.f32 %v3622, %v5100
        %v5149 = vadd.f32 %v3623, %v5105
        %v5150 = vadd.f32 %v3624, %v5108
        %v5151 = vadd.f32 %v3625, %v5113
        %v5152 = vadd.f32 %v3626, %v5116
        %v5153 = vadd.f32 %v3627, %v5121
        %v5154 = vadd.f32 %v3628, %v5124
        %v5155 = vadd.f32 %v3629, %v5129
        %v5156 = vadd.f32 %v3630, %v5132
        %v5157 = vadd.f32 %v3631, %v5137
        %v5158 = vadd.f32 %v3632, %v5140
        %5159 = vst [vmem:[%s379] sm:$0xff] %v5143
        %5160 = vst [vmem:[%s379 + $0x8] sm:$0xff] %v5144
        %5161 = vst [vmem:[%s379 + $0x10] sm:$0xff] %v5145
        %5162 = vst [vmem:[%s379 + $0x18] sm:$0xff] %v5146
        %5163 = vst [vmem:[%s379 + $0x20] sm:$0xff] %v5147
        %5164 = vst [vmem:[%s379 + $0x28] sm:$0xff] %v5148
        %5165 = vst [vmem:[%s379 + $0x30] sm:$0xff] %v5149
        %5166 = vst [vmem:[%s379 + $0x38] sm:$0xff] %v5150
        %5167 = vst [vmem:[%s379 + $0x40] sm:$0xff] %v5151
        %5168 = vst [vmem:[%s379 + $0x48] sm:$0xff] %v5152
        %5169 = vst [vmem:[%s379 + $0x50] sm:$0xff] %v5153
        %5170 = vst [vmem:[%s379 + $0x58] sm:$0xff] %v5154
        %5171 = vst [vmem:[%s379 + $0x60] sm:$0xff] %v5155
        %5172 = vst [vmem:[%s379 + $0x68] sm:$0xff] %v5156
        %5173 = vst [vmem:[%s379 + $0x70] sm:$0xff] %v5157
        %5174 = vst [vmem:[%s379 + $0x78] sm:$0xff] %v5158
        %s5175 = sand.u32 %s187, 1
        %s5176 = scalar_lea.sflag [#allocation4], %s5175
        %s5177 = sand.u32 %s187, 1
        %s5178 = smul.addr %s5177, 128
        %s5179 = scalar_lea.vmem [#allocation14], %s5178
        // Predicated region
        $region77: #{tpu_custom_call.1} parent=47 // pred_check
          %p5180 = pneg %p197
        $region78: #{tpu_custom_call.1} parent=47 // pred_check_branch
          %5182 = sbr.rel (%p5180) target = $region80
        $region79: #{tpu_custom_call.1} parent=47 // pred_region
          %s5184 = ssub.s32 2048, 2048
          %5185 = vsyncadd %s5176, %s5184
          %s5186 = smul.addr %s27, 16
          %s5187 = smul.addr %s5186, 128
          %s5188 = scalar_lea.hbm %s7, %s5187
          %s5189 = sshll.u32 %s5179, 4
          %s5190 = int_to_ptr.vmem [resolvable:$true] %s5189
          %5195 = dma.vmem_to_hbm [thread:$0]  %s5190, 2048, %s5188, %s5176, 128, 128, 8
        $region80: #{tpu_custom_call.1} parent=47 // pred_fallthru
          _
      $region48: #{tpu_custom_call.1} parent=5 // pred_fallthru
        _
      %p5196 = scmp.le.s32.totalorder 2, %s22
      // Predicated region
      $region81: #{tpu_custom_call.1} parent=5 // pred_check
        %p5197 = pneg %p5196
      $region82: #{tpu_custom_call.1} parent=5 // pred_check_branch
        %5199 = sbr.rel (%p5197) target = $region84
      $region83: #{tpu_custom_call.1} parent=5 // pred_region
        %s5200 = ssub.s32 %s22, 2
        // Predicated region
        $region85: #{tpu_custom_call.1} parent=83 // pred_check
          %p5201 = pneg %p203
        $region86: #{tpu_custom_call.1} parent=83 // pred_check_branch
          %5203 = sbr.rel (%p5201) target = $region88
        $region87: #{tpu_custom_call.1} parent=83 // pred_region
          %s5204 = sand.u32 %s188, 1
          %s5205 = scalar_lea.sflag [#allocation4], %s5204
          %s5206 = sand.u32 %s188, 1
          %s5207 = smul.addr %s5206, 128
          %s5208 = scalar_lea.vmem [#allocation14], %s5207
          %5209 = dma.done %s5205, 2048
        $region88: #{tpu_custom_call.1} parent=83 // pred_fallthru
          _
      $region84: #{tpu_custom_call.1} parent=5 // pred_fallthru
        _
    $region6: #{tpu_custom_call.1} parent=1 // loop_footer
      %s26 = sadd.s32 1, %s22
    $region7: #{tpu_custom_call.1} parent=1 // loop_footer_branch
      %21 = sbr.rel target = $region3
    $region8: #{tpu_custom_call.1} parent=1 // loop_exit
      _
    %5210 = vsyncpa [#allocation3], 1
    %s5211 = scalar_lea.sflag [#allocation3], 1
    %5212 = vsyncpa %s5211, 1
    %5213 = vsyncpa [#allocation6], 1
    %5214 = vsyncpa [#allocation9], 1
    %5215 = vsyncpa [#allocation12], 1
    %5216 = vsyncpa [#allocation4], 1
    %s5217 = scalar_lea.sflag [#allocation4], 1
    %5218 = vsyncpa %s5217, 1

</llo_original>
